<compile_context>
chip_gen: v7x
topology: tpu7x:2x2x1
jax: 0.10.0
libtpu: 0.0.40
codegen_flags: <defaults>
</compile_context>

<pallas_src>
import jax
import jax.numpy as jnp
from jax.experimental import pallas as pl
from jax.experimental.pallas import tpu as pltpu

C, H, W = 3, 32, 32
LATENT = 100
LATENT_PAD = 128                       # zero-padded latent width (lane aligned)
DIMS = [LATENT, 128, 128, 256, 256, 512, 1024, C * H * W]
N_OUT = C * H * W                      # 3072
TN = 768                               # final-layer output-column tile (4 steps)


def decoder_kernel(x_ref,
                   w1, b1, w2, b2, w3, b3, w4, b4, w5, b5, w6, b6,
                   w7_ref, b7_ref,
                   out_ref):
    """One grid step: hidden MLP (cheap, VMEM-resident weights) + one column
    tile of the final Linear(1024, 3072) + Tanh."""

    def lin_relu(h, w_ref, b_ref):
        y = jnp.dot(h.astype(jnp.bfloat16), w_ref[...],
                    preferred_element_type=jnp.float32) + b_ref[...]
        return jnp.maximum(y, 0.0)

    h = x_ref[...]                     # (B_pad, 128) f32, zero-padded latent
    h = lin_relu(h, w1, b1)            # Linear(100->128) + ReLU (padded K)
    h = lin_relu(h, w2, b2)            # Linear(128,128)  + ReLU (Dropout = id)
    h = lin_relu(h, w3, b3)            # Linear(128,256)  + ReLU
    h = lin_relu(h, w4, b4)            # Linear(256,256)  + ReLU (Dropout = id)
    h = lin_relu(h, w5, b5)            # Linear(256,512)  + ReLU
    h = lin_relu(h, w6, b6)            # Linear(512,1024) + ReLU (Dropout = id)

    y = jnp.dot(h.astype(jnp.bfloat16), w7_ref[...],       # (B_pad, TN)
                preferred_element_type=jnp.float32) + b7_ref[...]
    out_ref[...] = jnp.tanh(y)         # Linear(1024,3072) tile + Tanh


def init_params(key):
    """f32 params mimicking PyTorch nn.Linear default init; W is (in, out)."""
    params = []
    for i in range(len(DIMS) - 1):
        fan_in, fan_out = DIMS[i], DIMS[i + 1]
        key, kw, kb = jax.random.split(key, 3)
        bound = 1.0 / jnp.sqrt(jnp.float32(fan_in))
        w = jax.random.uniform(kw, (fan_in, fan_out), jnp.float32, -bound, bound)
        b = jax.random.uniform(kb, (1, fan_out), jnp.float32, -bound, bound)
        params.append((w, b))
    return params


def prepare_params(params):
    """Zero-pad layer-1 fan_in 100->128 and cast weights to bf16 (biases f32)."""
    prepared = []
    for i, (w, b) in enumerate(params):
        if i == 0:
            w = jnp.zeros((LATENT_PAD, w.shape[1]), w.dtype).at[:w.shape[0]].set(w)
        prepared.append((w.astype(jnp.bfloat16), b.astype(jnp.float32)))
    return prepared


def decoder_forward(x, prepared_params):
    """x: (B, 100) f32 -> (B, 3, 32, 32) f32."""
    B = x.shape[0]
    B_pad = -(-B // 8) * 8                                 # sublane-align rows
    x_p = jnp.zeros((B_pad, LATENT_PAD), jnp.float32).at[:B, :LATENT].set(x)

    flat_args = [x_p]
    for w, b in prepared_params:
        flat_args.extend([w, b])

    const = lambda j: (0, 0)
    in_specs = [pl.BlockSpec((B_pad, LATENT_PAD), const)]  # x (resident)
    for w, b in prepared_params[:-1]:                      # layers 1-6: resident
        in_specs.append(pl.BlockSpec(w.shape, const))
        in_specs.append(pl.BlockSpec(b.shape, const))
    # Final layer: stream column tiles so w7 DMA overlaps compute.
    in_specs.append(pl.BlockSpec((DIMS[-2], TN), lambda j: (0, j)))
    in_specs.append(pl.BlockSpec((1, TN), lambda j: (0, j)))

    out_flat = pl.pallas_call(
        decoder_kernel,
        out_shape=jax.ShapeDtypeStruct((B_pad, N_OUT), jnp.float32),
        grid=(N_OUT // TN,),
        in_specs=in_specs,
        out_specs=pl.BlockSpec((B_pad, TN), lambda j: (0, j)),
        compiler_params=pltpu.CompilerParams(
            dimension_semantics=("parallel",),             # 2-TC split on v7x
            vmem_limit_bytes=32 << 20),                    # fits v7x 64 MiB VMEM
    )(*flat_args)

    # nn.Unflatten(-1, (c, h, w)) == row-major reshape of the last dim.
    return out_flat[:B].reshape(B, C, H, W)


def decoder_reference(x, prepared_params):
    """Plain-JAX reference using the same bf16 weights / f32 accumulation."""
    B = x.shape[0]
    h = jnp.zeros((B, LATENT_PAD), jnp.float32).at[:, :LATENT].set(x)
    n = len(prepared_params)
    for i, (w, b) in enumerate(prepared_params):
        y = jnp.dot(h.astype(jnp.bfloat16), w,
                    preferred_element_type=jnp.float32) + b
        h = jnp.tanh(y) if i == n - 1 else jnp.maximum(y, 0.0)
    return h.reshape(B, C, H, W)


if __name__ == "__main__":
    key = jax.random.PRNGKey(0)
    kp, kx = jax.random.split(key)
    params = prepare_params(init_params(kp))

    B = 8
    x = jax.random.normal(kx, (B, LATENT), jnp.float32)

    out = decoder_forward(x, params)
    out = jax.block_until_ready(out)

    ref = decoder_reference(x, params)
    assert out.shape == (B, C, H, W)
    assert jnp.allclose(out, ref, atol=1e-2, rtol=1e-2), float(
        jnp.max(jnp.abs(out - ref)))
    print("KERNEL_OK")
</pallas_src>

<mosaic_0001>
module attributes {stable_mosaic.version = 11 : i64} {
  func.func @decoder_kernel(%arg0: i32, %arg1: memref<8x128xf32, #tpu.memory_space<vmem>>, %arg2: memref<128x128xbf16, #tpu.memory_space<vmem>>, %arg3: memref<1x128xf32, #tpu.memory_space<vmem>>, %arg4: memref<128x128xbf16, #tpu.memory_space<vmem>>, %arg5: memref<1x128xf32, #tpu.memory_space<vmem>>, %arg6: memref<128x256xbf16, #tpu.memory_space<vmem>>, %arg7: memref<1x256xf32, #tpu.memory_space<vmem>>, %arg8: memref<256x256xbf16, #tpu.memory_space<vmem>>, %arg9: memref<1x256xf32, #tpu.memory_space<vmem>>, %arg10: memref<256x512xbf16, #tpu.memory_space<vmem>>, %arg11: memref<1x512xf32, #tpu.memory_space<vmem>>, %arg12: memref<512x1024xbf16, #tpu.memory_space<vmem>>, %arg13: memref<1x1024xf32, #tpu.memory_space<vmem>>, %arg14: memref<1024x768xbf16, #tpu.memory_space<vmem>>, %arg15: memref<1x768xf32, #tpu.memory_space<vmem>>, %arg16: memref<8x768xf32, #tpu.memory_space<vmem>>) attributes {dimension_semantics = [#tpu.dimension_semantics<parallel>], iteration_bounds = array<i64: 4>, scalar_prefetch = 0 : i64, scratch_operands = 0 : i64, tpu.core_type = #tpu.core_type<tc>, window_params = [{pipeline_mode = #tpu.pipeline_mode<synchronous>, transform_indices = @transform_0, window_bounds = array<i64: 8, 128>}, {pipeline_mode = #tpu.pipeline_mode<synchronous>, transform_indices = @transform_1, window_bounds = array<i64: 128, 128>}, {pipeline_mode = #tpu.pipeline_mode<synchronous>, transform_indices = @transform_2, window_bounds = array<i64: 1, 128>}, {pipeline_mode = #tpu.pipeline_mode<synchronous>, transform_indices = @transform_3, window_bounds = array<i64: 128, 128>}, {pipeline_mode = #tpu.pipeline_mode<synchronous>, transform_indices = @transform_4, window_bounds = array<i64: 1, 128>}, {pipeline_mode = #tpu.pipeline_mode<synchronous>, transform_indices = @transform_5, window_bounds = array<i64: 128, 256>}, {pipeline_mode = #tpu.pipeline_mode<synchronous>, transform_indices = @transform_6, window_bounds = array<i64: 1, 256>}, {pipeline_mode = #tpu.pipeline_mode<synchronous>, transform_indices = @transform_7, window_bounds = array<i64: 256, 256>}, {pipeline_mode = #tpu.pipeline_mode<synchronous>, transform_indices = @transform_8, window_bounds = array<i64: 1, 256>}, {pipeline_mode = #tpu.pipeline_mode<synchronous>, transform_indices = @transform_9, window_bounds = array<i64: 256, 512>}, {pipeline_mode = #tpu.pipeline_mode<synchronous>, transform_indices = @transform_10, window_bounds = array<i64: 1, 512>}, {pipeline_mode = #tpu.pipeline_mode<synchronous>, transform_indices = @transform_11, window_bounds = array<i64: 512, 1024>}, {pipeline_mode = #tpu.pipeline_mode<synchronous>, transform_indices = @transform_12, window_bounds = array<i64: 1, 1024>}, {transform_indices = @transform_13, window_bounds = array<i64: 1024, 768>}, {transform_indices = @transform_14, window_bounds = array<i64: 1, 768>}, {transform_indices = @transform_15, window_bounds = array<i64: 8, 768>}]} {
    %c0 = arith.constant 0 : index
    %c0_0 = arith.constant 0 : index
    %0 = vector.load %arg1[%c0, %c0_0] : memref<8x128xf32, #tpu.memory_space<vmem>>, vector<8x128xf32>
    %1 = arith.truncf %0 : vector<8x128xf32> to vector<8x128xbf16>
    %c0_1 = arith.constant 0 : index
    %c0_2 = arith.constant 0 : index
    %2 = vector.load %arg2[%c0_1, %c0_2] : memref<128x128xbf16, #tpu.memory_space<vmem>>, vector<128x128xbf16>
    %cst = arith.constant dense<0.000000e+00> : vector<8x128xf32>
    %3 = tpu.matmul %1, %2, %cst {dimension_numbers = #tpu.dot_dimension_numbers<[1], [0], [0], [1], [0, 0, 1, 1], [], []>} : vector<8x128xbf16>, vector<128x128xbf16>, vector<8x128xf32> -> vector<8x128xf32>
    %c0_3 = arith.constant 0 : index
    %c0_4 = arith.constant 0 : index
    %4 = vector.load %arg3[%c0_3, %c0_4] : memref<1x128xf32, #tpu.memory_space<vmem>>, vector<1x128xf32>
    %5 = vector.broadcast %4 : vector<1x128xf32> to vector<8x128xf32>
    %6 = arith.addf %3, %5 : vector<8x128xf32>
    %cst_5 = arith.constant 0.000000e+00 : f32
    %7 = vector.broadcast %cst_5 : f32 to vector<8x128xf32>
    %8 = arith.maximumf %6, %7 : vector<8x128xf32>
    %9 = arith.truncf %8 : vector<8x128xf32> to vector<8x128xbf16>
    %c0_6 = arith.constant 0 : index
    %c0_7 = arith.constant 0 : index
    %10 = vector.load %arg4[%c0_6, %c0_7] : memref<128x128xbf16, #tpu.memory_space<vmem>>, vector<128x128xbf16>
    %cst_8 = arith.constant dense<0.000000e+00> : vector<8x128xf32>
    %11 = tpu.matmul %9, %10, %cst_8 {dimension_numbers = #tpu.dot_dimension_numbers<[1], [0], [0], [1], [0, 0, 1, 1], [], []>} : vector<8x128xbf16>, vector<128x128xbf16>, vector<8x128xf32> -> vector<8x128xf32>
    %c0_9 = arith.constant 0 : index
    %c0_10 = arith.constant 0 : index
    %12 = vector.load %arg5[%c0_9, %c0_10] : memref<1x128xf32, #tpu.memory_space<vmem>>, vector<1x128xf32>
    %13 = vector.broadcast %12 : vector<1x128xf32> to vector<8x128xf32>
    %14 = arith.addf %11, %13 : vector<8x128xf32>
    %cst_11 = arith.constant 0.000000e+00 : f32
    %15 = vector.broadcast %cst_11 : f32 to vector<8x128xf32>
    %16 = arith.maximumf %14, %15 : vector<8x128xf32>
    %17 = arith.truncf %16 : vector<8x128xf32> to vector<8x128xbf16>
    %c0_12 = arith.constant 0 : index
    %c0_13 = arith.constant 0 : index
    %18 = vector.load %arg6[%c0_12, %c0_13] : memref<128x256xbf16, #tpu.memory_space<vmem>>, vector<128x256xbf16>
    %cst_14 = arith.constant dense<0.000000e+00> : vector<8x256xf32>
    %19 = tpu.matmul %17, %18, %cst_14 {dimension_numbers = #tpu.dot_dimension_numbers<[1], [0], [0], [1], [0, 0, 1, 1], [], []>} : vector<8x128xbf16>, vector<128x256xbf16>, vector<8x256xf32> -> vector<8x256xf32>
    %c0_15 = arith.constant 0 : index
    %c0_16 = arith.constant 0 : index
    %20 = vector.load %arg7[%c0_15, %c0_16] : memref<1x256xf32, #tpu.memory_space<vmem>>, vector<1x256xf32>
    %21 = vector.broadcast %20 : vector<1x256xf32> to vector<8x256xf32>
    %22 = arith.addf %19, %21 : vector<8x256xf32>
    %cst_17 = arith.constant 0.000000e+00 : f32
    %23 = vector.broadcast %cst_17 : f32 to vector<8x256xf32>
    %24 = arith.maximumf %22, %23 : vector<8x256xf32>
    %25 = arith.truncf %24 : vector<8x256xf32> to vector<8x256xbf16>
    %c0_18 = arith.constant 0 : index
    %c0_19 = arith.constant 0 : index
    %26 = vector.load %arg8[%c0_18, %c0_19] : memref<256x256xbf16, #tpu.memory_space<vmem>>, vector<256x256xbf16>
    %cst_20 = arith.constant dense<0.000000e+00> : vector<8x256xf32>
    %27 = tpu.matmul %25, %26, %cst_20 {dimension_numbers = #tpu.dot_dimension_numbers<[1], [0], [0], [1], [0, 0, 1, 1], [], []>} : vector<8x256xbf16>, vector<256x256xbf16>, vector<8x256xf32> -> vector<8x256xf32>
    %c0_21 = arith.constant 0 : index
    %c0_22 = arith.constant 0 : index
    %28 = vector.load %arg9[%c0_21, %c0_22] : memref<1x256xf32, #tpu.memory_space<vmem>>, vector<1x256xf32>
    %29 = vector.broadcast %28 : vector<1x256xf32> to vector<8x256xf32>
    %30 = arith.addf %27, %29 : vector<8x256xf32>
    %cst_23 = arith.constant 0.000000e+00 : f32
    %31 = vector.broadcast %cst_23 : f32 to vector<8x256xf32>
    %32 = arith.maximumf %30, %31 : vector<8x256xf32>
    %33 = arith.truncf %32 : vector<8x256xf32> to vector<8x256xbf16>
    %c0_24 = arith.constant 0 : index
    %c0_25 = arith.constant 0 : index
    %34 = vector.load %arg10[%c0_24, %c0_25] : memref<256x512xbf16, #tpu.memory_space<vmem>>, vector<256x512xbf16>
    %cst_26 = arith.constant dense<0.000000e+00> : vector<8x512xf32>
    %35 = tpu.matmul %33, %34, %cst_26 {dimension_numbers = #tpu.dot_dimension_numbers<[1], [0], [0], [1], [0, 0, 1, 1], [], []>} : vector<8x256xbf16>, vector<256x512xbf16>, vector<8x512xf32> -> vector<8x512xf32>
    %c0_27 = arith.constant 0 : index
    %c0_28 = arith.constant 0 : index
    %36 = vector.load %arg11[%c0_27, %c0_28] : memref<1x512xf32, #tpu.memory_space<vmem>>, vector<1x512xf32>
    %37 = vector.broadcast %36 : vector<1x512xf32> to vector<8x512xf32>
    %38 = arith.addf %35, %37 : vector<8x512xf32>
    %cst_29 = arith.constant 0.000000e+00 : f32
    %39 = vector.broadcast %cst_29 : f32 to vector<8x512xf32>
    %40 = arith.maximumf %38, %39 : vector<8x512xf32>
    %41 = arith.truncf %40 : vector<8x512xf32> to vector<8x512xbf16>
    %c0_30 = arith.constant 0 : index
    %c0_31 = arith.constant 0 : index
    %42 = vector.load %arg12[%c0_30, %c0_31] : memref<512x1024xbf16, #tpu.memory_space<vmem>>, vector<512x1024xbf16>
    %cst_32 = arith.constant dense<0.000000e+00> : vector<8x1024xf32>
    %43 = tpu.matmul %41, %42, %cst_32 {dimension_numbers = #tpu.dot_dimension_numbers<[1], [0], [0], [1], [0, 0, 1, 1], [], []>} : vector<8x512xbf16>, vector<512x1024xbf16>, vector<8x1024xf32> -> vector<8x1024xf32>
    %c0_33 = arith.constant 0 : index
    %c0_34 = arith.constant 0 : index
    %44 = vector.load %arg13[%c0_33, %c0_34] : memref<1x1024xf32, #tpu.memory_space<vmem>>, vector<1x1024xf32>
    %45 = vector.broadcast %44 : vector<1x1024xf32> to vector<8x1024xf32>
    %46 = arith.addf %43, %45 : vector<8x1024xf32>
    %cst_35 = arith.constant 0.000000e+00 : f32
    %47 = vector.broadcast %cst_35 : f32 to vector<8x1024xf32>
    %48 = arith.maximumf %46, %47 : vector<8x1024xf32>
    %49 = arith.truncf %48 : vector<8x1024xf32> to vector<8x1024xbf16>
    %c0_36 = arith.constant 0 : index
    %c0_37 = arith.constant 0 : index
    %50 = vector.load %arg14[%c0_36, %c0_37] : memref<1024x768xbf16, #tpu.memory_space<vmem>>, vector<1024x768xbf16>
    %cst_38 = arith.constant dense<0.000000e+00> : vector<8x768xf32>
    %51 = tpu.matmul %49, %50, %cst_38 {dimension_numbers = #tpu.dot_dimension_numbers<[1], [0], [0], [1], [0, 0, 1, 1], [], []>} : vector<8x1024xbf16>, vector<1024x768xbf16>, vector<8x768xf32> -> vector<8x768xf32>
    %c0_39 = arith.constant 0 : index
    %c0_40 = arith.constant 0 : index
    %52 = vector.load %arg15[%c0_39, %c0_40] : memref<1x768xf32, #tpu.memory_space<vmem>>, vector<1x768xf32>
    %53 = vector.broadcast %52 : vector<1x768xf32> to vector<8x768xf32>
    %54 = arith.addf %51, %53 : vector<8x768xf32>
    %55 = math.tanh %54 : vector<8x768xf32>
    %c0_41 = arith.constant 0 : index
    %c0_42 = arith.constant 0 : index
    %56 = vector.load %arg16[%c0_41, %c0_42] : memref<8x768xf32, #tpu.memory_space<vmem>>, vector<8x768xf32>
    tpu.vector_store %arg16[%c0_41, %c0_42], %55 {strides = array<i32>} : memref<8x768xf32, #tpu.memory_space<vmem>>, vector<8x768xf32>,
    return
  }
  func.func @transform_0(%arg0: i32) -> (i32, i32) {
    %c0_i32 = arith.constant 0 : i32
    %c0_i32_0 = arith.constant 0 : i32
    %c0_i32_1 = arith.constant 0 : i32
    return %c0_i32, %c0_i32_0 : i32, i32
  }
  func.func @transform_1(%arg0: i32) -> (i32, i32) {
    %c0_i32 = arith.constant 0 : i32
    %c0_i32_0 = arith.constant 0 : i32
    %c0_i32_1 = arith.constant 0 : i32
    return %c0_i32, %c0_i32_0 : i32, i32
  }
  func.func @transform_2(%arg0: i32) -> (i32, i32) {
    %c0_i32 = arith.constant 0 : i32
    %c0_i32_0 = arith.constant 0 : i32
    %c0_i32_1 = arith.constant 0 : i32
    return %c0_i32, %c0_i32_0 : i32, i32
  }
  func.func @transform_3(%arg0: i32) -> (i32, i32) {
    %c0_i32 = arith.constant 0 : i32
    %c0_i32_0 = arith.constant 0 : i32
    %c0_i32_1 = arith.constant 0 : i32
    return %c0_i32, %c0_i32_0 : i32, i32
  }
  func.func @transform_4(%arg0: i32) -> (i32, i32) {
    %c0_i32 = arith.constant 0 : i32
    %c0_i32_0 = arith.constant 0 : i32
    %c0_i32_1 = arith.constant 0 : i32
    return %c0_i32, %c0_i32_0 : i32, i32
  }
  func.func @transform_5(%arg0: i32) -> (i32, i32) {
    %c0_i32 = arith.constant 0 : i32
    %c0_i32_0 = arith.constant 0 : i32
    %c0_i32_1 = arith.constant 0 : i32
    return %c0_i32, %c0_i32_0 : i32, i32
  }
  func.func @transform_6(%arg0: i32) -> (i32, i32) {
    %c0_i32 = arith.constant 0 : i32
    %c0_i32_0 = arith.constant 0 : i32
    %c0_i32_1 = arith.constant 0 : i32
    return %c0_i32, %c0_i32_0 : i32, i32
  }
  func.func @transform_7(%arg0: i32) -> (i32, i32) {
    %c0_i32 = arith.constant 0 : i32
    %c0_i32_0 = arith.constant 0 : i32
    %c0_i32_1 = arith.constant 0 : i32
    return %c0_i32, %c0_i32_0 : i32, i32
  }
  func.func @transform_8(%arg0: i32) -> (i32, i32) {
    %c0_i32 = arith.constant 0 : i32
    %c0_i32_0 = arith.constant 0 : i32
    %c0_i32_1 = arith.constant 0 : i32
    return %c0_i32, %c0_i32_0 : i32, i32
  }
  func.func @transform_9(%arg0: i32) -> (i32, i32) {
    %c0_i32 = arith.constant 0 : i32
    %c0_i32_0 = arith.constant 0 : i32
    %c0_i32_1 = arith.constant 0 : i32
    return %c0_i32, %c0_i32_0 : i32, i32
  }
  func.func @transform_10(%arg0: i32) -> (i32, i32) {
    %c0_i32 = arith.constant 0 : i32
    %c0_i32_0 = arith.constant 0 : i32
    %c0_i32_1 = arith.constant 0 : i32
    return %c0_i32, %c0_i32_0 : i32, i32
  }
  func.func @transform_11(%arg0: i32) -> (i32, i32) {
    %c0_i32 = arith.constant 0 : i32
    %c0_i32_0 = arith.constant 0 : i32
    %c0_i32_1 = arith.constant 0 : i32
    return %c0_i32, %c0_i32_0 : i32, i32
  }
  func.func @transform_12(%arg0: i32) -> (i32, i32) {
    %c0_i32 = arith.constant 0 : i32
    %c0_i32_0 = arith.constant 0 : i32
    %c0_i32_1 = arith.constant 0 : i32
    return %c0_i32, %c0_i32_0 : i32, i32
  }
  func.func @transform_13(%arg0: i32) -> (i32, i32) {
    %c0_i32 = arith.constant 0 : i32
    %c0_i32_0 = arith.constant 0 : i32
    return %c0_i32, %arg0 : i32, i32
  }
  func.func @transform_14(%arg0: i32) -> (i32, i32) {
    %c0_i32 = arith.constant 0 : i32
    %c0_i32_0 = arith.constant 0 : i32
    return %c0_i32, %arg0 : i32, i32
  }
  func.func @transform_15(%arg0: i32) -> (i32, i32) {
    %c0_i32 = arith.constant 0 : i32
    %c0_i32_0 = arith.constant 0 : i32
    return %c0_i32, %arg0 : i32, i32
  }
}

</mosaic_0001>

<llo_original>
// kernel: tpu_custom_call.1
$region0: #{tpu_custom_call.1}
  #allocation0 [shape = 'u32[]', space=smem, size = 0x4, offset = 0x4, fixed_abs, tag = 'smem constant byte address 0x4 - core index']
  #allocation1 [shape = 'u32[144,128]{1,0:T(1,128)}', space=vmem, size = 0x12000, scoped, tag = 'internal scratch']
  %s0 = inlined_call_operand.hbm [shape: f32[8,128], index: 0, kind: input, shape index: {}]
  %s1 = inlined_call_operand.hbm [shape: bf16[128,128], index: 1, kind: input, shape index: {}]
  %s2 = inlined_call_operand.hbm [shape: f32[1,128], index: 2, kind: input, shape index: {}]
  %s3 = inlined_call_operand.hbm [shape: bf16[128,128], index: 3, kind: input, shape index: {}]
  %s4 = inlined_call_operand.hbm [shape: f32[1,128], index: 4, kind: input, shape index: {}]
  %s5 = inlined_call_operand.hbm [shape: bf16[128,256], index: 5, kind: input, shape index: {}]
  %s6 = inlined_call_operand.hbm [shape: f32[1,256], index: 6, kind: input, shape index: {}]
  %s7 = inlined_call_operand.hbm [shape: bf16[256,256], index: 7, kind: input, shape index: {}]
  %s8 = inlined_call_operand.hbm [shape: f32[1,256], index: 8, kind: input, shape index: {}]
  %s9 = inlined_call_operand.hbm [shape: bf16[256,512], index: 9, kind: input, shape index: {}]
  %s10 = inlined_call_operand.hbm [shape: f32[1,512], index: 10, kind: input, shape index: {}]
  %s11 = inlined_call_operand.hbm [shape: bf16[512,1024], index: 11, kind: input, shape index: {}]
  %s12 = inlined_call_operand.hbm [shape: f32[1,1024], index: 12, kind: input, shape index: {}]
  %s13 = inlined_call_operand.hbm [shape: bf16[1024,3072], index: 13, kind: input, shape index: {}]
  %s14 = inlined_call_operand.hbm [shape: f32[1,3072], index: 14, kind: input, shape index: {}]
  %s15 = inlined_call_operand.hbm [shape: f32[8,3072], index: 15, kind: output, shape index: {}]
  %s16 = sld [smem:[#allocation0]]
  $region153: #{tpu_custom_call.1} parent=0
    _
  %s18 = ssub.s32 1, %s16
  %s19 = scalar_select 0, %s18, %s16
  $region1: #{tpu_custom_call.1} parent=0
    #allocation2 [shape = 'u8[4096]{0}', space=vmem, size = 0x1000, scoped, tag = 'input window, operand 0, single buffered']
    #allocation3 [shape = 's32[2]{0}', space=sflag, size = 0x8, scoped, tag = 'scoped memory for tpu_custom_call.1']
    #allocation4 [shape = 's32[2]{0}', space=sflag, size = 0x8, scoped, tag = 'scoped memory for tpu_custom_call.1']
    #allocation5 [shape = 'u8[32768]{0}', space=vmem, size = 0x8000, scoped, tag = 'input window, operand 1, single buffered']
    #allocation6 [shape = 's32[1]{0}', space=sflag, size = 0x4, scoped, tag = 'scoped memory for tpu_custom_call.1']
    #allocation7 [shape = 'u8[512]{0}', space=vmem, size = 0x400, scoped, tag = 'input window, operand 2, single buffered']
    #allocation8 [shape = 'u8[32768]{0}', space=vmem, size = 0x8000, scoped, tag = 'input window, operand 3, single buffered']
    #allocation9 [shape = 's32[1]{0}', space=sflag, size = 0x4, scoped, tag = 'scoped memory for tpu_custom_call.1']
    #allocation10 [shape = 'u8[512]{0}', space=vmem, size = 0x400, scoped, tag = 'input window, operand 4, single buffered']
    #allocation11 [shape = 'u8[65536]{0}', space=vmem, size = 0x10000, scoped, tag = 'input window, operand 5, single buffered']
    #allocation12 [shape = 's32[1]{0}', space=sflag, size = 0x4, scoped, tag = 'scoped memory for tpu_custom_call.1']
    #allocation13 [shape = 'u8[1024]{0}', space=vmem, size = 0x400, scoped, tag = 'input window, operand 6, single buffered']
    #allocation14 [shape = 'u8[131072]{0}', space=vmem, size = 0x20000, scoped, tag = 'input window, operand 7, single buffered']
    #allocation15 [shape = 's32[1]{0}', space=sflag, size = 0x4, scoped, tag = 'scoped memory for tpu_custom_call.1']
    #allocation16 [shape = 'u8[1024]{0}', space=vmem, size = 0x400, scoped, tag = 'input window, operand 8, single buffered']
    #allocation17 [shape = 'u8[262144]{0}', space=vmem, size = 0x40000, scoped, tag = 'input window, operand 9, single buffered']
    #allocation18 [shape = 's32[1]{0}', space=sflag, size = 0x4, scoped, tag = 'scoped memory for tpu_custom_call.1']
    #allocation19 [shape = 'u8[2048]{0}', space=vmem, size = 0x800, scoped, tag = 'input window, operand 10, single buffered']
    #allocation20 [shape = 'u8[1048576]{0}', space=vmem, size = 0x100000, scoped, tag = 'input window, operand 11, single buffered']
    #allocation21 [shape = 's32[1]{0}', space=sflag, size = 0x4, scoped, tag = 'scoped memory for tpu_custom_call.1']
    #allocation22 [shape = 'u8[4096]{0}', space=vmem, size = 0x1000, scoped, tag = 'input window, operand 12, single buffered']
    #allocation23 [shape = 'u8[3145728]{0}', space=vmem, size = 0x300000, scoped, tag = 'input window, operand 13']
    #allocation24 [shape = 's32[2]{0}', space=sflag, size = 0x8, scoped, tag = 'scoped memory for tpu_custom_call.1']
    #allocation25 [shape = 'u8[6144]{0}', space=vmem, size = 0x1800, scoped, tag = 'input window, operand 14']
    #allocation26 [shape = 'u8[49152]{0}', space=vmem, size = 0xc000, scoped, tag = 'output window, operand 0']
    %20 = vsyncpa [#allocation3], 0
    %21 = vsyncpa [#allocation6], 0
    %22 = vsyncpa [#allocation9], 0
    %23 = vsyncpa [#allocation12], 0
    %24 = vsyncpa [#allocation15], 0
    %25 = vsyncpa [#allocation18], 0
    %26 = vsyncpa [#allocation21], 0
    %27 = vsyncpa [#allocation24], 0
    %s28 = scalar_lea.sflag [#allocation24], 1
    %29 = vsyncpa %s28, 0
    %30 = vsyncpa [#allocation4], 0
    %s31 = scalar_lea.sflag [#allocation4], 1
    %32 = vsyncpa %s31, 0
    loop: start=0, step=1, limit=6
    $region2: #{tpu_custom_call.1} parent=1 // loop_pre_header
      _
    $region3: #{tpu_custom_call.1} parent=1 // loop_header
      %s34 = sphi 0, %s38
      %p35 = scmp.ge.s32.totalorder %s34, 6
      %s42 = sphi 0, %s42
      %s44 = sphi 0, %s42
      %s45 = sphi 0, %s44
      %s59 = sphi 0, %s45
      %s63 = sphi 0, %s63
      %s65 = sphi 0, %s63
      %s66 = sphi 0, %s65
      %s80 = sphi 0, %s66
      %s84 = sphi 0, %s84
      %s86 = sphi 0, %s84
      %s87 = sphi 0, %s86
      %s101 = sphi 0, %s87
      %s105 = sphi 0, %s105
      %s107 = sphi 0, %s105
      %s108 = sphi 0, %s107
      %s122 = sphi 0, %s108
      %s126 = sphi 0, %s126
      %s128 = sphi 0, %s126
      %s129 = sphi 0, %s128
      %s143 = sphi 0, %s129
      %s147 = sphi 0, %s147
      %s149 = sphi 0, %s147
      %s150 = sphi 0, %s149
      %s164 = sphi 0, %s150
      %s168 = sphi 0, %s168
      %s170 = sphi 0, %s168
      %s171 = sphi 0, %s170
      %s185 = sphi 0, %s171
      %s189 = sphi 0, %s189
      %s191 = sphi 0, %s189
      %s192 = sphi 0, %s191
      %s206 = sphi 0, %s192
      %s210 = sphi 0, %s210
      %s212 = sphi 0, %s210
      %s213 = sphi 0, %s212
      %s227 = sphi 0, %s213
      %s231 = sphi 0, %s231
      %s233 = sphi 0, %s231
      %s234 = sphi 0, %s233
      %s248 = sphi 0, %s234
      %s252 = sphi 0, %s252
      %s254 = sphi 0, %s252
      %s255 = sphi 0, %s254
      %s269 = sphi 0, %s255
      %s273 = sphi 0, %s273
      %s275 = sphi 0, %s273
      %s276 = sphi 0, %s275
      %s290 = sphi 0, %s276
      %s294 = sphi 0, %s294
      %s296 = sphi 0, %s294
      %s297 = sphi 0, %s296
      %s311 = sphi 0, %s297
      %s317 = sphi 0, %s319
      %s320 = sphi 0, %s317
      %s321 = sphi 0, %s320
      %s337 = sphi 0, %s321
      %s343 = sphi 0, %s345
      %s346 = sphi 0, %s343
      %s347 = sphi 0, %s346
      %s363 = sphi 0, %s347
      %s369 = sphi 0, %s371
      %s372 = sphi 0, %s369
      %s373 = sphi 0, %s372
      %s389 = sphi 0, %s373
    $region4: #{tpu_custom_call.1} parent=1 // loop_header_branch
      %37 = sbr.rel (%p35) target = $region8
    $region5: #{tpu_custom_call.1} parent=1 // loop_body
      %s39 = ssub.s32 %s34, 1
      %s40 = ssub.s32 %s34, 2
      %s41 = sadd.s32 %s34, 1
      %s43 = sadd.s32 %s42, 1
      %p46 = scmp.eq.s32.totalorder %s34, 3
      %p47 = scmp.ne.s32.totalorder %s42, %s44
      %p48 = scmp.eq.s32.totalorder %s34, 0
      %p49 = por %p47, %p48
      %p50 = scmp.ne.s32.totalorder %s42, %s44
      %p51 = scmp.eq.s32.totalorder %s39, 3
      %p52 = por %p50, %p51
      %p53 = scmp.ne.s32.totalorder %s44, %s45
      %p54 = scmp.eq.s32.totalorder %s39, 0
      %p55 = por %p53, %p54
      %p56 = scmp.ne.s32.totalorder %s44, %s45
      %p57 = scmp.eq.s32.totalorder %s40, 3
      %p58 = por %p56, %p57
      %p60 = scmp.ne.s32.totalorder %s45, %s59
      %p61 = scmp.eq.s32.totalorder %s40, 0
      %p62 = por %p60, %p61
      %s64 = sadd.s32 %s63, 1
      %p67 = scmp.eq.s32.totalorder %s34, 3
      %p68 = scmp.ne.s32.totalorder %s63, %s65
      %p69 = scmp.eq.s32.totalorder %s34, 0
      %p70 = por %p68, %p69
      %p71 = scmp.ne.s32.totalorder %s63, %s65
      %p72 = scmp.eq.s32.totalorder %s39, 3
      %p73 = por %p71, %p72
      %p74 = scmp.ne.s32.totalorder %s65, %s66
      %p75 = scmp.eq.s32.totalorder %s39, 0
      %p76 = por %p74, %p75
      %p77 = scmp.ne.s32.totalorder %s65, %s66
      %p78 = scmp.eq.s32.totalorder %s40, 3
      %p79 = por %p77, %p78
      %p81 = scmp.ne.s32.totalorder %s66, %s80
      %p82 = scmp.eq.s32.totalorder %s40, 0
      %p83 = por %p81, %p82
      %s85 = sadd.s32 %s84, 1
      %p88 = scmp.eq.s32.totalorder %s34, 3
      %p89 = scmp.ne.s32.totalorder %s84, %s86
      %p90 = scmp.eq.s32.totalorder %s34, 0
      %p91 = por %p89, %p90
      %p92 = scmp.ne.s32.totalorder %s84, %s86
      %p93 = scmp.eq.s32.totalorder %s39, 3
      %p94 = por %p92, %p93
      %p95 = scmp.ne.s32.totalorder %s86, %s87
      %p96 = scmp.eq.s32.totalorder %s39, 0
      %p97 = por %p95, %p96
      %p98 = scmp.ne.s32.totalorder %s86, %s87
      %p99 = scmp.eq.s32.totalorder %s40, 3
      %p100 = por %p98, %p99
      %p102 = scmp.ne.s32.totalorder %s87, %s101
      %p103 = scmp.eq.s32.totalorder %s40, 0
      %p104 = por %p102, %p103
      %s106 = sadd.s32 %s105, 1
      %p109 = scmp.eq.s32.totalorder %s34, 3
      %p110 = scmp.ne.s32.totalorder %s105, %s107
      %p111 = scmp.eq.s32.totalorder %s34, 0
      %p112 = por %p110, %p111
      %p113 = scmp.ne.s32.totalorder %s105, %s107
      %p114 = scmp.eq.s32.totalorder %s39, 3
      %p115 = por %p113, %p114
      %p116 = scmp.ne.s32.totalorder %s107, %s108
      %p117 = scmp.eq.s32.totalorder %s39, 0
      %p118 = por %p116, %p117
      %p119 = scmp.ne.s32.totalorder %s107, %s108
      %p120 = scmp.eq.s32.totalorder %s40, 3
      %p121 = por %p119, %p120
      %p123 = scmp.ne.s32.totalorder %s108, %s122
      %p124 = scmp.eq.s32.totalorder %s40, 0
      %p125 = por %p123, %p124
      %s127 = sadd.s32 %s126, 1
      %p130 = scmp.eq.s32.totalorder %s34, 3
      %p131 = scmp.ne.s32.totalorder %s126, %s128
      %p132 = scmp.eq.s32.totalorder %s34, 0
      %p133 = por %p131, %p132
      %p134 = scmp.ne.s32.totalorder %s126, %s128
      %p135 = scmp.eq.s32.totalorder %s39, 3
      %p136 = por %p134, %p135
      %p137 = scmp.ne.s32.totalorder %s128, %s129
      %p138 = scmp.eq.s32.totalorder %s39, 0
      %p139 = por %p137, %p138
      %p140 = scmp.ne.s32.totalorder %s128, %s129
      %p141 = scmp.eq.s32.totalorder %s40, 3
      %p142 = por %p140, %p141
      %p144 = scmp.ne.s32.totalorder %s129, %s143
      %p145 = scmp.eq.s32.totalorder %s40, 0
      %p146 = por %p144, %p145
      %s148 = sadd.s32 %s147, 1
      %p151 = scmp.eq.s32.totalorder %s34, 3
      %p152 = scmp.ne.s32.totalorder %s147, %s149
      %p153 = scmp.eq.s32.totalorder %s34, 0
      %p154 = por %p152, %p153
      %p155 = scmp.ne.s32.totalorder %s147, %s149
      %p156 = scmp.eq.s32.totalorder %s39, 3
      %p157 = por %p155, %p156
      %p158 = scmp.ne.s32.totalorder %s149, %s150
      %p159 = scmp.eq.s32.totalorder %s39, 0
      %p160 = por %p158, %p159
      %p161 = scmp.ne.s32.totalorder %s149, %s150
      %p162 = scmp.eq.s32.totalorder %s40, 3
      %p163 = por %p161, %p162
      %p165 = scmp.ne.s32.totalorder %s150, %s164
      %p166 = scmp.eq.s32.totalorder %s40, 0
      %p167 = por %p165, %p166
      %s169 = sadd.s32 %s168, 1
      %p172 = scmp.eq.s32.totalorder %s34, 3
      %p173 = scmp.ne.s32.totalorder %s168, %s170
      %p174 = scmp.eq.s32.totalorder %s34, 0
      %p175 = por %p173, %p174
      %p176 = scmp.ne.s32.totalorder %s168, %s170
      %p177 = scmp.eq.s32.totalorder %s39, 3
      %p178 = por %p176, %p177
      %p179 = scmp.ne.s32.totalorder %s170, %s171
      %p180 = scmp.eq.s32.totalorder %s39, 0
      %p181 = por %p179, %p180
      %p182 = scmp.ne.s32.totalorder %s170, %s171
      %p183 = scmp.eq.s32.totalorder %s40, 3
      %p184 = por %p182, %p183
      %p186 = scmp.ne.s32.totalorder %s171, %s185
      %p187 = scmp.eq.s32.totalorder %s40, 0
      %p188 = por %p186, %p187
      %s190 = sadd.s32 %s189, 1
      %p193 = scmp.eq.s32.totalorder %s34, 3
      %p194 = scmp.ne.s32.totalorder %s189, %s191
      %p195 = scmp.eq.s32.totalorder %s34, 0
      %p196 = por %p194, %p195
      %p197 = scmp.ne.s32.totalorder %s189, %s191
      %p198 = scmp.eq.s32.totalorder %s39, 3
      %p199 = por %p197, %p198
      %p200 = scmp.ne.s32.totalorder %s191, %s192
      %p201 = scmp.eq.s32.totalorder %s39, 0
      %p202 = por %p200, %p201
      %p203 = scmp.ne.s32.totalorder %s191, %s192
      %p204 = scmp.eq.s32.totalorder %s40, 3
      %p205 = por %p203, %p204
      %p207 = scmp.ne.s32.totalorder %s192, %s206
      %p208 = scmp.eq.s32.totalorder %s40, 0
      %p209 = por %p207, %p208
      %s211 = sadd.s32 %s210, 1
      %p214 = scmp.eq.s32.totalorder %s34, 3
      %p215 = scmp.ne.s32.totalorder %s210, %s212
      %p216 = scmp.eq.s32.totalorder %s34, 0
      %p217 = por %p215, %p216
      %p218 = scmp.ne.s32.totalorder %s210, %s212
      %p219 = scmp.eq.s32.totalorder %s39, 3
      %p220 = por %p218, %p219
      %p221 = scmp.ne.s32.totalorder %s212, %s213
      %p222 = scmp.eq.s32.totalorder %s39, 0
      %p223 = por %p221, %p222
      %p224 = scmp.ne.s32.totalorder %s212, %s213
      %p225 = scmp.eq.s32.totalorder %s40, 3
      %p226 = por %p224, %p225
      %p228 = scmp.ne.s32.totalorder %s213, %s227
      %p229 = scmp.eq.s32.totalorder %s40, 0
      %p230 = por %p228, %p229
      %s232 = sadd.s32 %s231, 1
      %p235 = scmp.eq.s32.totalorder %s34, 3
      %p236 = scmp.ne.s32.totalorder %s231, %s233
      %p237 = scmp.eq.s32.totalorder %s34, 0
      %p238 = por %p236, %p237
      %p239 = scmp.ne.s32.totalorder %s231, %s233
      %p240 = scmp.eq.s32.totalorder %s39, 3
      %p241 = por %p239, %p240
      %p242 = scmp.ne.s32.totalorder %s233, %s234
      %p243 = scmp.eq.s32.totalorder %s39, 0
      %p244 = por %p242, %p243
      %p245 = scmp.ne.s32.totalorder %s233, %s234
      %p246 = scmp.eq.s32.totalorder %s40, 3
      %p247 = por %p245, %p246
      %p249 = scmp.ne.s32.totalorder %s234, %s248
      %p250 = scmp.eq.s32.totalorder %s40, 0
      %p251 = por %p249, %p250
      %s253 = sadd.s32 %s252, 1
      %p256 = scmp.eq.s32.totalorder %s34, 3
      %p257 = scmp.ne.s32.totalorder %s252, %s254
      %p258 = scmp.eq.s32.totalorder %s34, 0
      %p259 = por %p257, %p258
      %p260 = scmp.ne.s32.totalorder %s252, %s254
      %p261 = scmp.eq.s32.totalorder %s39, 3
      %p262 = por %p260, %p261
      %p263 = scmp.ne.s32.totalorder %s254, %s255
      %p264 = scmp.eq.s32.totalorder %s39, 0
      %p265 = por %p263, %p264
      %p266 = scmp.ne.s32.totalorder %s254, %s255
      %p267 = scmp.eq.s32.totalorder %s40, 3
      %p268 = por %p266, %p267
      %p270 = scmp.ne.s32.totalorder %s255, %s269
      %p271 = scmp.eq.s32.totalorder %s40, 0
      %p272 = por %p270, %p271
      %s274 = sadd.s32 %s273, 1
      %p277 = scmp.eq.s32.totalorder %s34, 3
      %p278 = scmp.ne.s32.totalorder %s273, %s275
      %p279 = scmp.eq.s32.totalorder %s34, 0
      %p280 = por %p278, %p279
      %p281 = scmp.ne.s32.totalorder %s273, %s275
      %p282 = scmp.eq.s32.totalorder %s39, 3
      %p283 = por %p281, %p282
      %p284 = scmp.ne.s32.totalorder %s275, %s276
      %p285 = scmp.eq.s32.totalorder %s39, 0
      %p286 = por %p284, %p285
      %p287 = scmp.ne.s32.totalorder %s275, %s276
      %p288 = scmp.eq.s32.totalorder %s40, 3
      %p289 = por %p287, %p288
      %p291 = scmp.ne.s32.totalorder %s276, %s290
      %p292 = scmp.eq.s32.totalorder %s40, 0
      %p293 = por %p291, %p292
      %s295 = sadd.s32 %s294, 1
      %p298 = scmp.eq.s32.totalorder %s34, 3
      %p299 = scmp.ne.s32.totalorder %s294, %s296
      %p300 = scmp.eq.s32.totalorder %s34, 0
      %p301 = por %p299, %p300
      %p302 = scmp.ne.s32.totalorder %s294, %s296
      %p303 = scmp.eq.s32.totalorder %s39, 3
      %p304 = por %p302, %p303
      %p305 = scmp.ne.s32.totalorder %s296, %s297
      %p306 = scmp.eq.s32.totalorder %s39, 0
      %p307 = por %p305, %p306
      %p308 = scmp.ne.s32.totalorder %s296, %s297
      %p309 = scmp.eq.s32.totalorder %s40, 3
      %p310 = por %p308, %p309
      %p312 = scmp.ne.s32.totalorder %s297, %s311
      %p313 = scmp.eq.s32.totalorder %s40, 0
      %p314 = por %p312, %p313
      %s315 = ssub.s32 %s34, %s41
      %p316 = scmp.eq.s32.totalorder %s315, 0
      %s318 = sadd.s32 %s317, 1
      %s319 = scalar_select %p316, %s317, %s318
      %p322 = pneg %p316
      %p323 = scmp.eq.s32.totalorder %s34, 3
      %p324 = por %p322, %p323
      %p325 = scmp.ne.s32.totalorder %s317, %s320
      %p326 = scmp.eq.s32.totalorder %s34, 0
      %p327 = por %p325, %p326
      %p328 = scmp.ne.s32.totalorder %s317, %s320
      %p329 = scmp.eq.s32.totalorder %s39, 3
      %p330 = por %p328, %p329
      %p331 = scmp.ne.s32.totalorder %s320, %s321
      %p332 = scmp.eq.s32.totalorder %s39, 0
      %p333 = por %p331, %p332
      %p334 = scmp.ne.s32.totalorder %s320, %s321
      %p335 = scmp.eq.s32.totalorder %s40, 3
      %p336 = por %p334, %p335
      %p338 = scmp.ne.s32.totalorder %s321, %s337
      %p339 = scmp.eq.s32.totalorder %s40, 0
      %p340 = por %p338, %p339
      %s341 = ssub.s32 %s34, %s41
      %p342 = scmp.eq.s32.totalorder %s341, 0
      %s344 = sadd.s32 %s343, 1
      %s345 = scalar_select %p342, %s343, %s344
      %p348 = pneg %p342
      %p349 = scmp.eq.s32.totalorder %s34, 3
      %p350 = por %p348, %p349
      %p351 = scmp.ne.s32.totalorder %s343, %s346
      %p352 = scmp.eq.s32.totalorder %s34, 0
      %p353 = por %p351, %p352
      %p354 = scmp.ne.s32.totalorder %s343, %s346
      %p355 = scmp.eq.s32.totalorder %s39, 3
      %p356 = por %p354, %p355
      %p357 = scmp.ne.s32.totalorder %s346, %s347
      %p358 = scmp.eq.s32.totalorder %s39, 0
      %p359 = por %p357, %p358
      %p360 = scmp.ne.s32.totalorder %s346, %s347
      %p361 = scmp.eq.s32.totalorder %s40, 3
      %p362 = por %p360, %p361
      %p364 = scmp.ne.s32.totalorder %s347, %s363
      %p365 = scmp.eq.s32.totalorder %s40, 0
      %p366 = por %p364, %p365
      %s367 = ssub.s32 %s34, %s41
      %p368 = scmp.eq.s32.totalorder %s367, 0
      %s370 = sadd.s32 %s369, 1
      %s371 = scalar_select %p368, %s369, %s370
      %p374 = pneg %p368
      %p375 = scmp.eq.s32.totalorder %s34, 3
      %p376 = por %p374, %p375
      %p377 = scmp.ne.s32.totalorder %s369, %s372
      %p378 = scmp.eq.s32.totalorder %s34, 0
      %p379 = por %p377, %p378
      %p380 = scmp.ne.s32.totalorder %s369, %s372
      %p381 = scmp.eq.s32.totalorder %s39, 3
      %p382 = por %p380, %p381
      %p383 = scmp.ne.s32.totalorder %s372, %s373
      %p384 = scmp.eq.s32.totalorder %s39, 0
      %p385 = por %p383, %p384
      %p386 = scmp.ne.s32.totalorder %s372, %s373
      %p387 = scmp.eq.s32.totalorder %s40, 3
      %p388 = por %p386, %p387
      %p390 = scmp.ne.s32.totalorder %s373, %s389
      %p391 = scmp.eq.s32.totalorder %s40, 0
      %p392 = por %p390, %p391
      %p393 = scmp.le.s32.totalorder 1, %s34
      %p394 = scmp.lt.s32.totalorder %s34, 5
      %p395 = pnand %p393, %p394
      %p396 = pneg %p395
      // Predicated region
      $region9: #{tpu_custom_call.1} parent=5 // pred_check
        _
      $region10: #{tpu_custom_call.1} parent=5 // pred_check_branch
        %398 = sbr.rel (%p395) target = $region12
      $region11: #{tpu_custom_call.1} parent=5 // pred_region
        %s399 = ssub.s32 %s34, 1
        // Predicated region
        $region13: #{tpu_custom_call.1} parent=11 // pred_check
          %p400 = pneg %p55
        $region14: #{tpu_custom_call.1} parent=11 // pred_check_branch
          %402 = sbr.rel (%p400) target = $region16
        $region15: #{tpu_custom_call.1} parent=11 // pred_region
          %s404 = ssub.s32 128, 128
          %405 = vsyncadd [#allocation3], %s404
          %s407 = sshll.u32 [#allocation2], 4
          %s408 = int_to_ptr.vmem [resolvable:$true] %s407
          %410 = dma.hbm_to_vmem [thread:$0]  %s0, 128, %s408, [#allocation3]
        $region16: #{tpu_custom_call.1} parent=11 // pred_fallthru
          _
        // Predicated region
        $region17: #{tpu_custom_call.1} parent=11 // pred_check
          %p411 = pneg %p76
        $region18: #{tpu_custom_call.1} parent=11 // pred_check_branch
          %413 = sbr.rel (%p411) target = $region20
        $region19: #{tpu_custom_call.1} parent=11 // pred_region
          %s415 = ssub.s32 1024, 1024
          %416 = vsyncadd [#allocation6], %s415
          %s417 = sshll.u32 [#allocation5], 4
          %s418 = int_to_ptr.vmem [resolvable:$true] %s417
          %423 = dma.hbm_to_vmem [thread:$0]  %s1, 1024, %s418, [#allocation6], 64, 64, 4
        $region20: #{tpu_custom_call.1} parent=11 // pred_fallthru
          _
        // Predicated region
        $region21: #{tpu_custom_call.1} parent=11 // pred_check
          %p424 = pneg %p97
        $region22: #{tpu_custom_call.1} parent=11 // pred_check_branch
          %426 = sbr.rel (%p424) target = $region24
        $region23: #{tpu_custom_call.1} parent=11 // pred_region
          %s428 = ssub.s32 16, 16
          %429 = vsyncadd [#allocation6], %s428
          %s431 = sshll.u32 [#allocation7], 4
          %s432 = int_to_ptr.vmem [resolvable:$true] %s431
          %434 = dma.hbm_to_vmem [thread:$0]  %s2, 16, %s432, [#allocation6]
        $region24: #{tpu_custom_call.1} parent=11 // pred_fallthru
          _
        // Predicated region
        $region25: #{tpu_custom_call.1} parent=11 // pred_check
          %p435 = pneg %p118
        $region26: #{tpu_custom_call.1} parent=11 // pred_check_branch
          %437 = sbr.rel (%p435) target = $region28
        $region27: #{tpu_custom_call.1} parent=11 // pred_region
          %s439 = ssub.s32 1024, 1024
          %440 = vsyncadd [#allocation9], %s439
          %s441 = sshll.u32 [#allocation8], 4
          %s442 = int_to_ptr.vmem [resolvable:$true] %s441
          %447 = dma.hbm_to_vmem [thread:$0]  %s3, 1024, %s442, [#allocation9], 64, 64, 4
        $region28: #{tpu_custom_call.1} parent=11 // pred_fallthru
          _
        // Predicated region
        $region29: #{tpu_custom_call.1} parent=11 // pred_check
          %p448 = pneg %p139
        $region30: #{tpu_custom_call.1} parent=11 // pred_check_branch
          %450 = sbr.rel (%p448) target = $region32
        $region31: #{tpu_custom_call.1} parent=11 // pred_region
          %s452 = ssub.s32 16, 16
          %453 = vsyncadd [#allocation9], %s452
          %s455 = sshll.u32 [#allocation10], 4
          %s456 = int_to_ptr.vmem [resolvable:$true] %s455
          %458 = dma.hbm_to_vmem [thread:$0]  %s4, 16, %s456, [#allocation9]
        $region32: #{tpu_custom_call.1} parent=11 // pred_fallthru
          _
        // Predicated region
        $region33: #{tpu_custom_call.1} parent=11 // pred_check
          %p459 = pneg %p160
        $region34: #{tpu_custom_call.1} parent=11 // pred_check_branch
          %461 = sbr.rel (%p459) target = $region36
        $region35: #{tpu_custom_call.1} parent=11 // pred_region
          %s463 = ssub.s32 2048, 2048
          %464 = vsyncadd [#allocation12], %s463
          %s465 = sshll.u32 [#allocation11], 4
          %s466 = int_to_ptr.vmem [resolvable:$true] %s465
          %471 = dma.hbm_to_vmem [thread:$0]  %s5, 2048, %s466, [#allocation12], 128, 128, 8
        $region36: #{tpu_custom_call.1} parent=11 // pred_fallthru
          _
        // Predicated region
        $region37: #{tpu_custom_call.1} parent=11 // pred_check
          %p472 = pneg %p181
        $region38: #{tpu_custom_call.1} parent=11 // pred_check_branch
          %474 = sbr.rel (%p472) target = $region40
        $region39: #{tpu_custom_call.1} parent=11 // pred_region
          %s476 = ssub.s32 32, 32
          %477 = vsyncadd [#allocation12], %s476
          %s479 = sshll.u32 [#allocation13], 4
          %s480 = int_to_ptr.vmem [resolvable:$true] %s479
          %482 = dma.hbm_to_vmem [thread:$0]  %s6, 32, %s480, [#allocation12]
        $region40: #{tpu_custom_call.1} parent=11 // pred_fallthru
          _
        // Predicated region
        $region41: #{tpu_custom_call.1} parent=11 // pred_check
          %p483 = pneg %p202
        $region42: #{tpu_custom_call.1} parent=11 // pred_check_branch
          %485 = sbr.rel (%p483) target = $region44
        $region43: #{tpu_custom_call.1} parent=11 // pred_region
          %s487 = ssub.s32 4096, 4096
          %488 = vsyncadd [#allocation15], %s487
          %s489 = sshll.u32 [#allocation14], 4
          %s490 = int_to_ptr.vmem [resolvable:$true] %s489
          %495 = dma.hbm_to_vmem [thread:$0]  %s7, 4096, %s490, [#allocation15], 128, 128, 8
        $region44: #{tpu_custom_call.1} parent=11 // pred_fallthru
          _
        // Predicated region
        $region45: #{tpu_custom_call.1} parent=11 // pred_check
          %p496 = pneg %p223
        $region46: #{tpu_custom_call.1} parent=11 // pred_check_branch
          %498 = sbr.rel (%p496) target = $region48
        $region47: #{tpu_custom_call.1} parent=11 // pred_region
          %s500 = ssub.s32 32, 32
          %501 = vsyncadd [#allocation15], %s500
          %s503 = sshll.u32 [#allocation16], 4
          %s504 = int_to_ptr.vmem [resolvable:$true] %s503
          %506 = dma.hbm_to_vmem [thread:$0]  %s8, 32, %s504, [#allocation15]
        $region48: #{tpu_custom_call.1} parent=11 // pred_fallthru
          _
        // Predicated region
        $region49: #{tpu_custom_call.1} parent=11 // pred_check
          %p507 = pneg %p244
        $region50: #{tpu_custom_call.1} parent=11 // pred_check_branch
          %509 = sbr.rel (%p507) target = $region52
        $region51: #{tpu_custom_call.1} parent=11 // pred_region
          %s511 = ssub.s32 8192, 8192
          %512 = vsyncadd [#allocation18], %s511
          %s513 = sshll.u32 [#allocation17], 4
          %s514 = int_to_ptr.vmem [resolvable:$true] %s513
          %519 = dma.hbm_to_vmem [thread:$0]  %s9, 8192, %s514, [#allocation18], 256, 256, 16
        $region52: #{tpu_custom_call.1} parent=11 // pred_fallthru
          _
        // Predicated region
        $region53: #{tpu_custom_call.1} parent=11 // pred_check
          %p520 = pneg %p265
        $region54: #{tpu_custom_call.1} parent=11 // pred_check_branch
          %522 = sbr.rel (%p520) target = $region56
        $region55: #{tpu_custom_call.1} parent=11 // pred_region
          %s524 = ssub.s32 64, 64
          %525 = vsyncadd [#allocation18], %s524
          %s527 = sshll.u32 [#allocation19], 4
          %s528 = int_to_ptr.vmem [resolvable:$true] %s527
          %530 = dma.hbm_to_vmem [thread:$0]  %s10, 64, %s528, [#allocation18]
        $region56: #{tpu_custom_call.1} parent=11 // pred_fallthru
          _
        // Predicated region
        $region57: #{tpu_custom_call.1} parent=11 // pred_check
          %p531 = pneg %p286
        $region58: #{tpu_custom_call.1} parent=11 // pred_check_branch
          %533 = sbr.rel (%p531) target = $region60
        $region59: #{tpu_custom_call.1} parent=11 // pred_region
          %s535 = ssub.s32 32768, 32768
          %536 = vsyncadd [#allocation21], %s535
          %s537 = sshll.u32 [#allocation20], 4
          %s538 = int_to_ptr.vmem [resolvable:$true] %s537
          %543 = dma.hbm_to_vmem [thread:$0]  %s11, 32768, %s538, [#allocation21], 512, 512, 32
        $region60: #{tpu_custom_call.1} parent=11 // pred_fallthru
          _
        // Predicated region
        $region61: #{tpu_custom_call.1} parent=11 // pred_check
          %p544 = pneg %p307
        $region62: #{tpu_custom_call.1} parent=11 // pred_check_branch
          %546 = sbr.rel (%p544) target = $region64
        $region63: #{tpu_custom_call.1} parent=11 // pred_region
          %s548 = ssub.s32 128, 128
          %549 = vsyncadd [#allocation21], %s548
          %s551 = sshll.u32 [#allocation22], 4
          %s552 = int_to_ptr.vmem [resolvable:$true] %s551
          %554 = dma.hbm_to_vmem [thread:$0]  %s12, 128, %s552, [#allocation21]
        $region64: #{tpu_custom_call.1} parent=11 // pred_fallthru
          _
      $region12: #{tpu_custom_call.1} parent=5 // pred_fallthru
        _
      %p555 = scmp.lt.s32.totalorder %s34, 4
      // Predicated region
      $region65: #{tpu_custom_call.1} parent=5 // pred_check
        %p556 = pneg %p555
      $region66: #{tpu_custom_call.1} parent=5 // pred_check_branch
        %558 = sbr.rel (%p556) target = $region68
      $region67: #{tpu_custom_call.1} parent=5 // pred_region
        // Predicated region
        $region69: #{tpu_custom_call.1} parent=67 // pred_check
          %p559 = pneg %p327
        $region70: #{tpu_custom_call.1} parent=67 // pred_check_branch
          %561 = sbr.rel (%p559) target = $region72
        $region71: #{tpu_custom_call.1} parent=67 // pred_region
          %s562 = sand.u32 %s34, 1
          %s563 = scalar_lea.sflag [#allocation24], %s562
          %s564 = sand.u32 %s317, 1
          %s565 = smul.addr %s564, 3072
          %s566 = scalar_lea.vmem [#allocation23], %s565
          %s567 = smul.u32 6, %s34
          %s569 = ssub.s32 49152, 49152
          %570 = vsyncadd %s563, %s569
          %s571 = smul.addr %s567, 64
          %s572 = scalar_lea.hbm %s13, %s571
          %s573 = sshll.u32 %s566, 4
          %s574 = int_to_ptr.vmem [resolvable:$true] %s573
          %579 = dma.hbm_to_vmem [thread:$0]  %s572, 49152, %s574, %s563, 1536, 384, 24
        $region72: #{tpu_custom_call.1} parent=67 // pred_fallthru
          _
        // Predicated region
        $region73: #{tpu_custom_call.1} parent=67 // pred_check
          %p580 = pneg %p353
        $region74: #{tpu_custom_call.1} parent=67 // pred_check_branch
          %582 = sbr.rel (%p580) target = $region76
        $region75: #{tpu_custom_call.1} parent=67 // pred_region
          %s583 = sand.u32 %s34, 1
          %s584 = scalar_lea.sflag [#allocation24], %s583
          %s585 = sand.u32 %s343, 1
          %s586 = smul.addr %s585, 6
          %s587 = scalar_lea.vmem [#allocation25], %s586
          %s588 = smul.u32 6, %s34
          %s590 = ssub.s32 96, 96
          %591 = vsyncadd %s584, %s590
          %s592 = smul.addr %s588, 16
          %s593 = scalar_lea.hbm %s14, %s592
          %s595 = sshll.u32 %s587, 4
          %s596 = int_to_ptr.vmem [resolvable:$true] %s595
          %598 = dma.hbm_to_vmem [thread:$0]  %s593, 96, %s596, %s584
        $region76: #{tpu_custom_call.1} parent=67 // pred_fallthru
          _
      $region68: #{tpu_custom_call.1} parent=5 // pred_fallthru
        _
      %p599 = scmp.le.s32.totalorder 1, %s34
      %p600 = scmp.lt.s32.totalorder %s34, 5
      %p601 = pnand %p599, %p600
      %p602 = pneg %p601
      // Predicated region
      $region77: #{tpu_custom_call.1} parent=5 // pred_check
        _
      $region78: #{tpu_custom_call.1} parent=5 // pred_check_branch
        %604 = sbr.rel (%p601) target = $region80
      $region79: #{tpu_custom_call.1} parent=5 // pred_region
        %s605 = ssub.s32 %s34, 1
        // Predicated region
        $region81: #{tpu_custom_call.1} parent=79 // pred_check
          %p606 = pneg %p55
        $region82: #{tpu_custom_call.1} parent=79 // pred_check_branch
          %608 = sbr.rel (%p606) target = $region84
        $region83: #{tpu_custom_call.1} parent=79 // pred_region
          %609 = dma.done [#allocation3], 128
        $region84: #{tpu_custom_call.1} parent=79 // pred_fallthru
          _
        // Predicated region
        $region85: #{tpu_custom_call.1} parent=79 // pred_check
          %p610 = pneg %p76
        $region86: #{tpu_custom_call.1} parent=79 // pred_check_branch
          %612 = sbr.rel (%p610) target = $region88
        $region87: #{tpu_custom_call.1} parent=79 // pred_region
          %613 = dma.done [#allocation6], 1024
        $region88: #{tpu_custom_call.1} parent=79 // pred_fallthru
          _
        // Predicated region
        $region89: #{tpu_custom_call.1} parent=79 // pred_check
          %p614 = pneg %p97
        $region90: #{tpu_custom_call.1} parent=79 // pred_check_branch
          %616 = sbr.rel (%p614) target = $region92
        $region91: #{tpu_custom_call.1} parent=79 // pred_region
          %617 = dma.done [#allocation6], 16
        $region92: #{tpu_custom_call.1} parent=79 // pred_fallthru
          _
        // Predicated region
        $region93: #{tpu_custom_call.1} parent=79 // pred_check
          %p618 = pneg %p118
        $region94: #{tpu_custom_call.1} parent=79 // pred_check_branch
          %620 = sbr.rel (%p618) target = $region96
        $region95: #{tpu_custom_call.1} parent=79 // pred_region
          %621 = dma.done [#allocation9], 1024
        $region96: #{tpu_custom_call.1} parent=79 // pred_fallthru
          _
        // Predicated region
        $region97: #{tpu_custom_call.1} parent=79 // pred_check
          %p622 = pneg %p139
        $region98: #{tpu_custom_call.1} parent=79 // pred_check_branch
          %624 = sbr.rel (%p622) target = $region100
        $region99: #{tpu_custom_call.1} parent=79 // pred_region
          %625 = dma.done [#allocation9], 16
        $region100: #{tpu_custom_call.1} parent=79 // pred_fallthru
          _
        // Predicated region
        $region101: #{tpu_custom_call.1} parent=79 // pred_check
          %p626 = pneg %p160
        $region102: #{tpu_custom_call.1} parent=79 // pred_check_branch
          %628 = sbr.rel (%p626) target = $region104
        $region103: #{tpu_custom_call.1} parent=79 // pred_region
          %629 = dma.done [#allocation12], 2048
        $region104: #{tpu_custom_call.1} parent=79 // pred_fallthru
          _
        // Predicated region
        $region105: #{tpu_custom_call.1} parent=79 // pred_check
          %p630 = pneg %p181
        $region106: #{tpu_custom_call.1} parent=79 // pred_check_branch
          %632 = sbr.rel (%p630) target = $region108
        $region107: #{tpu_custom_call.1} parent=79 // pred_region
          %633 = dma.done [#allocation12], 32
        $region108: #{tpu_custom_call.1} parent=79 // pred_fallthru
          _
        // Predicated region
        $region109: #{tpu_custom_call.1} parent=79 // pred_check
          %p634 = pneg %p202
        $region110: #{tpu_custom_call.1} parent=79 // pred_check_branch
          %636 = sbr.rel (%p634) target = $region112
        $region111: #{tpu_custom_call.1} parent=79 // pred_region
          %637 = dma.done [#allocation15], 4096
        $region112: #{tpu_custom_call.1} parent=79 // pred_fallthru
          _
        // Predicated region
        $region113: #{tpu_custom_call.1} parent=79 // pred_check
          %p638 = pneg %p223
        $region114: #{tpu_custom_call.1} parent=79 // pred_check_branch
          %640 = sbr.rel (%p638) target = $region116
        $region115: #{tpu_custom_call.1} parent=79 // pred_region
          %641 = dma.done [#allocation15], 32
        $region116: #{tpu_custom_call.1} parent=79 // pred_fallthru
          _
        // Predicated region
        $region117: #{tpu_custom_call.1} parent=79 // pred_check
          %p642 = pneg %p244
        $region118: #{tpu_custom_call.1} parent=79 // pred_check_branch
          %644 = sbr.rel (%p642) target = $region120
        $region119: #{tpu_custom_call.1} parent=79 // pred_region
          %645 = dma.done [#allocation18], 8192
        $region120: #{tpu_custom_call.1} parent=79 // pred_fallthru
          _
        // Predicated region
        $region121: #{tpu_custom_call.1} parent=79 // pred_check
          %p646 = pneg %p265
        $region122: #{tpu_custom_call.1} parent=79 // pred_check_branch
          %648 = sbr.rel (%p646) target = $region124
        $region123: #{tpu_custom_call.1} parent=79 // pred_region
          %649 = dma.done [#allocation18], 64
        $region124: #{tpu_custom_call.1} parent=79 // pred_fallthru
          _
        // Predicated region
        $region125: #{tpu_custom_call.1} parent=79 // pred_check
          %p650 = pneg %p286
        $region126: #{tpu_custom_call.1} parent=79 // pred_check_branch
          %652 = sbr.rel (%p650) target = $region128
        $region127: #{tpu_custom_call.1} parent=79 // pred_region
          %653 = dma.done [#allocation21], 32768
        $region128: #{tpu_custom_call.1} parent=79 // pred_fallthru
          _
        // Predicated region
        $region129: #{tpu_custom_call.1} parent=79 // pred_check
          %p654 = pneg %p307
        $region130: #{tpu_custom_call.1} parent=79 // pred_check_branch
          %656 = sbr.rel (%p654) target = $region132
        $region131: #{tpu_custom_call.1} parent=79 // pred_region
          %657 = dma.done [#allocation21], 128
        $region132: #{tpu_custom_call.1} parent=79 // pred_fallthru
          _
        %s658 = sand.u32 %s39, 1
        %s659 = scalar_lea.sflag [#allocation24], %s658
        %s660 = sand.u32 %s320, 1
        %s661 = smul.addr %s660, 3072
        %s662 = scalar_lea.vmem [#allocation23], %s661
        // Predicated region
        $region133: #{tpu_custom_call.1} parent=79 // pred_check
          %p663 = pneg %p333
        $region134: #{tpu_custom_call.1} parent=79 // pred_check_branch
          %665 = sbr.rel (%p663) target = $region136
        $region135: #{tpu_custom_call.1} parent=79 // pred_region
          %666 = dma.done %s659, 49152
        $region136: #{tpu_custom_call.1} parent=79 // pred_fallthru
          _
        %s667 = sand.u32 %s39, 1
        %s668 = scalar_lea.sflag [#allocation24], %s667
        %s669 = sand.u32 %s346, 1
        %s670 = smul.addr %s669, 6
        %s671 = scalar_lea.vmem [#allocation25], %s670
        // Predicated region
        $region137: #{tpu_custom_call.1} parent=79 // pred_check
          %p672 = pneg %p359
        $region138: #{tpu_custom_call.1} parent=79 // pred_check_branch
          %674 = sbr.rel (%p672) target = $region140
        $region139: #{tpu_custom_call.1} parent=79 // pred_region
          %675 = dma.done %s668, 96
        $region140: #{tpu_custom_call.1} parent=79 // pred_fallthru
          _
        %p676 = pneg %p55
        %p677 = pneg %p52
        %p678 = pneg %p76
        %p679 = pneg %p73
        %p680 = pneg %p97
        %p681 = pneg %p94
        %p682 = pneg %p118
        %p683 = pneg %p115
        %p684 = pneg %p139
        %p685 = pneg %p136
        %p686 = pneg %p160
        %p687 = pneg %p157
        %p688 = pneg %p181
        %p689 = pneg %p178
        %p690 = pneg %p202
        %p691 = pneg %p199
        %p692 = pneg %p223
        %p693 = pneg %p220
        %p694 = pneg %p244
        %p695 = pneg %p241
        %p696 = pneg %p265
        %p697 = pneg %p262
        %p698 = pneg %p286
        %p699 = pneg %p283
        %p700 = pneg %p307
        %p701 = pneg %p304
        %s702 = sand.u32 %s39, 1
        %s703 = scalar_lea.sflag [#allocation24], %s702
        %s704 = sand.u32 %s320, 1
        %s705 = smul.addr %s704, 3072
        %s706 = scalar_lea.vmem [#allocation23], %s705
        %p707 = pneg %p333
        %p708 = pneg %p330
        %s709 = sand.u32 %s39, 1
        %s710 = scalar_lea.sflag [#allocation24], %s709
        %s711 = sand.u32 %s346, 1
        %s712 = smul.addr %s711, 6
        %s713 = scalar_lea.vmem [#allocation25], %s712
        %p714 = pneg %p359
        %p715 = pneg %p356
        %p716 = pneg %p385
        %p717 = pneg %p382
        %s718 = sand.u32 %s372, 1
        %s719 = scalar_lea.sflag [#allocation4], %s718
        %s720 = sand.u32 %s372, 1
        %s721 = smul.addr %s720, 48
        %s722 = scalar_lea.vmem [#allocation26], %s721
        %s723 = smul.u32 6, %s39
        %s724 = smul.u32 6, %s39
        %s725 = smul.u32 6, %s39
        %v727 = vld [vmem:[#allocation2] sm:$0xff]
        %v728 = vpack.c.bf16 %v727, %v727
        %v729 = vld [vmem:[#allocation5] sm:$0xf]
        %v730 = vld [vmem:[#allocation5 + $0x4] sm:$0xf]
        %v731 = vld [vmem:[#allocation5 + $0x8] sm:$0xf]
        %v732 = vld [vmem:[#allocation5 + $0xc] sm:$0xf]
        %v733 = vld [vmem:[#allocation5 + $0x10] sm:$0xf]
        %v734 = vld [vmem:[#allocation5 + $0x14] sm:$0xf]
        %v735 = vld [vmem:[#allocation5 + $0x18] sm:$0xf]
        %v736 = vld [vmem:[#allocation5 + $0x1c] sm:$0xf]
        %v737 = vld [vmem:[#allocation5 + $0x20] sm:$0xf]
        %v738 = vld [vmem:[#allocation5 + $0x24] sm:$0xf]
        %v739 = vld [vmem:[#allocation5 + $0x28] sm:$0xf]
        %v740 = vld [vmem:[#allocation5 + $0x2c] sm:$0xf]
        %v741 = vld [vmem:[#allocation5 + $0x30] sm:$0xf]
        %v742 = vld [vmem:[#allocation5 + $0x34] sm:$0xf]
        %v743 = vld [vmem:[#allocation5 + $0x38] sm:$0xf]
        %v744 = vld [vmem:[#allocation5 + $0x3c] sm:$0xf]
        %v745 = vld [vmem:[#allocation7] sm:$0x1]
        %v747 = vlaneseq
        %v748 = vshrl.u32 %v747, 7
        %v749 = vsub.s32 0, %v748
        %v750 = vrot.slane %v745, %v749
        %v768 = vunpack.c.l.b16 %v729
        %v769 = vunpack.c.l.b16 %v730
        %v770 = vunpack.c.l.b16 %v731
        %v771 = vunpack.c.l.b16 %v732
        %v772 = vunpack.c.l.b16 %v733
        %v773 = vunpack.c.l.b16 %v734
        %v774 = vunpack.c.l.b16 %v735
        %v775 = vunpack.c.l.b16 %v736
        %v776 = vunpack.c.l.b16 %v737
        %v777 = vunpack.c.l.b16 %v738
        %v778 = vunpack.c.l.b16 %v739
        %v779 = vunpack.c.l.b16 %v740
        %v780 = vunpack.c.l.b16 %v741
        %v781 = vunpack.c.l.b16 %v742
        %v782 = vunpack.c.l.b16 %v743
        %v783 = vunpack.c.l.b16 %v744
        %v784 = vpack.c.b16 %v769, %v768
        %v785 = vpack.c.b16 %v771, %v770
        %v786 = vpack.c.b16 %v773, %v772
        %v787 = vpack.c.b16 %v775, %v774
        %v788 = vpack.c.b16 %v777, %v776
        %v789 = vpack.c.b16 %v779, %v778
        %v790 = vpack.c.b16 %v781, %v780
        %v791 = vpack.c.b16 %v783, %v782
        %800 = vmatprep.subr.bf16.mxu0 0
        %801 = vmatpush1.bf16.msra.mxu0 %v784
        %802 = vmatprep.subr.bf16.mxu0 0
        %803 = vmatpush1.bf16.msra.mxu0 %v785
        %804 = vmatprep.subr.bf16.mxu0 0
        %805 = vmatpush1.bf16.msra.mxu0 %v786
        %806 = vmatprep.subr.bf16.mxu0 0
        %807 = vmatpush1.bf16.msra.mxu0 %v787
        %808 = vmatprep.subr.bf16.mxu0 0
        %809 = vmatpush1.bf16.msra.mxu0 %v788
        %810 = vmatprep.subr.bf16.mxu0 0
        %811 = vmatpush1.bf16.msra.mxu0 %v789
        %812 = vmatprep.subr.bf16.mxu0 0
        %813 = vmatpush1.bf16.msra.mxu0 %v790
        %814 = vmatprep.subr.bf16.mxu0 0
        %815 = vmatpush1.bf16.msra.mxu0 %v791
        %816 = vmatprep.subr.bf16.mxu0 0
        %817 = vmatpush1.bf16.msra.mxu0 0
        %818 = vmatprep.subr.bf16.mxu0 0
        %819 = vmatpush1.bf16.msra.mxu0 0
        %820 = vmatprep.subr.bf16.mxu0 0
        %821 = vmatpush1.bf16.msra.mxu0 0
        %822 = vmatprep.subr.bf16.mxu0 0
        %823 = vmatpush1.bf16.msra.mxu0 0
        %824 = vmatprep.subr.bf16.mxu0 0
        %825 = vmatpush1.bf16.msra.mxu0 0
        %826 = vmatprep.subr.bf16.mxu0 0
        %827 = vmatpush1.bf16.msra.mxu0 0
        %828 = vmatprep.subr.bf16.mxu0 0
        %829 = vmatpush1.bf16.msra.mxu0 0
        %830 = vmatprep.subr.bf16.mxu0 0
        %831 = vmatpush1.bf16.msra.mxu0 0
        %832 = vmatprep.mubr.bf16.mxu0 0
        %833 = vmatmul.mubr.bf16.gmra.mrb[0].mxu0 %v728
        %v834 = vpop.f32.mrb[0].mxu0
        %v835 = vadd.f32 %v750, %v834
        %v836 = vpop.f32.mrb[0].mxu0
        %v837 = vpop.f32.mrb[0].mxu0
        %v838 = vpop.f32.mrb[0].mxu0
        %839 = vdwg.mxu0
        %v840 = vmax.f32 %v835, 0.0
        %v841 = vpack.c.bf16 %v840, %v840
        %v842 = vld [vmem:[#allocation8] sm:$0xf]
        %v843 = vld [vmem:[#allocation8 + $0x4] sm:$0xf]
        %v844 = vld [vmem:[#allocation8 + $0x8] sm:$0xf]
        %v845 = vld [vmem:[#allocation8 + $0xc] sm:$0xf]
        %v846 = vld [vmem:[#allocation8 + $0x10] sm:$0xf]
        %v847 = vld [vmem:[#allocation8 + $0x14] sm:$0xf]
        %v848 = vld [vmem:[#allocation8 + $0x18] sm:$0xf]
        %v849 = vld [vmem:[#allocation8 + $0x1c] sm:$0xf]
        %v850 = vld [vmem:[#allocation8 + $0x20] sm:$0xf]
        %v851 = vld [vmem:[#allocation8 + $0x24] sm:$0xf]
        %v852 = vld [vmem:[#allocation8 + $0x28] sm:$0xf]
        %v853 = vld [vmem:[#allocation8 + $0x2c] sm:$0xf]
        %v854 = vld [vmem:[#allocation8 + $0x30] sm:$0xf]
        %v855 = vld [vmem:[#allocation8 + $0x34] sm:$0xf]
        %v856 = vld [vmem:[#allocation8 + $0x38] sm:$0xf]
        %v857 = vld [vmem:[#allocation8 + $0x3c] sm:$0xf]
        %v858 = vld [vmem:[#allocation10] sm:$0x1]
        %v860 = vlaneseq
        %v861 = vshrl.u32 %v860, 7
        %v862 = vsub.s32 0, %v861
        %v863 = vrot.slane %v858, %v862
        %v881 = vunpack.c.l.b16 %v842
        %v882 = vunpack.c.l.b16 %v843
        %v883 = vunpack.c.l.b16 %v844
        %v884 = vunpack.c.l.b16 %v845
        %v885 = vunpack.c.l.b16 %v846
        %v886 = vunpack.c.l.b16 %v847
        %v887 = vunpack.c.l.b16 %v848
        %v888 = vunpack.c.l.b16 %v849
        %v889 = vunpack.c.l.b16 %v850
        %v890 = vunpack.c.l.b16 %v851
        %v891 = vunpack.c.l.b16 %v852
        %v892 = vunpack.c.l.b16 %v853
        %v893 = vunpack.c.l.b16 %v854
        %v894 = vunpack.c.l.b16 %v855
        %v895 = vunpack.c.l.b16 %v856
        %v896 = vunpack.c.l.b16 %v857
        %v897 = vpack.c.b16 %v882, %v881
        %v898 = vpack.c.b16 %v884, %v883
        %v899 = vpack.c.b16 %v886, %v885
        %v900 = vpack.c.b16 %v888, %v887
        %v901 = vpack.c.b16 %v890, %v889
        %v902 = vpack.c.b16 %v892, %v891
        %v903 = vpack.c.b16 %v894, %v893
        %v904 = vpack.c.b16 %v896, %v895
        %913 = vmatprep.subr.bf16.mxu0 0
        %914 = vmatpush1.bf16.msra.mxu0 %v897
        %915 = vmatprep.subr.bf16.mxu0 0
        %916 = vmatpush1.bf16.msra.mxu0 %v898
        %917 = vmatprep.subr.bf16.mxu0 0
        %918 = vmatpush1.bf16.msra.mxu0 %v899
        %919 = vmatprep.subr.bf16.mxu0 0
        %920 = vmatpush1.bf16.msra.mxu0 %v900
        %921 = vmatprep.subr.bf16.mxu0 0
        %922 = vmatpush1.bf16.msra.mxu0 %v901
        %923 = vmatprep.subr.bf16.mxu0 0
        %924 = vmatpush1.bf16.msra.mxu0 %v902
        %925 = vmatprep.subr.bf16.mxu0 0
        %926 = vmatpush1.bf16.msra.mxu0 %v903
        %927 = vmatprep.subr.bf16.mxu0 0
        %928 = vmatpush1.bf16.msra.mxu0 %v904
        %929 = vmatprep.subr.bf16.mxu0 0
        %930 = vmatpush1.bf16.msra.mxu0 0
        %931 = vmatprep.subr.bf16.mxu0 0
        %932 = vmatpush1.bf16.msra.mxu0 0
        %933 = vmatprep.subr.bf16.mxu0 0
        %934 = vmatpush1.bf16.msra.mxu0 0
        %935 = vmatprep.subr.bf16.mxu0 0
        %936 = vmatpush1.bf16.msra.mxu0 0
        %937 = vmatprep.subr.bf16.mxu0 0
        %938 = vmatpush1.bf16.msra.mxu0 0
        %939 = vmatprep.subr.bf16.mxu0 0
        %940 = vmatpush1.bf16.msra.mxu0 0
        %941 = vmatprep.subr.bf16.mxu0 0
        %942 = vmatpush1.bf16.msra.mxu0 0
        %943 = vmatprep.subr.bf16.mxu0 0
        %944 = vmatpush1.bf16.msra.mxu0 0
        %945 = vmatprep.mubr.bf16.mxu0 0
        %946 = vmatmul.mubr.bf16.gmra.mrb[0].mxu0 %v841
        %v947 = vpop.f32.mrb[0].mxu0
        %v948 = vadd.f32 %v863, %v947
        %v949 = vpop.f32.mrb[0].mxu0
        %v950 = vpop.f32.mrb[0].mxu0
        %v951 = vpop.f32.mrb[0].mxu0
        %952 = vdwg.mxu0
        %v953 = vmax.f32 %v948, 0.0
        %v954 = vpack.c.bf16 %v953, %v953
        %v955 = vld [vmem:[#allocation11] sm:$0xff]
        %v956 = vld [vmem:[#allocation11 + $0x8] sm:$0xff]
        %v957 = vld [vmem:[#allocation11 + $0x10] sm:$0xff]
        %v958 = vld [vmem:[#allocation11 + $0x18] sm:$0xff]
        %v959 = vld [vmem:[#allocation11 + $0x20] sm:$0xff]
        %v960 = vld [vmem:[#allocation11 + $0x28] sm:$0xff]
        %v961 = vld [vmem:[#allocation11 + $0x30] sm:$0xff]
        %v962 = vld [vmem:[#allocation11 + $0x38] sm:$0xff]
        %v963 = vld [vmem:[#allocation11 + $0x40] sm:$0xff]
        %v964 = vld [vmem:[#allocation11 + $0x48] sm:$0xff]
        %v965 = vld [vmem:[#allocation11 + $0x50] sm:$0xff]
        %v966 = vld [vmem:[#allocation11 + $0x58] sm:$0xff]
        %v967 = vld [vmem:[#allocation11 + $0x60] sm:$0xff]
        %v968 = vld [vmem:[#allocation11 + $0x68] sm:$0xff]
        %v969 = vld [vmem:[#allocation11 + $0x70] sm:$0xff]
        %v970 = vld [vmem:[#allocation11 + $0x78] sm:$0xff]
        %v971 = vld [vmem:[#allocation13] sm:$0x3]
        %v973 = vlaneseq
        %v974 = vshrl.u32 %v973, 7
        %v975 = vsub.s32 0, %v974
        %v976 = vrot.slane %v971, %v975
        %v977 = vlaneseq
        %v978 = vshrl.u32 %v977, 7
        %v979 = vsub.s32 1, %v978
        %v980 = vrot.slane %v971, %v979
        %v999 = vunpack.c.l.b16 %v955
        %v1000 = vunpack.c.h.b16 %v955
        %v1001 = vunpack.c.l.b16 %v956
        %v1002 = vunpack.c.h.b16 %v956
        %v1003 = vunpack.c.l.b16 %v957
        %v1004 = vunpack.c.h.b16 %v957
        %v1005 = vunpack.c.l.b16 %v958
        %v1006 = vunpack.c.h.b16 %v958
        %v1007 = vunpack.c.l.b16 %v959
        %v1008 = vunpack.c.h.b16 %v959
        %v1009 = vunpack.c.l.b16 %v960
        %v1010 = vunpack.c.h.b16 %v960
        %v1011 = vunpack.c.l.b16 %v961
        %v1012 = vunpack.c.h.b16 %v961
        %v1013 = vunpack.c.l.b16 %v962
        %v1014 = vunpack.c.h.b16 %v962
        %v1015 = vunpack.c.l.b16 %v963
        %v1016 = vunpack.c.h.b16 %v963
        %v1017 = vunpack.c.l.b16 %v964
        %v1018 = vunpack.c.h.b16 %v964
        %v1019 = vunpack.c.l.b16 %v965
        %v1020 = vunpack.c.h.b16 %v965
        %v1021 = vunpack.c.l.b16 %v966
        %v1022 = vunpack.c.h.b16 %v966
        %v1023 = vunpack.c.l.b16 %v967
        %v1024 = vunpack.c.h.b16 %v967
        %v1025 = vunpack.c.l.b16 %v968
        %v1026 = vunpack.c.h.b16 %v968
        %v1027 = vunpack.c.l.b16 %v969
        %v1028 = vunpack.c.h.b16 %v969
        %v1029 = vunpack.c.l.b16 %v970
        %v1030 = vunpack.c.h.b16 %v970
        %v1031 = vpack.c.b16 %v1001, %v999
        %v1032 = vpack.c.b16 %v1002, %v1000
        %v1033 = vpack.c.b16 %v1005, %v1003
        %v1034 = vpack.c.b16 %v1006, %v1004
        %v1035 = vpack.c.b16 %v1009, %v1007
        %v1036 = vpack.c.b16 %v1010, %v1008
        %v1037 = vpack.c.b16 %v1013, %v1011
        %v1038 = vpack.c.b16 %v1014, %v1012
        %v1039 = vpack.c.b16 %v1017, %v1015
        %v1040 = vpack.c.b16 %v1018, %v1016
        %v1041 = vpack.c.b16 %v1021, %v1019
        %v1042 = vpack.c.b16 %v1022, %v1020
        %v1043 = vpack.c.b16 %v1025, %v1023
        %v1044 = vpack.c.b16 %v1026, %v1024
        %v1045 = vpack.c.b16 %v1029, %v1027
        %v1046 = vpack.c.b16 %v1030, %v1028
        %1063 = vmatprep.subr.bf16.mxu0 %v1032
        %1064 = vmatpush1.bf16.msra.mxu0 %v1031
        %1065 = vmatprep.subr.bf16.mxu0 %v1034
        %1066 = vmatpush1.bf16.msra.mxu0 %v1033
        %1067 = vmatprep.subr.bf16.mxu0 %v1036
        %1068 = vmatpush1.bf16.msra.mxu0 %v1035
        %1069 = vmatprep.subr.bf16.mxu0 %v1038
        %1070 = vmatpush1.bf16.msra.mxu0 %v1037
        %1071 = vmatprep.subr.bf16.mxu0 %v1040
        %1072 = vmatpush1.bf16.msra.mxu0 %v1039
        %1073 = vmatprep.subr.bf16.mxu0 %v1042
        %1074 = vmatpush1.bf16.msra.mxu0 %v1041
        %1075 = vmatprep.subr.bf16.mxu0 %v1044
        %1076 = vmatpush1.bf16.msra.mxu0 %v1043
        %1077 = vmatprep.subr.bf16.mxu0 %v1046
        %1078 = vmatpush1.bf16.msra.mxu0 %v1045
        %1079 = vmatprep.subr.bf16.mxu0 0
        %1080 = vmatpush1.bf16.msra.mxu0 0
        %1081 = vmatprep.subr.bf16.mxu0 0
        %1082 = vmatpush1.bf16.msra.mxu0 0
        %1083 = vmatprep.subr.bf16.mxu0 0
        %1084 = vmatpush1.bf16.msra.mxu0 0
        %1085 = vmatprep.subr.bf16.mxu0 0
        %1086 = vmatpush1.bf16.msra.mxu0 0
        %1087 = vmatprep.subr.bf16.mxu0 0
        %1088 = vmatpush1.bf16.msra.mxu0 0
        %1089 = vmatprep.subr.bf16.mxu0 0
        %1090 = vmatpush1.bf16.msra.mxu0 0
        %1091 = vmatprep.subr.bf16.mxu0 0
        %1092 = vmatpush1.bf16.msra.mxu0 0
        %1093 = vmatprep.subr.bf16.mxu0 0
        %1094 = vmatpush1.bf16.msra.mxu0 0
        %1095 = vmatprep.mubr.bf16.mxu0 0
        %1096 = vmatmul.mubr.bf16.gmra.mrb[0].mxu0 %v954
        %v1097 = vpop.f32.mrb[0].mxu0
        %v1098 = vadd.f32 %v976, %v1097
        %v1099 = vpop.f32.mrb[0].mxu0
        %v1100 = vadd.f32 %v980, %v1099
        %v1101 = vpop.f32.mrb[0].mxu0
        %v1102 = vpop.f32.mrb[0].mxu0
        %1103 = vdwg.mxu0
        %v1104 = vmax.f32 %v1098, 0.0
        %v1105 = vmax.f32 %v1100, 0.0
        %v1106 = vpack.c.bf16 %v1104, %v1104
        %v1107 = vpack.c.bf16 %v1105, %v1105
        %v1108 = vld [vmem:[#allocation14] sm:$0xff]
        %v1109 = vld [vmem:[#allocation14 + $0x8] sm:$0xff]
        %v1110 = vld [vmem:[#allocation14 + $0x10] sm:$0xff]
        %v1111 = vld [vmem:[#allocation14 + $0x18] sm:$0xff]
        %v1112 = vld [vmem:[#allocation14 + $0x20] sm:$0xff]
        %v1113 = vld [vmem:[#allocation14 + $0x28] sm:$0xff]
        %v1114 = vld [vmem:[#allocation14 + $0x30] sm:$0xff]
        %v1115 = vld [vmem:[#allocation14 + $0x38] sm:$0xff]
        %v1116 = vld [vmem:[#allocation14 + $0x40] sm:$0xff]
        %v1117 = vld [vmem:[#allocation14 + $0x48] sm:$0xff]
        %v1118 = vld [vmem:[#allocation14 + $0x50] sm:$0xff]
        %v1119 = vld [vmem:[#allocation14 + $0x58] sm:$0xff]
        %v1120 = vld [vmem:[#allocation14 + $0x60] sm:$0xff]
        %v1121 = vld [vmem:[#allocation14 + $0x68] sm:$0xff]
        %v1122 = vld [vmem:[#allocation14 + $0x70] sm:$0xff]
        %v1123 = vld [vmem:[#allocation14 + $0x78] sm:$0xff]
        %v1124 = vld [vmem:[#allocation14 + $0x80] sm:$0xff]
        %v1125 = vld [vmem:[#allocation14 + $0x88] sm:$0xff]
        %v1126 = vld [vmem:[#allocation14 + $0x90] sm:$0xff]
        %v1127 = vld [vmem:[#allocation14 + $0x98] sm:$0xff]
        %v1128 = vld [vmem:[#allocation14 + $0xa0] sm:$0xff]
        %v1129 = vld [vmem:[#allocation14 + $0xa8] sm:$0xff]
        %v1130 = vld [vmem:[#allocation14 + $0xb0] sm:$0xff]
        %v1131 = vld [vmem:[#allocation14 + $0xb8] sm:$0xff]
        %v1132 = vld [vmem:[#allocation14 + $0xc0] sm:$0xff]
        %v1133 = vld [vmem:[#allocation14 + $0xc8] sm:$0xff]
        %v1134 = vld [vmem:[#allocation14 + $0xd0] sm:$0xff]
        %v1135 = vld [vmem:[#allocation14 + $0xd8] sm:$0xff]
        %v1136 = vld [vmem:[#allocation14 + $0xe0] sm:$0xff]
        %v1137 = vld [vmem:[#allocation14 + $0xe8] sm:$0xff]
        %v1138 = vld [vmem:[#allocation14 + $0xf0] sm:$0xff]
        %v1139 = vld [vmem:[#allocation14 + $0xf8] sm:$0xff]
        %v1140 = vld [vmem:[#allocation16] sm:$0x3]
        %v1142 = vlaneseq
        %v1143 = vshrl.u32 %v1142, 7
        %v1144 = vsub.s32 0, %v1143
        %v1145 = vrot.slane %v1140, %v1144
        %v1146 = vlaneseq
        %v1147 = vshrl.u32 %v1146, 7
        %v1148 = vsub.s32 1, %v1147
        %v1149 = vrot.slane %v1140, %v1148
        %v1184 = vunpack.c.l.b16 %v1108
        %v1185 = vunpack.c.h.b16 %v1108
        %v1186 = vunpack.c.l.b16 %v1109
        %v1187 = vunpack.c.h.b16 %v1109
        %v1188 = vunpack.c.l.b16 %v1110
        %v1189 = vunpack.c.h.b16 %v1110
        %v1190 = vunpack.c.l.b16 %v1111
        %v1191 = vunpack.c.h.b16 %v1111
        %v1192 = vunpack.c.l.b16 %v1112
        %v1193 = vunpack.c.h.b16 %v1112
        %v1194 = vunpack.c.l.b16 %v1113
        %v1195 = vunpack.c.h.b16 %v1113
        %v1196 = vunpack.c.l.b16 %v1114
        %v1197 = vunpack.c.h.b16 %v1114
        %v1198 = vunpack.c.l.b16 %v1115
        %v1199 = vunpack.c.h.b16 %v1115
        %v1200 = vunpack.c.l.b16 %v1116
        %v1201 = vunpack.c.h.b16 %v1116
        %v1202 = vunpack.c.l.b16 %v1117
        %v1203 = vunpack.c.h.b16 %v1117
        %v1204 = vunpack.c.l.b16 %v1118
        %v1205 = vunpack.c.h.b16 %v1118
        %v1206 = vunpack.c.l.b16 %v1119
        %v1207 = vunpack.c.h.b16 %v1119
        %v1208 = vunpack.c.l.b16 %v1120
        %v1209 = vunpack.c.h.b16 %v1120
        %v1210 = vunpack.c.l.b16 %v1121
        %v1211 = vunpack.c.h.b16 %v1121
        %v1212 = vunpack.c.l.b16 %v1122
        %v1213 = vunpack.c.h.b16 %v1122
        %v1214 = vunpack.c.l.b16 %v1123
        %v1215 = vunpack.c.h.b16 %v1123
        %v1216 = vunpack.c.l.b16 %v1124
        %v1217 = vunpack.c.h.b16 %v1124
        %v1218 = vunpack.c.l.b16 %v1125
        %v1219 = vunpack.c.h.b16 %v1125
        %v1220 = vunpack.c.l.b16 %v1126
        %v1221 = vunpack.c.h.b16 %v1126
        %v1222 = vunpack.c.l.b16 %v1127
        %v1223 = vunpack.c.h.b16 %v1127
        %v1224 = vunpack.c.l.b16 %v1128
        %v1225 = vunpack.c.h.b16 %v1128
        %v1226 = vunpack.c.l.b16 %v1129
        %v1227 = vunpack.c.h.b16 %v1129
        %v1228 = vunpack.c.l.b16 %v1130
        %v1229 = vunpack.c.h.b16 %v1130
        %v1230 = vunpack.c.l.b16 %v1131
        %v1231 = vunpack.c.h.b16 %v1131
        %v1232 = vunpack.c.l.b16 %v1132
        %v1233 = vunpack.c.h.b16 %v1132
        %v1234 = vunpack.c.l.b16 %v1133
        %v1235 = vunpack.c.h.b16 %v1133
        %v1236 = vunpack.c.l.b16 %v1134
        %v1237 = vunpack.c.h.b16 %v1134
        %v1238 = vunpack.c.l.b16 %v1135
        %v1239 = vunpack.c.h.b16 %v1135
        %v1240 = vunpack.c.l.b16 %v1136
        %v1241 = vunpack.c.h.b16 %v1136
        %v1242 = vunpack.c.l.b16 %v1137
        %v1243 = vunpack.c.h.b16 %v1137
        %v1244 = vunpack.c.l.b16 %v1138
        %v1245 = vunpack.c.h.b16 %v1138
        %v1246 = vunpack.c.l.b16 %v1139
        %v1247 = vunpack.c.h.b16 %v1139
        %v1248 = vpack.c.b16 %v1186, %v1184
        %v1249 = vpack.c.b16 %v1187, %v1185
        %v1250 = vpack.c.b16 %v1190, %v1188
        %v1251 = vpack.c.b16 %v1191, %v1189
        %v1252 = vpack.c.b16 %v1194, %v1192
        %v1253 = vpack.c.b16 %v1195, %v1193
        %v1254 = vpack.c.b16 %v1198, %v1196
        %v1255 = vpack.c.b16 %v1199, %v1197
        %v1256 = vpack.c.b16 %v1202, %v1200
        %v1257 = vpack.c.b16 %v1203, %v1201
        %v1258 = vpack.c.b16 %v1206, %v1204
        %v1259 = vpack.c.b16 %v1207, %v1205
        %v1260 = vpack.c.b16 %v1210, %v1208
        %v1261 = vpack.c.b16 %v1211, %v1209
        %v1262 = vpack.c.b16 %v1214, %v1212
        %v1263 = vpack.c.b16 %v1215, %v1213
        %v1264 = vpack.c.b16 %v1218, %v1216
        %v1265 = vpack.c.b16 %v1219, %v1217
        %v1266 = vpack.c.b16 %v1222, %v1220
        %v1267 = vpack.c.b16 %v1223, %v1221
        %v1268 = vpack.c.b16 %v1226, %v1224
        %v1269 = vpack.c.b16 %v1227, %v1225
        %v1270 = vpack.c.b16 %v1230, %v1228
        %v1271 = vpack.c.b16 %v1231, %v1229
        %v1272 = vpack.c.b16 %v1234, %v1232
        %v1273 = vpack.c.b16 %v1235, %v1233
        %v1274 = vpack.c.b16 %v1238, %v1236
        %v1275 = vpack.c.b16 %v1239, %v1237
        %v1276 = vpack.c.b16 %v1242, %v1240
        %v1277 = vpack.c.b16 %v1243, %v1241
        %v1278 = vpack.c.b16 %v1246, %v1244
        %v1279 = vpack.c.b16 %v1247, %v1245
        %1312 = vmatprep.subr.bf16.mxu0 %v1249
        %1313 = vmatpush1.bf16.msra.mxu0 %v1248
        %1314 = vmatprep.subr.bf16.mxu0 %v1251
        %1315 = vmatpush1.bf16.msra.mxu0 %v1250
        %1316 = vmatprep.subr.bf16.mxu0 %v1253
        %1317 = vmatpush1.bf16.msra.mxu0 %v1252
        %1318 = vmatprep.subr.bf16.mxu0 %v1255
        %1319 = vmatpush1.bf16.msra.mxu0 %v1254
        %1320 = vmatprep.subr.bf16.mxu0 %v1257
        %1321 = vmatpush1.bf16.msra.mxu0 %v1256
        %1322 = vmatprep.subr.bf16.mxu0 %v1259
        %1323 = vmatpush1.bf16.msra.mxu0 %v1258
        %1324 = vmatprep.subr.bf16.mxu0 %v1261
        %1325 = vmatpush1.bf16.msra.mxu0 %v1260
        %1326 = vmatprep.subr.bf16.mxu0 %v1263
        %1327 = vmatpush1.bf16.msra.mxu0 %v1262
        %1328 = vmatprep.subr.bf16.mxu0 %v1265
        %1329 = vmatpush1.bf16.msra.mxu0 %v1264
        %1330 = vmatprep.subr.bf16.mxu0 %v1267
        %1331 = vmatpush1.bf16.msra.mxu0 %v1266
        %1332 = vmatprep.subr.bf16.mxu0 %v1269
        %1333 = vmatpush1.bf16.msra.mxu0 %v1268
        %1334 = vmatprep.subr.bf16.mxu0 %v1271
        %1335 = vmatpush1.bf16.msra.mxu0 %v1270
        %1336 = vmatprep.subr.bf16.mxu0 %v1273
        %1337 = vmatpush1.bf16.msra.mxu0 %v1272
        %1338 = vmatprep.subr.bf16.mxu0 %v1275
        %1339 = vmatpush1.bf16.msra.mxu0 %v1274
        %1340 = vmatprep.subr.bf16.mxu0 %v1277
        %1341 = vmatpush1.bf16.msra.mxu0 %v1276
        %1342 = vmatprep.subr.bf16.mxu0 %v1279
        %1343 = vmatpush1.bf16.msra.mxu0 %v1278
        %1344 = vmatprep.mubr.bf16.mxu0 %v1107
        %1345 = vmatmul.mubr.bf16.gmra.mrb[0].mxu0 %v1106
        %v1346 = vpop.f32.mrb[0].mxu0
        %v1347 = vadd.f32 %v1145, %v1346
        %v1348 = vpop.f32.mrb[0].mxu0
        %v1349 = vadd.f32 %v1149, %v1348
        %v1350 = vpop.f32.mrb[0].mxu0
        %v1351 = vpop.f32.mrb[0].mxu0
        %1352 = vdwg.mxu0
        %v1353 = vmax.f32 %v1347, 0.0
        %v1354 = vmax.f32 %v1349, 0.0
        %v1355 = vpack.c.bf16 %v1353, %v1353
        %v1356 = vpack.c.bf16 %v1354, %v1354
        %v1357 = vld [vmem:[#allocation17] sm:$0xff]
        %v1358 = vld [vmem:[#allocation17 + $0x8] sm:$0xff]
        %v1359 = vld [vmem:[#allocation17 + $0x10] sm:$0xff]
        %v1360 = vld [vmem:[#allocation17 + $0x18] sm:$0xff]
        %v1361 = vld [vmem:[#allocation17 + $0x20] sm:$0xff]
        %v1362 = vld [vmem:[#allocation17 + $0x28] sm:$0xff]
        %v1363 = vld [vmem:[#allocation17 + $0x30] sm:$0xff]
        %v1364 = vld [vmem:[#allocation17 + $0x38] sm:$0xff]
        %v1365 = vld [vmem:[#allocation17 + $0x40] sm:$0xff]
        %v1366 = vld [vmem:[#allocation17 + $0x48] sm:$0xff]
        %v1367 = vld [vmem:[#allocation17 + $0x50] sm:$0xff]
        %v1368 = vld [vmem:[#allocation17 + $0x58] sm:$0xff]
        %v1369 = vld [vmem:[#allocation17 + $0x60] sm:$0xff]
        %v1370 = vld [vmem:[#allocation17 + $0x68] sm:$0xff]
        %v1371 = vld [vmem:[#allocation17 + $0x70] sm:$0xff]
        %v1372 = vld [vmem:[#allocation17 + $0x78] sm:$0xff]
        %v1373 = vld [vmem:[#allocation17 + $0x80] sm:$0xff]
        %v1374 = vld [vmem:[#allocation17 + $0x88] sm:$0xff]
        %v1375 = vld [vmem:[#allocation17 + $0x90] sm:$0xff]
        %v1376 = vld [vmem:[#allocation17 + $0x98] sm:$0xff]
        %v1377 = vld [vmem:[#allocation17 + $0xa0] sm:$0xff]
        %v1378 = vld [vmem:[#allocation17 + $0xa8] sm:$0xff]
        %v1379 = vld [vmem:[#allocation17 + $0xb0] sm:$0xff]
        %v1380 = vld [vmem:[#allocation17 + $0xb8] sm:$0xff]
        %v1381 = vld [vmem:[#allocation17 + $0xc0] sm:$0xff]
        %v1382 = vld [vmem:[#allocation17 + $0xc8] sm:$0xff]
        %v1383 = vld [vmem:[#allocation17 + $0xd0] sm:$0xff]
        %v1384 = vld [vmem:[#allocation17 + $0xd8] sm:$0xff]
        %v1385 = vld [vmem:[#allocation17 + $0xe0] sm:$0xff]
        %v1386 = vld [vmem:[#allocation17 + $0xe8] sm:$0xff]
        %v1387 = vld [vmem:[#allocation17 + $0xf0] sm:$0xff]
        %v1388 = vld [vmem:[#allocation17 + $0xf8] sm:$0xff]
        %v1389 = vld [vmem:[#allocation17 + $0x100] sm:$0xff]
        %v1390 = vld [vmem:[#allocation17 + $0x108] sm:$0xff]
        %v1391 = vld [vmem:[#allocation17 + $0x110] sm:$0xff]
        %v1392 = vld [vmem:[#allocation17 + $0x118] sm:$0xff]
        %v1393 = vld [vmem:[#allocation17 + $0x120] sm:$0xff]
        %v1394 = vld [vmem:[#allocation17 + $0x128] sm:$0xff]
        %v1395 = vld [vmem:[#allocation17 + $0x130] sm:$0xff]
        %v1396 = vld [vmem:[#allocation17 + $0x138] sm:$0xff]
        %v1397 = vld [vmem:[#allocation17 + $0x140] sm:$0xff]
        %v1398 = vld [vmem:[#allocation17 + $0x148] sm:$0xff]
        %v1399 = vld [vmem:[#allocation17 + $0x150] sm:$0xff]
        %v1400 = vld [vmem:[#allocation17 + $0x158] sm:$0xff]
        %v1401 = vld [vmem:[#allocation17 + $0x160] sm:$0xff]
        %v1402 = vld [vmem:[#allocation17 + $0x168] sm:$0xff]
        %v1403 = vld [vmem:[#allocation17 + $0x170] sm:$0xff]
        %v1404 = vld [vmem:[#allocation17 + $0x178] sm:$0xff]
        %v1405 = vld [vmem:[#allocation17 + $0x180] sm:$0xff]
        %v1406 = vld [vmem:[#allocation17 + $0x188] sm:$0xff]
        %v1407 = vld [vmem:[#allocation17 + $0x190] sm:$0xff]
        %v1408 = vld [vmem:[#allocation17 + $0x198] sm:$0xff]
        %v1409 = vld [vmem:[#allocation17 + $0x1a0] sm:$0xff]
        %v1410 = vld [vmem:[#allocation17 + $0x1a8] sm:$0xff]
        %v1411 = vld [vmem:[#allocation17 + $0x1b0] sm:$0xff]
        %v1412 = vld [vmem:[#allocation17 + $0x1b8] sm:$0xff]
        %v1413 = vld [vmem:[#allocation17 + $0x1c0] sm:$0xff]
        %v1414 = vld [vmem:[#allocation17 + $0x1c8] sm:$0xff]
        %v1415 = vld [vmem:[#allocation17 + $0x1d0] sm:$0xff]
        %v1416 = vld [vmem:[#allocation17 + $0x1d8] sm:$0xff]
        %v1417 = vld [vmem:[#allocation17 + $0x1e0] sm:$0xff]
        %v1418 = vld [vmem:[#allocation17 + $0x1e8] sm:$0xff]
        %v1419 = vld [vmem:[#allocation17 + $0x1f0] sm:$0xff]
        %v1420 = vld [vmem:[#allocation17 + $0x1f8] sm:$0xff]
        %v1421 = vld [vmem:[#allocation19] sm:$0xf]
        %v1423 = vlaneseq
        %v1424 = vshrl.u32 %v1423, 7
        %v1425 = vsub.s32 0, %v1424
        %v1426 = vrot.slane %v1421, %v1425
        %v1427 = vlaneseq
        %v1428 = vshrl.u32 %v1427, 7
        %v1429 = vsub.s32 1, %v1428
        %v1430 = vrot.slane %v1421, %v1429
        %v1431 = vlaneseq
        %v1432 = vshrl.u32 %v1431, 7
        %v1433 = vsub.s32 2, %v1432
        %v1434 = vrot.slane %v1421, %v1433
        %v1435 = vlaneseq
        %v1436 = vshrl.u32 %v1435, 7
        %v1437 = vsub.s32 3, %v1436
        %v1438 = vrot.slane %v1421, %v1437
        %v1507 = vunpack.c.l.b16 %v1357
        %v1508 = vunpack.c.h.b16 %v1357
        %v1509 = vunpack.c.l.b16 %v1358
        %v1510 = vunpack.c.h.b16 %v1358
        %v1511 = vunpack.c.l.b16 %v1359
        %v1512 = vunpack.c.h.b16 %v1359
        %v1513 = vunpack.c.l.b16 %v1360
        %v1514 = vunpack.c.h.b16 %v1360
        %v1515 = vunpack.c.l.b16 %v1361
        %v1516 = vunpack.c.h.b16 %v1361
        %v1517 = vunpack.c.l.b16 %v1362
        %v1518 = vunpack.c.h.b16 %v1362
        %v1519 = vunpack.c.l.b16 %v1363
        %v1520 = vunpack.c.h.b16 %v1363
        %v1521 = vunpack.c.l.b16 %v1364
        %v1522 = vunpack.c.h.b16 %v1364
        %v1523 = vunpack.c.l.b16 %v1365
        %v1524 = vunpack.c.h.b16 %v1365
        %v1525 = vunpack.c.l.b16 %v1366
        %v1526 = vunpack.c.h.b16 %v1366
        %v1527 = vunpack.c.l.b16 %v1367
        %v1528 = vunpack.c.h.b16 %v1367
        %v1529 = vunpack.c.l.b16 %v1368
        %v1530 = vunpack.c.h.b16 %v1368
        %v1531 = vunpack.c.l.b16 %v1369
        %v1532 = vunpack.c.h.b16 %v1369
        %v1533 = vunpack.c.l.b16 %v1370
        %v1534 = vunpack.c.h.b16 %v1370
        %v1535 = vunpack.c.l.b16 %v1371
        %v1536 = vunpack.c.h.b16 %v1371
        %v1537 = vunpack.c.l.b16 %v1372
        %v1538 = vunpack.c.h.b16 %v1372
        %v1539 = vunpack.c.l.b16 %v1373
        %v1540 = vunpack.c.h.b16 %v1373
        %v1541 = vunpack.c.l.b16 %v1374
        %v1542 = vunpack.c.h.b16 %v1374
        %v1543 = vunpack.c.l.b16 %v1375
        %v1544 = vunpack.c.h.b16 %v1375
        %v1545 = vunpack.c.l.b16 %v1376
        %v1546 = vunpack.c.h.b16 %v1376
        %v1547 = vunpack.c.l.b16 %v1377
        %v1548 = vunpack.c.h.b16 %v1377
        %v1549 = vunpack.c.l.b16 %v1378
        %v1550 = vunpack.c.h.b16 %v1378
        %v1551 = vunpack.c.l.b16 %v1379
        %v1552 = vunpack.c.h.b16 %v1379
        %v1553 = vunpack.c.l.b16 %v1380
        %v1554 = vunpack.c.h.b16 %v1380
        %v1555 = vunpack.c.l.b16 %v1381
        %v1556 = vunpack.c.h.b16 %v1381
        %v1557 = vunpack.c.l.b16 %v1382
        %v1558 = vunpack.c.h.b16 %v1382
        %v1559 = vunpack.c.l.b16 %v1383
        %v1560 = vunpack.c.h.b16 %v1383
        %v1561 = vunpack.c.l.b16 %v1384
        %v1562 = vunpack.c.h.b16 %v1384
        %v1563 = vunpack.c.l.b16 %v1385
        %v1564 = vunpack.c.h.b16 %v1385
        %v1565 = vunpack.c.l.b16 %v1386
        %v1566 = vunpack.c.h.b16 %v1386
        %v1567 = vunpack.c.l.b16 %v1387
        %v1568 = vunpack.c.h.b16 %v1387
        %v1569 = vunpack.c.l.b16 %v1388
        %v1570 = vunpack.c.h.b16 %v1388
        %v1571 = vunpack.c.l.b16 %v1389
        %v1572 = vunpack.c.h.b16 %v1389
        %v1573 = vunpack.c.l.b16 %v1390
        %v1574 = vunpack.c.h.b16 %v1390
        %v1575 = vunpack.c.l.b16 %v1391
        %v1576 = vunpack.c.h.b16 %v1391
        %v1577 = vunpack.c.l.b16 %v1392
        %v1578 = vunpack.c.h.b16 %v1392
        %v1579 = vunpack.c.l.b16 %v1393
        %v1580 = vunpack.c.h.b16 %v1393
        %v1581 = vunpack.c.l.b16 %v1394
        %v1582 = vunpack.c.h.b16 %v1394
        %v1583 = vunpack.c.l.b16 %v1395
        %v1584 = vunpack.c.h.b16 %v1395
        %v1585 = vunpack.c.l.b16 %v1396
        %v1586 = vunpack.c.h.b16 %v1396
        %v1587 = vunpack.c.l.b16 %v1397
        %v1588 = vunpack.c.h.b16 %v1397
        %v1589 = vunpack.c.l.b16 %v1398
        %v1590 = vunpack.c.h.b16 %v1398
        %v1591 = vunpack.c.l.b16 %v1399
        %v1592 = vunpack.c.h.b16 %v1399
        %v1593 = vunpack.c.l.b16 %v1400
        %v1594 = vunpack.c.h.b16 %v1400
        %v1595 = vunpack.c.l.b16 %v1401
        %v1596 = vunpack.c.h.b16 %v1401
        %v1597 = vunpack.c.l.b16 %v1402
        %v1598 = vunpack.c.h.b16 %v1402
        %v1599 = vunpack.c.l.b16 %v1403
        %v1600 = vunpack.c.h.b16 %v1403
        %v1601 = vunpack.c.l.b16 %v1404
        %v1602 = vunpack.c.h.b16 %v1404
        %v1603 = vunpack.c.l.b16 %v1405
        %v1604 = vunpack.c.h.b16 %v1405
        %v1605 = vunpack.c.l.b16 %v1406
        %v1606 = vunpack.c.h.b16 %v1406
        %v1607 = vunpack.c.l.b16 %v1407
        %v1608 = vunpack.c.h.b16 %v1407
        %v1609 = vunpack.c.l.b16 %v1408
        %v1610 = vunpack.c.h.b16 %v1408
        %v1611 = vunpack.c.l.b16 %v1409
        %v1612 = vunpack.c.h.b16 %v1409
        %v1613 = vunpack.c.l.b16 %v1410
        %v1614 = vunpack.c.h.b16 %v1410
        %v1615 = vunpack.c.l.b16 %v1411
        %v1616 = vunpack.c.h.b16 %v1411
        %v1617 = vunpack.c.l.b16 %v1412
        %v1618 = vunpack.c.h.b16 %v1412
        %v1619 = vunpack.c.l.b16 %v1413
        %v1620 = vunpack.c.h.b16 %v1413
        %v1621 = vunpack.c.l.b16 %v1414
        %v1622 = vunpack.c.h.b16 %v1414
        %v1623 = vunpack.c.l.b16 %v1415
        %v1624 = vunpack.c.h.b16 %v1415
        %v1625 = vunpack.c.l.b16 %v1416
        %v1626 = vunpack.c.h.b16 %v1416
        %v1627 = vunpack.c.l.b16 %v1417
        %v1628 = vunpack.c.h.b16 %v1417
        %v1629 = vunpack.c.l.b16 %v1418
        %v1630 = vunpack.c.h.b16 %v1418
        %v1631 = vunpack.c.l.b16 %v1419
        %v1632 = vunpack.c.h.b16 %v1419
        %v1633 = vunpack.c.l.b16 %v1420
        %v1634 = vunpack.c.h.b16 %v1420
        %v1635 = vpack.c.b16 %v1511, %v1507
        %v1636 = vpack.c.b16 %v1512, %v1508
        %v1637 = vpack.c.b16 %v1513, %v1509
        %v1638 = vpack.c.b16 %v1514, %v1510
        %v1639 = vpack.c.b16 %v1519, %v1515
        %v1640 = vpack.c.b16 %v1520, %v1516
        %v1641 = vpack.c.b16 %v1521, %v1517
        %v1642 = vpack.c.b16 %v1522, %v1518
        %v1643 = vpack.c.b16 %v1527, %v1523
        %v1644 = vpack.c.b16 %v1528, %v1524
        %v1645 = vpack.c.b16 %v1529, %v1525
        %v1646 = vpack.c.b16 %v1530, %v1526
        %v1647 = vpack.c.b16 %v1535, %v1531
        %v1648 = vpack.c.b16 %v1536, %v1532
        %v1649 = vpack.c.b16 %v1537, %v1533
        %v1650 = vpack.c.b16 %v1538, %v1534
        %v1651 = vpack.c.b16 %v1543, %v1539
        %v1652 = vpack.c.b16 %v1544, %v1540
        %v1653 = vpack.c.b16 %v1545, %v1541
        %v1654 = vpack.c.b16 %v1546, %v1542
        %v1655 = vpack.c.b16 %v1551, %v1547
        %v1656 = vpack.c.b16 %v1552, %v1548
        %v1657 = vpack.c.b16 %v1553, %v1549
        %v1658 = vpack.c.b16 %v1554, %v1550
        %v1659 = vpack.c.b16 %v1559, %v1555
        %v1660 = vpack.c.b16 %v1560, %v1556
        %v1661 = vpack.c.b16 %v1561, %v1557
        %v1662 = vpack.c.b16 %v1562, %v1558
        %v1663 = vpack.c.b16 %v1567, %v1563
        %v1664 = vpack.c.b16 %v1568, %v1564
        %v1665 = vpack.c.b16 %v1569, %v1565
        %v1666 = vpack.c.b16 %v1570, %v1566
        %v1667 = vpack.c.b16 %v1575, %v1571
        %v1668 = vpack.c.b16 %v1576, %v1572
        %v1669 = vpack.c.b16 %v1577, %v1573
        %v1670 = vpack.c.b16 %v1578, %v1574
        %v1671 = vpack.c.b16 %v1583, %v1579
        %v1672 = vpack.c.b16 %v1584, %v1580
        %v1673 = vpack.c.b16 %v1585, %v1581
        %v1674 = vpack.c.b16 %v1586, %v1582
        %v1675 = vpack.c.b16 %v1591, %v1587
        %v1676 = vpack.c.b16 %v1592, %v1588
        %v1677 = vpack.c.b16 %v1593, %v1589
        %v1678 = vpack.c.b16 %v1594, %v1590
        %v1679 = vpack.c.b16 %v1599, %v1595
        %v1680 = vpack.c.b16 %v1600, %v1596
        %v1681 = vpack.c.b16 %v1601, %v1597
        %v1682 = vpack.c.b16 %v1602, %v1598
        %v1683 = vpack.c.b16 %v1607, %v1603
        %v1684 = vpack.c.b16 %v1608, %v1604
        %v1685 = vpack.c.b16 %v1609, %v1605
        %v1686 = vpack.c.b16 %v1610, %v1606
        %v1687 = vpack.c.b16 %v1615, %v1611
        %v1688 = vpack.c.b16 %v1616, %v1612
        %v1689 = vpack.c.b16 %v1617, %v1613
        %v1690 = vpack.c.b16 %v1618, %v1614
        %v1691 = vpack.c.b16 %v1623, %v1619
        %v1692 = vpack.c.b16 %v1624, %v1620
        %v1693 = vpack.c.b16 %v1625, %v1621
        %v1694 = vpack.c.b16 %v1626, %v1622
        %v1695 = vpack.c.b16 %v1631, %v1627
        %v1696 = vpack.c.b16 %v1632, %v1628
        %v1697 = vpack.c.b16 %v1633, %v1629
        %v1698 = vpack.c.b16 %v1634, %v1630
        %1763 = vmatprep.subr.bf16.mxu0 %v1636
        %1764 = vmatpush1.bf16.msra.mxu0 %v1635
        %1765 = vmatprep.subr.bf16.mxu0 %v1640
        %1766 = vmatpush1.bf16.msra.mxu0 %v1639
        %1767 = vmatprep.subr.bf16.mxu0 %v1644
        %1768 = vmatpush1.bf16.msra.mxu0 %v1643
        %1769 = vmatprep.subr.bf16.mxu0 %v1648
        %1770 = vmatpush1.bf16.msra.mxu0 %v1647
        %1771 = vmatprep.subr.bf16.mxu0 %v1652
        %1772 = vmatpush1.bf16.msra.mxu0 %v1651
        %1773 = vmatprep.subr.bf16.mxu0 %v1656
        %1774 = vmatpush1.bf16.msra.mxu0 %v1655
        %1775 = vmatprep.subr.bf16.mxu0 %v1660
        %1776 = vmatpush1.bf16.msra.mxu0 %v1659
        %1777 = vmatprep.subr.bf16.mxu0 %v1664
        %1778 = vmatpush1.bf16.msra.mxu0 %v1663
        %1779 = vmatprep.subr.bf16.mxu0 %v1668
        %1780 = vmatpush1.bf16.msra.mxu0 %v1667
        %1781 = vmatprep.subr.bf16.mxu0 %v1672
        %1782 = vmatpush1.bf16.msra.mxu0 %v1671
        %1783 = vmatprep.subr.bf16.mxu0 %v1676
        %1784 = vmatpush1.bf16.msra.mxu0 %v1675
        %1785 = vmatprep.subr.bf16.mxu0 %v1680
        %1786 = vmatpush1.bf16.msra.mxu0 %v1679
        %1787 = vmatprep.subr.bf16.mxu0 %v1684
        %1788 = vmatpush1.bf16.msra.mxu0 %v1683
        %1789 = vmatprep.subr.bf16.mxu0 %v1688
        %1790 = vmatpush1.bf16.msra.mxu0 %v1687
        %1791 = vmatprep.subr.bf16.mxu0 %v1692
        %1792 = vmatpush1.bf16.msra.mxu0 %v1691
        %1793 = vmatprep.subr.bf16.mxu0 %v1696
        %1794 = vmatpush1.bf16.msra.mxu0 %v1695
        %1795 = vmatprep.mubr.bf16.mxu0 %v1356
        %1796 = vmatmul.mubr.bf16.gmra.mrb[0].mxu0 %v1355
        %v1797 = vpop.f32.mrb[0].mxu0
        %v1798 = vadd.f32 %v1426, %v1797
        %v1799 = vpop.f32.mrb[0].mxu0
        %v1800 = vadd.f32 %v1430, %v1799
        %v1801 = vpop.f32.mrb[0].mxu0
        %v1802 = vpop.f32.mrb[0].mxu0
        %1803 = vdwg.mxu0
        %1804 = vmatprep.subr.bf16.mxu0 %v1638
        %1805 = vmatpush1.bf16.msra.mxu0 %v1637
        %1806 = vmatprep.subr.bf16.mxu0 %v1642
        %1807 = vmatpush1.bf16.msra.mxu0 %v1641
        %1808 = vmatprep.subr.bf16.mxu0 %v1646
        %1809 = vmatpush1.bf16.msra.mxu0 %v1645
        %1810 = vmatprep.subr.bf16.mxu0 %v1650
        %1811 = vmatpush1.bf16.msra.mxu0 %v1649
        %1812 = vmatprep.subr.bf16.mxu0 %v1654
        %1813 = vmatpush1.bf16.msra.mxu0 %v1653
        %1814 = vmatprep.subr.bf16.mxu0 %v1658
        %1815 = vmatpush1.bf16.msra.mxu0 %v1657
        %1816 = vmatprep.subr.bf16.mxu0 %v1662
        %1817 = vmatpush1.bf16.msra.mxu0 %v1661
        %1818 = vmatprep.subr.bf16.mxu0 %v1666
        %1819 = vmatpush1.bf16.msra.mxu0 %v1665
        %1820 = vmatprep.subr.bf16.mxu0 %v1670
        %1821 = vmatpush1.bf16.msra.mxu0 %v1669
        %1822 = vmatprep.subr.bf16.mxu0 %v1674
        %1823 = vmatpush1.bf16.msra.mxu0 %v1673
        %1824 = vmatprep.subr.bf16.mxu0 %v1678
        %1825 = vmatpush1.bf16.msra.mxu0 %v1677
        %1826 = vmatprep.subr.bf16.mxu0 %v1682
        %1827 = vmatpush1.bf16.msra.mxu0 %v1681
        %1828 = vmatprep.subr.bf16.mxu0 %v1686
        %1829 = vmatpush1.bf16.msra.mxu0 %v1685
        %1830 = vmatprep.subr.bf16.mxu0 %v1690
        %1831 = vmatpush1.bf16.msra.mxu0 %v1689
        %1832 = vmatprep.subr.bf16.mxu0 %v1694
        %1833 = vmatpush1.bf16.msra.mxu0 %v1693
        %1834 = vmatprep.subr.bf16.mxu0 %v1698
        %1835 = vmatpush1.bf16.msra.mxu0 %v1697
        %1836 = vmatprep.mubr.bf16.mxu0 %v1356
        %1837 = vmatmul.mubr.bf16.gmra.mrb[0].mxu0 %v1355
        %v1838 = vpop.f32.mrb[0].mxu0
        %v1839 = vadd.f32 %v1434, %v1838
        %v1840 = vpop.f32.mrb[0].mxu0
        %v1841 = vadd.f32 %v1438, %v1840
        %v1842 = vpop.f32.mrb[0].mxu0
        %v1843 = vpop.f32.mrb[0].mxu0
        %1844 = vdwg.mxu0
        %v1845 = vmax.f32 %v1798, 0.0
        %v1846 = vmax.f32 %v1800, 0.0
        %v1847 = vmax.f32 %v1839, 0.0
        %v1848 = vmax.f32 %v1841, 0.0
        %v1849 = vpack.c.bf16 %v1845, %v1845
        %v1850 = vpack.c.bf16 %v1846, %v1846
        %v1851 = vpack.c.bf16 %v1847, %v1847
        %v1852 = vpack.c.bf16 %v1848, %v1848
        %v1853 = vld [vmem:[#allocation20] sm:$0xff]
        %v1854 = vld [vmem:[#allocation20 + $0x8] sm:$0xff]
        %v1855 = vld [vmem:[#allocation20 + $0x10] sm:$0xff]
        %v1856 = vld [vmem:[#allocation20 + $0x18] sm:$0xff]
        %v1857 = vld [vmem:[#allocation20 + $0x20] sm:$0xff]
        %v1858 = vld [vmem:[#allocation20 + $0x28] sm:$0xff]
        %v1859 = vld [vmem:[#allocation20 + $0x30] sm:$0xff]
        %v1860 = vld [vmem:[#allocation20 + $0x38] sm:$0xff]
        %v1861 = vld [vmem:[#allocation20 + $0x40] sm:$0xff]
        %v1862 = vld [vmem:[#allocation20 + $0x48] sm:$0xff]
        %v1863 = vld [vmem:[#allocation20 + $0x50] sm:$0xff]
        %v1864 = vld [vmem:[#allocation20 + $0x58] sm:$0xff]
        %v1865 = vld [vmem:[#allocation20 + $0x60] sm:$0xff]
        %v1866 = vld [vmem:[#allocation20 + $0x68] sm:$0xff]
        %v1867 = vld [vmem:[#allocation20 + $0x70] sm:$0xff]
        %v1868 = vld [vmem:[#allocation20 + $0x78] sm:$0xff]
        %v1869 = vld [vmem:[#allocation20 + $0x80] sm:$0xff]
        %v1870 = vld [vmem:[#allocation20 + $0x88] sm:$0xff]
        %v1871 = vld [vmem:[#allocation20 + $0x90] sm:$0xff]
        %v1872 = vld [vmem:[#allocation20 + $0x98] sm:$0xff]
        %v1873 = vld [vmem:[#allocation20 + $0xa0] sm:$0xff]
        %v1874 = vld [vmem:[#allocation20 + $0xa8] sm:$0xff]
        %v1875 = vld [vmem:[#allocation20 + $0xb0] sm:$0xff]
        %v1876 = vld [vmem:[#allocation20 + $0xb8] sm:$0xff]
        %v1877 = vld [vmem:[#allocation20 + $0xc0] sm:$0xff]
        %v1878 = vld [vmem:[#allocation20 + $0xc8] sm:$0xff]
        %v1879 = vld [vmem:[#allocation20 + $0xd0] sm:$0xff]
        %v1880 = vld [vmem:[#allocation20 + $0xd8] sm:$0xff]
        %v1881 = vld [vmem:[#allocation20 + $0xe0] sm:$0xff]
        %v1882 = vld [vmem:[#allocation20 + $0xe8] sm:$0xff]
        %v1883 = vld [vmem:[#allocation20 + $0xf0] sm:$0xff]
        %v1884 = vld [vmem:[#allocation20 + $0xf8] sm:$0xff]
        %v1885 = vld [vmem:[#allocation20 + $0x100] sm:$0xff]
        %v1886 = vld [vmem:[#allocation20 + $0x108] sm:$0xff]
        %v1887 = vld [vmem:[#allocation20 + $0x110] sm:$0xff]
        %v1888 = vld [vmem:[#allocation20 + $0x118] sm:$0xff]
        %v1889 = vld [vmem:[#allocation20 + $0x120] sm:$0xff]
        %v1890 = vld [vmem:[#allocation20 + $0x128] sm:$0xff]
        %v1891 = vld [vmem:[#allocation20 + $0x130] sm:$0xff]
        %v1892 = vld [vmem:[#allocation20 + $0x138] sm:$0xff]
        %v1893 = vld [vmem:[#allocation20 + $0x140] sm:$0xff]
        %v1894 = vld [vmem:[#allocation20 + $0x148] sm:$0xff]
        %v1895 = vld [vmem:[#allocation20 + $0x150] sm:$0xff]
        %v1896 = vld [vmem:[#allocation20 + $0x158] sm:$0xff]
        %v1897 = vld [vmem:[#allocation20 + $0x160] sm:$0xff]
        %v1898 = vld [vmem:[#allocation20 + $0x168] sm:$0xff]
        %v1899 = vld [vmem:[#allocation20 + $0x170] sm:$0xff]
        %v1900 = vld [vmem:[#allocation20 + $0x178] sm:$0xff]
        %v1901 = vld [vmem:[#allocation20 + $0x180] sm:$0xff]
        %v1902 = vld [vmem:[#allocation20 + $0x188] sm:$0xff]
        %v1903 = vld [vmem:[#allocation20 + $0x190] sm:$0xff]
        %v1904 = vld [vmem:[#allocation20 + $0x198] sm:$0xff]
        %v1905 = vld [vmem:[#allocation20 + $0x1a0] sm:$0xff]
        %v1906 = vld [vmem:[#allocation20 + $0x1a8] sm:$0xff]
        %v1907 = vld [vmem:[#allocation20 + $0x1b0] sm:$0xff]
        %v1908 = vld [vmem:[#allocation20 + $0x1b8] sm:$0xff]
        %v1909 = vld [vmem:[#allocation20 + $0x1c0] sm:$0xff]
        %v1910 = vld [vmem:[#allocation20 + $0x1c8] sm:$0xff]
        %v1911 = vld [vmem:[#allocation20 + $0x1d0] sm:$0xff]
        %v1912 = vld [vmem:[#allocation20 + $0x1d8] sm:$0xff]
        %v1913 = vld [vmem:[#allocation20 + $0x1e0] sm:$0xff]
        %v1914 = vld [vmem:[#allocation20 + $0x1e8] sm:$0xff]
        %v1915 = vld [vmem:[#allocation20 + $0x1f0] sm:$0xff]
        %v1916 = vld [vmem:[#allocation20 + $0x1f8] sm:$0xff]
        %v1917 = vld [vmem:[#allocation20 + $0x200] sm:$0xff]
        %v1918 = vld [vmem:[#allocation20 + $0x208] sm:$0xff]
        %v1919 = vld [vmem:[#allocation20 + $0x210] sm:$0xff]
        %v1920 = vld [vmem:[#allocation20 + $0x218] sm:$0xff]
        %v1921 = vld [vmem:[#allocation20 + $0x220] sm:$0xff]
        %v1922 = vld [vmem:[#allocation20 + $0x228] sm:$0xff]
        %v1923 = vld [vmem:[#allocation20 + $0x230] sm:$0xff]
        %v1924 = vld [vmem:[#allocation20 + $0x238] sm:$0xff]
        %v1925 = vld [vmem:[#allocation20 + $0x240] sm:$0xff]
        %v1926 = vld [vmem:[#allocation20 + $0x248] sm:$0xff]
        %v1927 = vld [vmem:[#allocation20 + $0x250] sm:$0xff]
        %v1928 = vld [vmem:[#allocation20 + $0x258] sm:$0xff]
        %v1929 = vld [vmem:[#allocation20 + $0x260] sm:$0xff]
        %v1930 = vld [vmem:[#allocation20 + $0x268] sm:$0xff]
        %v1931 = vld [vmem:[#allocation20 + $0x270] sm:$0xff]
        %v1932 = vld [vmem:[#allocation20 + $0x278] sm:$0xff]
        %v1933 = vld [vmem:[#allocation20 + $0x280] sm:$0xff]
        %v1934 = vld [vmem:[#allocation20 + $0x288] sm:$0xff]
        %v1935 = vld [vmem:[#allocation20 + $0x290] sm:$0xff]
        %v1936 = vld [vmem:[#allocation20 + $0x298] sm:$0xff]
        %v1937 = vld [vmem:[#allocation20 + $0x2a0] sm:$0xff]
        %v1938 = vld [vmem:[#allocation20 + $0x2a8] sm:$0xff]
        %v1939 = vld [vmem:[#allocation20 + $0x2b0] sm:$0xff]
        %v1940 = vld [vmem:[#allocation20 + $0x2b8] sm:$0xff]
        %v1941 = vld [vmem:[#allocation20 + $0x2c0] sm:$0xff]
        %v1942 = vld [vmem:[#allocation20 + $0x2c8] sm:$0xff]
        %v1943 = vld [vmem:[#allocation20 + $0x2d0] sm:$0xff]
        %v1944 = vld [vmem:[#allocation20 + $0x2d8] sm:$0xff]
        %v1945 = vld [vmem:[#allocation20 + $0x2e0] sm:$0xff]
        %v1946 = vld [vmem:[#allocation20 + $0x2e8] sm:$0xff]
        %v1947 = vld [vmem:[#allocation20 + $0x2f0] sm:$0xff]
        %v1948 = vld [vmem:[#allocation20 + $0x2f8] sm:$0xff]
        %v1949 = vld [vmem:[#allocation20 + $0x300] sm:$0xff]
        %v1950 = vld [vmem:[#allocation20 + $0x308] sm:$0xff]
        %v1951 = vld [vmem:[#allocation20 + $0x310] sm:$0xff]
        %v1952 = vld [vmem:[#allocation20 + $0x318] sm:$0xff]
        %v1953 = vld [vmem:[#allocation20 + $0x320] sm:$0xff]
        %v1954 = vld [vmem:[#allocation20 + $0x328] sm:$0xff]
        %v1955 = vld [vmem:[#allocation20 + $0x330] sm:$0xff]
        %v1956 = vld [vmem:[#allocation20 + $0x338] sm:$0xff]
        %v1957 = vld [vmem:[#allocation20 + $0x340] sm:$0xff]
        %v1958 = vld [vmem:[#allocation20 + $0x348] sm:$0xff]
        %v1959 = vld [vmem:[#allocation20 + $0x350] sm:$0xff]
        %v1960 = vld [vmem:[#allocation20 + $0x358] sm:$0xff]
        %v1961 = vld [vmem:[#allocation20 + $0x360] sm:$0xff]
        %v1962 = vld [vmem:[#allocation20 + $0x368] sm:$0xff]
        %v1963 = vld [vmem:[#allocation20 + $0x370] sm:$0xff]
        %v1964 = vld [vmem:[#allocation20 + $0x378] sm:$0xff]
        %v1965 = vld [vmem:[#allocation20 + $0x380] sm:$0xff]
        %v1966 = vld [vmem:[#allocation20 + $0x388] sm:$0xff]
        %v1967 = vld [vmem:[#allocation20 + $0x390] sm:$0xff]
        %v1968 = vld [vmem:[#allocation20 + $0x398] sm:$0xff]
        %v1969 = vld [vmem:[#allocation20 + $0x3a0] sm:$0xff]
        %v1970 = vld [vmem:[#allocation20 + $0x3a8] sm:$0xff]
        %v1971 = vld [vmem:[#allocation20 + $0x3b0] sm:$0xff]
        %v1972 = vld [vmem:[#allocation20 + $0x3b8] sm:$0xff]
        %v1973 = vld [vmem:[#allocation20 + $0x3c0] sm:$0xff]
        %v1974 = vld [vmem:[#allocation20 + $0x3c8] sm:$0xff]
        %v1975 = vld [vmem:[#allocation20 + $0x3d0] sm:$0xff]
        %v1976 = vld [vmem:[#allocation20 + $0x3d8] sm:$0xff]
        %v1977 = vld [vmem:[#allocation20 + $0x3e0] sm:$0xff]
        %v1978 = vld [vmem:[#allocation20 + $0x3e8] sm:$0xff]
        %v1979 = vld [vmem:[#allocation20 + $0x3f0] sm:$0xff]
        %v1980 = vld [vmem:[#allocation20 + $0x3f8] sm:$0xff]
        %v1981 = vld [vmem:[#allocation20 + $0x400] sm:$0xff]
        %v1982 = vld [vmem:[#allocation20 + $0x408] sm:$0xff]
        %v1983 = vld [vmem:[#allocation20 + $0x410] sm:$0xff]
        %v1984 = vld [vmem:[#allocation20 + $0x418] sm:$0xff]
        %v1985 = vld [vmem:[#allocation20 + $0x420] sm:$0xff]
        %v1986 = vld [vmem:[#allocation20 + $0x428] sm:$0xff]
        %v1987 = vld [vmem:[#allocation20 + $0x430] sm:$0xff]
        %v1988 = vld [vmem:[#allocation20 + $0x438] sm:$0xff]
        %v1989 = vld [vmem:[#allocation20 + $0x440] sm:$0xff]
        %v1990 = vld [vmem:[#allocation20 + $0x448] sm:$0xff]
        %v1991 = vld [vmem:[#allocation20 + $0x450] sm:$0xff]
        %v1992 = vld [vmem:[#allocation20 + $0x458] sm:$0xff]
        %v1993 = vld [vmem:[#allocation20 + $0x460] sm:$0xff]
        %v1994 = vld [vmem:[#allocation20 + $0x468] sm:$0xff]
        %v1995 = vld [vmem:[#allocation20 + $0x470] sm:$0xff]
        %v1996 = vld [vmem:[#allocation20 + $0x478] sm:$0xff]
        %v1997 = vld [vmem:[#allocation20 + $0x480] sm:$0xff]
        %v1998 = vld [vmem:[#allocation20 + $0x488] sm:$0xff]
        %v1999 = vld [vmem:[#allocation20 + $0x490] sm:$0xff]
        %v2000 = vld [vmem:[#allocation20 + $0x498] sm:$0xff]
        %v2001 = vld [vmem:[#allocation20 + $0x4a0] sm:$0xff]
        %v2002 = vld [vmem:[#allocation20 + $0x4a8] sm:$0xff]
        %v2003 = vld [vmem:[#allocation20 + $0x4b0] sm:$0xff]
        %v2004 = vld [vmem:[#allocation20 + $0x4b8] sm:$0xff]
        %v2005 = vld [vmem:[#allocation20 + $0x4c0] sm:$0xff]
        %v2006 = vld [vmem:[#allocation20 + $0x4c8] sm:$0xff]
        %v2007 = vld [vmem:[#allocation20 + $0x4d0] sm:$0xff]
        %v2008 = vld [vmem:[#allocation20 + $0x4d8] sm:$0xff]
        %v2009 = vld [vmem:[#allocation20 + $0x4e0] sm:$0xff]
        %v2010 = vld [vmem:[#allocation20 + $0x4e8] sm:$0xff]
        %v2011 = vld [vmem:[#allocation20 + $0x4f0] sm:$0xff]
        %v2012 = vld [vmem:[#allocation20 + $0x4f8] sm:$0xff]
        %v2013 = vld [vmem:[#allocation20 + $0x500] sm:$0xff]
        %v2014 = vld [vmem:[#allocation20 + $0x508] sm:$0xff]
        %v2015 = vld [vmem:[#allocation20 + $0x510] sm:$0xff]
        %v2016 = vld [vmem:[#allocation20 + $0x518] sm:$0xff]
        %v2017 = vld [vmem:[#allocation20 + $0x520] sm:$0xff]
        %v2018 = vld [vmem:[#allocation20 + $0x528] sm:$0xff]
        %v2019 = vld [vmem:[#allocation20 + $0x530] sm:$0xff]
        %v2020 = vld [vmem:[#allocation20 + $0x538] sm:$0xff]
        %v2021 = vld [vmem:[#allocation20 + $0x540] sm:$0xff]
        %v2022 = vld [vmem:[#allocation20 + $0x548] sm:$0xff]
        %v2023 = vld [vmem:[#allocation20 + $0x550] sm:$0xff]
        %v2024 = vld [vmem:[#allocation20 + $0x558] sm:$0xff]
        %v2025 = vld [vmem:[#allocation20 + $0x560] sm:$0xff]
        %v2026 = vld [vmem:[#allocation20 + $0x568] sm:$0xff]
        %v2027 = vld [vmem:[#allocation20 + $0x570] sm:$0xff]
        %v2028 = vld [vmem:[#allocation20 + $0x578] sm:$0xff]
        %v2029 = vld [vmem:[#allocation20 + $0x580] sm:$0xff]
        %v2030 = vld [vmem:[#allocation20 + $0x588] sm:$0xff]
        %v2031 = vld [vmem:[#allocation20 + $0x590] sm:$0xff]
        %v2032 = vld [vmem:[#allocation20 + $0x598] sm:$0xff]
        %v2033 = vld [vmem:[#allocation20 + $0x5a0] sm:$0xff]
        %v2034 = vld [vmem:[#allocation20 + $0x5a8] sm:$0xff]
        %v2035 = vld [vmem:[#allocation20 + $0x5b0] sm:$0xff]
        %v2036 = vld [vmem:[#allocation20 + $0x5b8] sm:$0xff]
        %v2037 = vld [vmem:[#allocation20 + $0x5c0] sm:$0xff]
        %v2038 = vld [vmem:[#allocation20 + $0x5c8] sm:$0xff]
        %v2039 = vld [vmem:[#allocation20 + $0x5d0] sm:$0xff]
        %v2040 = vld [vmem:[#allocation20 + $0x5d8] sm:$0xff]
        %v2041 = vld [vmem:[#allocation20 + $0x5e0] sm:$0xff]
        %v2042 = vld [vmem:[#allocation20 + $0x5e8] sm:$0xff]
        %v2043 = vld [vmem:[#allocation20 + $0x5f0] sm:$0xff]
        %v2044 = vld [vmem:[#allocation20 + $0x5f8] sm:$0xff]
        %v2045 = vld [vmem:[#allocation20 + $0x600] sm:$0xff]
        %v2046 = vld [vmem:[#allocation20 + $0x608] sm:$0xff]
        %v2047 = vld [vmem:[#allocation20 + $0x610] sm:$0xff]
        %v2048 = vld [vmem:[#allocation20 + $0x618] sm:$0xff]
        %v2049 = vld [vmem:[#allocation20 + $0x620] sm:$0xff]
        %v2050 = vld [vmem:[#allocation20 + $0x628] sm:$0xff]
        %v2051 = vld [vmem:[#allocation20 + $0x630] sm:$0xff]
        %v2052 = vld [vmem:[#allocation20 + $0x638] sm:$0xff]
        %v2053 = vld [vmem:[#allocation20 + $0x640] sm:$0xff]
        %v2054 = vld [vmem:[#allocation20 + $0x648] sm:$0xff]
        %v2055 = vld [vmem:[#allocation20 + $0x650] sm:$0xff]
        %v2056 = vld [vmem:[#allocation20 + $0x658] sm:$0xff]
        %v2057 = vld [vmem:[#allocation20 + $0x660] sm:$0xff]
        %v2058 = vld [vmem:[#allocation20 + $0x668] sm:$0xff]
        %v2059 = vld [vmem:[#allocation20 + $0x670] sm:$0xff]
        %v2060 = vld [vmem:[#allocation20 + $0x678] sm:$0xff]
        %v2061 = vld [vmem:[#allocation20 + $0x680] sm:$0xff]
        %v2062 = vld [vmem:[#allocation20 + $0x688] sm:$0xff]
        %v2063 = vld [vmem:[#allocation20 + $0x690] sm:$0xff]
        %v2064 = vld [vmem:[#allocation20 + $0x698] sm:$0xff]
        %v2065 = vld [vmem:[#allocation20 + $0x6a0] sm:$0xff]
        %v2066 = vld [vmem:[#allocation20 + $0x6a8] sm:$0xff]
        %v2067 = vld [vmem:[#allocation20 + $0x6b0] sm:$0xff]
        %v2068 = vld [vmem:[#allocation20 + $0x6b8] sm:$0xff]
        %v2069 = vld [vmem:[#allocation20 + $0x6c0] sm:$0xff]
        %v2070 = vld [vmem:[#allocation20 + $0x6c8] sm:$0xff]
        %v2071 = vld [vmem:[#allocation20 + $0x6d0] sm:$0xff]
        %v2072 = vld [vmem:[#allocation20 + $0x6d8] sm:$0xff]
        %v2073 = vld [vmem:[#allocation20 + $0x6e0] sm:$0xff]
        %v2074 = vld [vmem:[#allocation20 + $0x6e8] sm:$0xff]
        %v2075 = vld [vmem:[#allocation20 + $0x6f0] sm:$0xff]
        %v2076 = vld [vmem:[#allocation20 + $0x6f8] sm:$0xff]
        %v2077 = vld [vmem:[#allocation20 + $0x700] sm:$0xff]
        %v2078 = vld [vmem:[#allocation20 + $0x708] sm:$0xff]
        %v2079 = vld [vmem:[#allocation20 + $0x710] sm:$0xff]
        %v2080 = vld [vmem:[#allocation20 + $0x718] sm:$0xff]
        %v2081 = vld [vmem:[#allocation20 + $0x720] sm:$0xff]
        %v2082 = vld [vmem:[#allocation20 + $0x728] sm:$0xff]
        %v2083 = vld [vmem:[#allocation20 + $0x730] sm:$0xff]
        %v2084 = vld [vmem:[#allocation20 + $0x738] sm:$0xff]
        %v2085 = vld [vmem:[#allocation20 + $0x740] sm:$0xff]
        %v2086 = vld [vmem:[#allocation20 + $0x748] sm:$0xff]
        %v2087 = vld [vmem:[#allocation20 + $0x750] sm:$0xff]
        %v2088 = vld [vmem:[#allocation20 + $0x758] sm:$0xff]
        %v2089 = vld [vmem:[#allocation20 + $0x760] sm:$0xff]
        %v2090 = vld [vmem:[#allocation20 + $0x768] sm:$0xff]
        %v2091 = vld [vmem:[#allocation20 + $0x770] sm:$0xff]
        %v2092 = vld [vmem:[#allocation20 + $0x778] sm:$0xff]
        %v2093 = vld [vmem:[#allocation20 + $0x780] sm:$0xff]
        %v2094 = vld [vmem:[#allocation20 + $0x788] sm:$0xff]
        %v2095 = vld [vmem:[#allocation20 + $0x790] sm:$0xff]
        %v2096 = vld [vmem:[#allocation20 + $0x798] sm:$0xff]
        %v2097 = vld [vmem:[#allocation20 + $0x7a0] sm:$0xff]
        %v2098 = vld [vmem:[#allocation20 + $0x7a8] sm:$0xff]
        %v2099 = vld [vmem:[#allocation20 + $0x7b0] sm:$0xff]
        %v2100 = vld [vmem:[#allocation20 + $0x7b8] sm:$0xff]
        %v2101 = vld [vmem:[#allocation20 + $0x7c0] sm:$0xff]
        %v2102 = vld [vmem:[#allocation20 + $0x7c8] sm:$0xff]
        %v2103 = vld [vmem:[#allocation20 + $0x7d0] sm:$0xff]
        %v2104 = vld [vmem:[#allocation20 + $0x7d8] sm:$0xff]
        %v2105 = vld [vmem:[#allocation20 + $0x7e0] sm:$0xff]
        %v2106 = vld [vmem:[#allocation20 + $0x7e8] sm:$0xff]
        %v2107 = vld [vmem:[#allocation20 + $0x7f0] sm:$0xff]
        %v2108 = vld [vmem:[#allocation20 + $0x7f8] sm:$0xff]
        %v2109 = vld [vmem:[#allocation22] sm:$0xff]
        %v2111 = vlaneseq
        %v2112 = vshrl.u32 %v2111, 7
        %v2113 = vsub.s32 0, %v2112
        %v2114 = vrot.slane %v2109, %v2113
        %v2115 = vlaneseq
        %v2116 = vshrl.u32 %v2115, 7
        %v2117 = vsub.s32 1, %v2116
        %v2118 = vrot.slane %v2109, %v2117
        %v2119 = vlaneseq
        %v2120 = vshrl.u32 %v2119, 7
        %v2121 = vsub.s32 2, %v2120
        %v2122 = vrot.slane %v2109, %v2121
        %v2123 = vlaneseq
        %v2124 = vshrl.u32 %v2123, 7
        %v2125 = vsub.s32 3, %v2124
        %v2126 = vrot.slane %v2109, %v2125
        %v2127 = vlaneseq
        %v2128 = vshrl.u32 %v2127, 7
        %v2129 = vsub.s32 4, %v2128
        %v2130 = vrot.slane %v2109, %v2129
        %v2131 = vlaneseq
        %v2132 = vshrl.u32 %v2131, 7
        %v2133 = vsub.s32 5, %v2132
        %v2134 = vrot.slane %v2109, %v2133
        %v2135 = vlaneseq
        %v2136 = vshrl.u32 %v2135, 7
        %v2137 = vsub.s32 6, %v2136
        %v2138 = vrot.slane %v2109, %v2137
        %v2139 = vlaneseq
        %v2140 = vshrl.u32 %v2139, 7
        %v2141 = vsub.s32 7, %v2140
        %v2142 = vrot.slane %v2109, %v2141
        %v2407 = vunpack.c.l.b16 %v1853
        %v2408 = vunpack.c.h.b16 %v1853
        %v2409 = vunpack.c.l.b16 %v1854
        %v2410 = vunpack.c.h.b16 %v1854
        %v2411 = vunpack.c.l.b16 %v1855
        %v2412 = vunpack.c.h.b16 %v1855
        %v2413 = vunpack.c.l.b16 %v1856
        %v2414 = vunpack.c.h.b16 %v1856
        %v2415 = vunpack.c.l.b16 %v1857
        %v2416 = vunpack.c.h.b16 %v1857
        %v2417 = vunpack.c.l.b16 %v1858
        %v2418 = vunpack.c.h.b16 %v1858
        %v2419 = vunpack.c.l.b16 %v1859
        %v2420 = vunpack.c.h.b16 %v1859
        %v2421 = vunpack.c.l.b16 %v1860
        %v2422 = vunpack.c.h.b16 %v1860
        %v2423 = vunpack.c.l.b16 %v1861
        %v2424 = vunpack.c.h.b16 %v1861
        %v2425 = vunpack.c.l.b16 %v1862
        %v2426 = vunpack.c.h.b16 %v1862
        %v2427 = vunpack.c.l.b16 %v1863
        %v2428 = vunpack.c.h.b16 %v1863
        %v2429 = vunpack.c.l.b16 %v1864
        %v2430 = vunpack.c.h.b16 %v1864
        %v2431 = vunpack.c.l.b16 %v1865
        %v2432 = vunpack.c.h.b16 %v1865
        %v2433 = vunpack.c.l.b16 %v1866
        %v2434 = vunpack.c.h.b16 %v1866
        %v2435 = vunpack.c.l.b16 %v1867
        %v2436 = vunpack.c.h.b16 %v1867
        %v2437 = vunpack.c.l.b16 %v1868
        %v2438 = vunpack.c.h.b16 %v1868
        %v2439 = vunpack.c.l.b16 %v1869
        %v2440 = vunpack.c.h.b16 %v1869
        %v2441 = vunpack.c.l.b16 %v1870
        %v2442 = vunpack.c.h.b16 %v1870
        %v2443 = vunpack.c.l.b16 %v1871
        %v2444 = vunpack.c.h.b16 %v1871
        %v2445 = vunpack.c.l.b16 %v1872
        %v2446 = vunpack.c.h.b16 %v1872
        %v2447 = vunpack.c.l.b16 %v1873
        %v2448 = vunpack.c.h.b16 %v1873
        %v2449 = vunpack.c.l.b16 %v1874
        %v2450 = vunpack.c.h.b16 %v1874
        %v2451 = vunpack.c.l.b16 %v1875
        %v2452 = vunpack.c.h.b16 %v1875
        %v2453 = vunpack.c.l.b16 %v1876
        %v2454 = vunpack.c.h.b16 %v1876
        %v2455 = vunpack.c.l.b16 %v1877
        %v2456 = vunpack.c.h.b16 %v1877
        %v2457 = vunpack.c.l.b16 %v1878
        %v2458 = vunpack.c.h.b16 %v1878
        %v2459 = vunpack.c.l.b16 %v1879
        %v2460 = vunpack.c.h.b16 %v1879
        %v2461 = vunpack.c.l.b16 %v1880
        %v2462 = vunpack.c.h.b16 %v1880
        %v2463 = vunpack.c.l.b16 %v1881
        %v2464 = vunpack.c.h.b16 %v1881
        %v2465 = vunpack.c.l.b16 %v1882
        %v2466 = vunpack.c.h.b16 %v1882
        %v2467 = vunpack.c.l.b16 %v1883
        %v2468 = vunpack.c.h.b16 %v1883
        %v2469 = vunpack.c.l.b16 %v1884
        %v2470 = vunpack.c.h.b16 %v1884
        %v2471 = vunpack.c.l.b16 %v1885
        %v2472 = vunpack.c.h.b16 %v1885
        %v2473 = vunpack.c.l.b16 %v1886
        %v2474 = vunpack.c.h.b16 %v1886
        %v2475 = vunpack.c.l.b16 %v1887
        %v2476 = vunpack.c.h.b16 %v1887
        %v2477 = vunpack.c.l.b16 %v1888
        %v2478 = vunpack.c.h.b16 %v1888
        %v2479 = vunpack.c.l.b16 %v1889
        %v2480 = vunpack.c.h.b16 %v1889
        %v2481 = vunpack.c.l.b16 %v1890
        %v2482 = vunpack.c.h.b16 %v1890
        %v2483 = vunpack.c.l.b16 %v1891
        %v2484 = vunpack.c.h.b16 %v1891
        %v2485 = vunpack.c.l.b16 %v1892
        %v2486 = vunpack.c.h.b16 %v1892
        %v2487 = vunpack.c.l.b16 %v1893
        %v2488 = vunpack.c.h.b16 %v1893
        %v2489 = vunpack.c.l.b16 %v1894
        %v2490 = vunpack.c.h.b16 %v1894
        %v2491 = vunpack.c.l.b16 %v1895
        %v2492 = vunpack.c.h.b16 %v1895
        %v2493 = vunpack.c.l.b16 %v1896
        %v2494 = vunpack.c.h.b16 %v1896
        %v2495 = vunpack.c.l.b16 %v1897
        %v2496 = vunpack.c.h.b16 %v1897
        %v2497 = vunpack.c.l.b16 %v1898
        %v2498 = vunpack.c.h.b16 %v1898
        %v2499 = vunpack.c.l.b16 %v1899
        %v2500 = vunpack.c.h.b16 %v1899
        %v2501 = vunpack.c.l.b16 %v1900
        %v2502 = vunpack.c.h.b16 %v1900
        %v2503 = vunpack.c.l.b16 %v1901
        %v2504 = vunpack.c.h.b16 %v1901
        %v2505 = vunpack.c.l.b16 %v1902
        %v2506 = vunpack.c.h.b16 %v1902
        %v2507 = vunpack.c.l.b16 %v1903
        %v2508 = vunpack.c.h.b16 %v1903
        %v2509 = vunpack.c.l.b16 %v1904
        %v2510 = vunpack.c.h.b16 %v1904
        %v2511 = vunpack.c.l.b16 %v1905
        %v2512 = vunpack.c.h.b16 %v1905
        %v2513 = vunpack.c.l.b16 %v1906
        %v2514 = vunpack.c.h.b16 %v1906
        %v2515 = vunpack.c.l.b16 %v1907
        %v2516 = vunpack.c.h.b16 %v1907
        %v2517 = vunpack.c.l.b16 %v1908
        %v2518 = vunpack.c.h.b16 %v1908
        %v2519 = vunpack.c.l.b16 %v1909
        %v2520 = vunpack.c.h.b16 %v1909
        %v2521 = vunpack.c.l.b16 %v1910
        %v2522 = vunpack.c.h.b16 %v1910
        %v2523 = vunpack.c.l.b16 %v1911
        %v2524 = vunpack.c.h.b16 %v1911
        %v2525 = vunpack.c.l.b16 %v1912
        %v2526 = vunpack.c.h.b16 %v1912
        %v2527 = vunpack.c.l.b16 %v1913
        %v2528 = vunpack.c.h.b16 %v1913
        %v2529 = vunpack.c.l.b16 %v1914
        %v2530 = vunpack.c.h.b16 %v1914
        %v2531 = vunpack.c.l.b16 %v1915
        %v2532 = vunpack.c.h.b16 %v1915
        %v2533 = vunpack.c.l.b16 %v1916
        %v2534 = vunpack.c.h.b16 %v1916
        %v2535 = vunpack.c.l.b16 %v1917
        %v2536 = vunpack.c.h.b16 %v1917
        %v2537 = vunpack.c.l.b16 %v1918
        %v2538 = vunpack.c.h.b16 %v1918
        %v2539 = vunpack.c.l.b16 %v1919
        %v2540 = vunpack.c.h.b16 %v1919
        %v2541 = vunpack.c.l.b16 %v1920
        %v2542 = vunpack.c.h.b16 %v1920
        %v2543 = vunpack.c.l.b16 %v1921
        %v2544 = vunpack.c.h.b16 %v1921
        %v2545 = vunpack.c.l.b16 %v1922
        %v2546 = vunpack.c.h.b16 %v1922
        %v2547 = vunpack.c.l.b16 %v1923
        %v2548 = vunpack.c.h.b16 %v1923
        %v2549 = vunpack.c.l.b16 %v1924
        %v2550 = vunpack.c.h.b16 %v1924
        %v2551 = vunpack.c.l.b16 %v1925
        %v2552 = vunpack.c.h.b16 %v1925
        %v2553 = vunpack.c.l.b16 %v1926
        %v2554 = vunpack.c.h.b16 %v1926
        %v2555 = vunpack.c.l.b16 %v1927
        %v2556 = vunpack.c.h.b16 %v1927
        %v2557 = vunpack.c.l.b16 %v1928
        %v2558 = vunpack.c.h.b16 %v1928
        %v2559 = vunpack.c.l.b16 %v1929
        %v2560 = vunpack.c.h.b16 %v1929
        %v2561 = vunpack.c.l.b16 %v1930
        %v2562 = vunpack.c.h.b16 %v1930
        %v2563 = vunpack.c.l.b16 %v1931
        %v2564 = vunpack.c.h.b16 %v1931
        %v2565 = vunpack.c.l.b16 %v1932
        %v2566 = vunpack.c.h.b16 %v1932
        %v2567 = vunpack.c.l.b16 %v1933
        %v2568 = vunpack.c.h.b16 %v1933
        %v2569 = vunpack.c.l.b16 %v1934
        %v2570 = vunpack.c.h.b16 %v1934
        %v2571 = vunpack.c.l.b16 %v1935
        %v2572 = vunpack.c.h.b16 %v1935
        %v2573 = vunpack.c.l.b16 %v1936
        %v2574 = vunpack.c.h.b16 %v1936
        %v2575 = vunpack.c.l.b16 %v1937
        %v2576 = vunpack.c.h.b16 %v1937
        %v2577 = vunpack.c.l.b16 %v1938
        %v2578 = vunpack.c.h.b16 %v1938
        %v2579 = vunpack.c.l.b16 %v1939
        %v2580 = vunpack.c.h.b16 %v1939
        %v2581 = vunpack.c.l.b16 %v1940
        %v2582 = vunpack.c.h.b16 %v1940
        %v2583 = vunpack.c.l.b16 %v1941
        %v2584 = vunpack.c.h.b16 %v1941
        %v2585 = vunpack.c.l.b16 %v1942
        %v2586 = vunpack.c.h.b16 %v1942
        %v2587 = vunpack.c.l.b16 %v1943
        %v2588 = vunpack.c.h.b16 %v1943
        %v2589 = vunpack.c.l.b16 %v1944
        %v2590 = vunpack.c.h.b16 %v1944
        %v2591 = vunpack.c.l.b16 %v1945
        %v2592 = vunpack.c.h.b16 %v1945
        %v2593 = vunpack.c.l.b16 %v1946
        %v2594 = vunpack.c.h.b16 %v1946
        %v2595 = vunpack.c.l.b16 %v1947
        %v2596 = vunpack.c.h.b16 %v1947
        %v2597 = vunpack.c.l.b16 %v1948
        %v2598 = vunpack.c.h.b16 %v1948
        %v2599 = vunpack.c.l.b16 %v1949
        %v2600 = vunpack.c.h.b16 %v1949
        %v2601 = vunpack.c.l.b16 %v1950
        %v2602 = vunpack.c.h.b16 %v1950
        %v2603 = vunpack.c.l.b16 %v1951
        %v2604 = vunpack.c.h.b16 %v1951
        %v2605 = vunpack.c.l.b16 %v1952
        %v2606 = vunpack.c.h.b16 %v1952
        %v2607 = vunpack.c.l.b16 %v1953
        %v2608 = vunpack.c.h.b16 %v1953
        %v2609 = vunpack.c.l.b16 %v1954
        %v2610 = vunpack.c.h.b16 %v1954
        %v2611 = vunpack.c.l.b16 %v1955
        %v2612 = vunpack.c.h.b16 %v1955
        %v2613 = vunpack.c.l.b16 %v1956
        %v2614 = vunpack.c.h.b16 %v1956
        %v2615 = vunpack.c.l.b16 %v1957
        %v2616 = vunpack.c.h.b16 %v1957
        %v2617 = vunpack.c.l.b16 %v1958
        %v2618 = vunpack.c.h.b16 %v1958
        %v2619 = vunpack.c.l.b16 %v1959
        %v2620 = vunpack.c.h.b16 %v1959
        %v2621 = vunpack.c.l.b16 %v1960
        %v2622 = vunpack.c.h.b16 %v1960
        %v2623 = vunpack.c.l.b16 %v1961
        %v2624 = vunpack.c.h.b16 %v1961
        %v2625 = vunpack.c.l.b16 %v1962
        %v2626 = vunpack.c.h.b16 %v1962
        %v2627 = vunpack.c.l.b16 %v1963
        %v2628 = vunpack.c.h.b16 %v1963
        %v2629 = vunpack.c.l.b16 %v1964
        %v2630 = vunpack.c.h.b16 %v1964
        %v2631 = vunpack.c.l.b16 %v1965
        %v2632 = vunpack.c.h.b16 %v1965
        %v2633 = vunpack.c.l.b16 %v1966
        %v2634 = vunpack.c.h.b16 %v1966
        %v2635 = vunpack.c.l.b16 %v1967
        %v2636 = vunpack.c.h.b16 %v1967
        %v2637 = vunpack.c.l.b16 %v1968
        %v2638 = vunpack.c.h.b16 %v1968
        %v2639 = vunpack.c.l.b16 %v1969
        %v2640 = vunpack.c.h.b16 %v1969
        %v2641 = vunpack.c.l.b16 %v1970
        %v2642 = vunpack.c.h.b16 %v1970
        %v2643 = vunpack.c.l.b16 %v1971
        %v2644 = vunpack.c.h.b16 %v1971
        %v2645 = vunpack.c.l.b16 %v1972
        %v2646 = vunpack.c.h.b16 %v1972
        %v2647 = vunpack.c.l.b16 %v1973
        %v2648 = vunpack.c.h.b16 %v1973
        %v2649 = vunpack.c.l.b16 %v1974
        %v2650 = vunpack.c.h.b16 %v1974
        %v2651 = vunpack.c.l.b16 %v1975
        %v2652 = vunpack.c.h.b16 %v1975
        %v2653 = vunpack.c.l.b16 %v1976
        %v2654 = vunpack.c.h.b16 %v1976
        %v2655 = vunpack.c.l.b16 %v1977
        %v2656 = vunpack.c.h.b16 %v1977
        %v2657 = vunpack.c.l.b16 %v1978
        %v2658 = vunpack.c.h.b16 %v1978
        %v2659 = vunpack.c.l.b16 %v1979
        %v2660 = vunpack.c.h.b16 %v1979
        %v2661 = vunpack.c.l.b16 %v1980
        %v2662 = vunpack.c.h.b16 %v1980
        %v2663 = vunpack.c.l.b16 %v1981
        %v2664 = vunpack.c.h.b16 %v1981
        %v2665 = vunpack.c.l.b16 %v1982
        %v2666 = vunpack.c.h.b16 %v1982
        %v2667 = vunpack.c.l.b16 %v1983
        %v2668 = vunpack.c.h.b16 %v1983
        %v2669 = vunpack.c.l.b16 %v1984
        %v2670 = vunpack.c.h.b16 %v1984
        %v2671 = vunpack.c.l.b16 %v1985
        %v2672 = vunpack.c.h.b16 %v1985
        %v2673 = vunpack.c.l.b16 %v1986
        %v2674 = vunpack.c.h.b16 %v1986
        %v2675 = vunpack.c.l.b16 %v1987
        %v2676 = vunpack.c.h.b16 %v1987
        %v2677 = vunpack.c.l.b16 %v1988
        %v2678 = vunpack.c.h.b16 %v1988
        %v2679 = vunpack.c.l.b16 %v1989
        %v2680 = vunpack.c.h.b16 %v1989
        %v2681 = vunpack.c.l.b16 %v1990
        %v2682 = vunpack.c.h.b16 %v1990
        %v2683 = vunpack.c.l.b16 %v1991
        %v2684 = vunpack.c.h.b16 %v1991
        %v2685 = vunpack.c.l.b16 %v1992
        %v2686 = vunpack.c.h.b16 %v1992
        %v2687 = vunpack.c.l.b16 %v1993
        %v2688 = vunpack.c.h.b16 %v1993
        %v2689 = vunpack.c.l.b16 %v1994
        %v2690 = vunpack.c.h.b16 %v1994
        %v2691 = vunpack.c.l.b16 %v1995
        %v2692 = vunpack.c.h.b16 %v1995
        %v2693 = vunpack.c.l.b16 %v1996
        %v2694 = vunpack.c.h.b16 %v1996
        %v2695 = vunpack.c.l.b16 %v1997
        %v2696 = vunpack.c.h.b16 %v1997
        %v2697 = vunpack.c.l.b16 %v1998
        %v2698 = vunpack.c.h.b16 %v1998
        %v2699 = vunpack.c.l.b16 %v1999
        %v2700 = vunpack.c.h.b16 %v1999
        %v2701 = vunpack.c.l.b16 %v2000
        %v2702 = vunpack.c.h.b16 %v2000
        %v2703 = vunpack.c.l.b16 %v2001
        %v2704 = vunpack.c.h.b16 %v2001
        %v2705 = vunpack.c.l.b16 %v2002
        %v2706 = vunpack.c.h.b16 %v2002
        %v2707 = vunpack.c.l.b16 %v2003
        %v2708 = vunpack.c.h.b16 %v2003
        %v2709 = vunpack.c.l.b16 %v2004
        %v2710 = vunpack.c.h.b16 %v2004
        %v2711 = vunpack.c.l.b16 %v2005
        %v2712 = vunpack.c.h.b16 %v2005
        %v2713 = vunpack.c.l.b16 %v2006
        %v2714 = vunpack.c.h.b16 %v2006
        %v2715 = vunpack.c.l.b16 %v2007
        %v2716 = vunpack.c.h.b16 %v2007
        %v2717 = vunpack.c.l.b16 %v2008
        %v2718 = vunpack.c.h.b16 %v2008
        %v2719 = vunpack.c.l.b16 %v2009
        %v2720 = vunpack.c.h.b16 %v2009
        %v2721 = vunpack.c.l.b16 %v2010
        %v2722 = vunpack.c.h.b16 %v2010
        %v2723 = vunpack.c.l.b16 %v2011
        %v2724 = vunpack.c.h.b16 %v2011
        %v2725 = vunpack.c.l.b16 %v2012
        %v2726 = vunpack.c.h.b16 %v2012
        %v2727 = vunpack.c.l.b16 %v2013
        %v2728 = vunpack.c.h.b16 %v2013
        %v2729 = vunpack.c.l.b16 %v2014
        %v2730 = vunpack.c.h.b16 %v2014
        %v2731 = vunpack.c.l.b16 %v2015
        %v2732 = vunpack.c.h.b16 %v2015
        %v2733 = vunpack.c.l.b16 %v2016
        %v2734 = vunpack.c.h.b16 %v2016
        %v2735 = vunpack.c.l.b16 %v2017
        %v2736 = vunpack.c.h.b16 %v2017
        %v2737 = vunpack.c.l.b16 %v2018
        %v2738 = vunpack.c.h.b16 %v2018
        %v2739 = vunpack.c.l.b16 %v2019
        %v2740 = vunpack.c.h.b16 %v2019
        %v2741 = vunpack.c.l.b16 %v2020
        %v2742 = vunpack.c.h.b16 %v2020
        %v2743 = vunpack.c.l.b16 %v2021
        %v2744 = vunpack.c.h.b16 %v2021
        %v2745 = vunpack.c.l.b16 %v2022
        %v2746 = vunpack.c.h.b16 %v2022
        %v2747 = vunpack.c.l.b16 %v2023
        %v2748 = vunpack.c.h.b16 %v2023
        %v2749 = vunpack.c.l.b16 %v2024
        %v2750 = vunpack.c.h.b16 %v2024
        %v2751 = vunpack.c.l.b16 %v2025
        %v2752 = vunpack.c.h.b16 %v2025
        %v2753 = vunpack.c.l.b16 %v2026
        %v2754 = vunpack.c.h.b16 %v2026
        %v2755 = vunpack.c.l.b16 %v2027
        %v2756 = vunpack.c.h.b16 %v2027
        %v2757 = vunpack.c.l.b16 %v2028
        %v2758 = vunpack.c.h.b16 %v2028
        %v2759 = vunpack.c.l.b16 %v2029
        %v2760 = vunpack.c.h.b16 %v2029
        %v2761 = vunpack.c.l.b16 %v2030
        %v2762 = vunpack.c.h.b16 %v2030
        %v2763 = vunpack.c.l.b16 %v2031
        %v2764 = vunpack.c.h.b16 %v2031
        %v2765 = vunpack.c.l.b16 %v2032
        %v2766 = vunpack.c.h.b16 %v2032
        %v2767 = vunpack.c.l.b16 %v2033
        %v2768 = vunpack.c.h.b16 %v2033
        %v2769 = vunpack.c.l.b16 %v2034
        %v2770 = vunpack.c.h.b16 %v2034
        %v2771 = vunpack.c.l.b16 %v2035
        %v2772 = vunpack.c.h.b16 %v2035
        %v2773 = vunpack.c.l.b16 %v2036
        %v2774 = vunpack.c.h.b16 %v2036
        %v2775 = vunpack.c.l.b16 %v2037
        %v2776 = vunpack.c.h.b16 %v2037
        %v2777 = vunpack.c.l.b16 %v2038
        %v2778 = vunpack.c.h.b16 %v2038
        %v2779 = vunpack.c.l.b16 %v2039
        %v2780 = vunpack.c.h.b16 %v2039
        %v2781 = vunpack.c.l.b16 %v2040
        %v2782 = vunpack.c.h.b16 %v2040
        %v2783 = vunpack.c.l.b16 %v2041
        %v2784 = vunpack.c.h.b16 %v2041
        %v2785 = vunpack.c.l.b16 %v2042
        %v2786 = vunpack.c.h.b16 %v2042
        %v2787 = vunpack.c.l.b16 %v2043
        %v2788 = vunpack.c.h.b16 %v2043
        %v2789 = vunpack.c.l.b16 %v2044
        %v2790 = vunpack.c.h.b16 %v2044
        %v2791 = vunpack.c.l.b16 %v2045
        %v2792 = vunpack.c.h.b16 %v2045
        %v2793 = vunpack.c.l.b16 %v2046
        %v2794 = vunpack.c.h.b16 %v2046
        %v2795 = vunpack.c.l.b16 %v2047
        %v2796 = vunpack.c.h.b16 %v2047
        %v2797 = vunpack.c.l.b16 %v2048
        %v2798 = vunpack.c.h.b16 %v2048
        %v2799 = vunpack.c.l.b16 %v2049
        %v2800 = vunpack.c.h.b16 %v2049
        %v2801 = vunpack.c.l.b16 %v2050
        %v2802 = vunpack.c.h.b16 %v2050
        %v2803 = vunpack.c.l.b16 %v2051
        %v2804 = vunpack.c.h.b16 %v2051
        %v2805 = vunpack.c.l.b16 %v2052
        %v2806 = vunpack.c.h.b16 %v2052
        %v2807 = vunpack.c.l.b16 %v2053
        %v2808 = vunpack.c.h.b16 %v2053
        %v2809 = vunpack.c.l.b16 %v2054
        %v2810 = vunpack.c.h.b16 %v2054
        %v2811 = vunpack.c.l.b16 %v2055
        %v2812 = vunpack.c.h.b16 %v2055
        %v2813 = vunpack.c.l.b16 %v2056
        %v2814 = vunpack.c.h.b16 %v2056
        %v2815 = vunpack.c.l.b16 %v2057
        %v2816 = vunpack.c.h.b16 %v2057
        %v2817 = vunpack.c.l.b16 %v2058
        %v2818 = vunpack.c.h.b16 %v2058
        %v2819 = vunpack.c.l.b16 %v2059
        %v2820 = vunpack.c.h.b16 %v2059
        %v2821 = vunpack.c.l.b16 %v2060
        %v2822 = vunpack.c.h.b16 %v2060
        %v2823 = vunpack.c.l.b16 %v2061
        %v2824 = vunpack.c.h.b16 %v2061
        %v2825 = vunpack.c.l.b16 %v2062
        %v2826 = vunpack.c.h.b16 %v2062
        %v2827 = vunpack.c.l.b16 %v2063
        %v2828 = vunpack.c.h.b16 %v2063
        %v2829 = vunpack.c.l.b16 %v2064
        %v2830 = vunpack.c.h.b16 %v2064
        %v2831 = vunpack.c.l.b16 %v2065
        %v2832 = vunpack.c.h.b16 %v2065
        %v2833 = vunpack.c.l.b16 %v2066
        %v2834 = vunpack.c.h.b16 %v2066
        %v2835 = vunpack.c.l.b16 %v2067
        %v2836 = vunpack.c.h.b16 %v2067
        %v2837 = vunpack.c.l.b16 %v2068
        %v2838 = vunpack.c.h.b16 %v2068
        %v2839 = vunpack.c.l.b16 %v2069
        %v2840 = vunpack.c.h.b16 %v2069
        %v2841 = vunpack.c.l.b16 %v2070
        %v2842 = vunpack.c.h.b16 %v2070
        %v2843 = vunpack.c.l.b16 %v2071
        %v2844 = vunpack.c.h.b16 %v2071
        %v2845 = vunpack.c.l.b16 %v2072
        %v2846 = vunpack.c.h.b16 %v2072
        %v2847 = vunpack.c.l.b16 %v2073
        %v2848 = vunpack.c.h.b16 %v2073
        %v2849 = vunpack.c.l.b16 %v2074
        %v2850 = vunpack.c.h.b16 %v2074
        %v2851 = vunpack.c.l.b16 %v2075
        %v2852 = vunpack.c.h.b16 %v2075
        %v2853 = vunpack.c.l.b16 %v2076
        %v2854 = vunpack.c.h.b16 %v2076
        %v2855 = vunpack.c.l.b16 %v2077
        %v2856 = vunpack.c.h.b16 %v2077
        %v2857 = vunpack.c.l.b16 %v2078
        %v2858 = vunpack.c.h.b16 %v2078
        %v2859 = vunpack.c.l.b16 %v2079
        %v2860 = vunpack.c.h.b16 %v2079
        %v2861 = vunpack.c.l.b16 %v2080
        %v2862 = vunpack.c.h.b16 %v2080
        %v2863 = vunpack.c.l.b16 %v2081
        %v2864 = vunpack.c.h.b16 %v2081
        %v2865 = vunpack.c.l.b16 %v2082
        %v2866 = vunpack.c.h.b16 %v2082
        %v2867 = vunpack.c.l.b16 %v2083
        %v2868 = vunpack.c.h.b16 %v2083
        %v2869 = vunpack.c.l.b16 %v2084
        %v2870 = vunpack.c.h.b16 %v2084
        %v2871 = vunpack.c.l.b16 %v2085
        %v2872 = vunpack.c.h.b16 %v2085
        %v2873 = vunpack.c.l.b16 %v2086
        %v2874 = vunpack.c.h.b16 %v2086
        %v2875 = vunpack.c.l.b16 %v2087
        %v2876 = vunpack.c.h.b16 %v2087
        %v2877 = vunpack.c.l.b16 %v2088
        %v2878 = vunpack.c.h.b16 %v2088
        %v2879 = vunpack.c.l.b16 %v2089
        %v2880 = vunpack.c.h.b16 %v2089
        %v2881 = vunpack.c.l.b16 %v2090
        %v2882 = vunpack.c.h.b16 %v2090
        %v2883 = vunpack.c.l.b16 %v2091
        %v2884 = vunpack.c.h.b16 %v2091
        %v2885 = vunpack.c.l.b16 %v2092
        %v2886 = vunpack.c.h.b16 %v2092
        %v2887 = vunpack.c.l.b16 %v2093
        %v2888 = vunpack.c.h.b16 %v2093
        %v2889 = vunpack.c.l.b16 %v2094
        %v2890 = vunpack.c.h.b16 %v2094
        %v2891 = vunpack.c.l.b16 %v2095
        %v2892 = vunpack.c.h.b16 %v2095
        %v2893 = vunpack.c.l.b16 %v2096
        %v2894 = vunpack.c.h.b16 %v2096
        %v2895 = vunpack.c.l.b16 %v2097
        %v2896 = vunpack.c.h.b16 %v2097
        %v2897 = vunpack.c.l.b16 %v2098
        %v2898 = vunpack.c.h.b16 %v2098
        %v2899 = vunpack.c.l.b16 %v2099
        %v2900 = vunpack.c.h.b16 %v2099
        %v2901 = vunpack.c.l.b16 %v2100
        %v2902 = vunpack.c.h.b16 %v2100
        %v2903 = vunpack.c.l.b16 %v2101
        %v2904 = vunpack.c.h.b16 %v2101
        %v2905 = vunpack.c.l.b16 %v2102
        %v2906 = vunpack.c.h.b16 %v2102
        %v2907 = vunpack.c.l.b16 %v2103
        %v2908 = vunpack.c.h.b16 %v2103
        %v2909 = vunpack.c.l.b16 %v2104
        %v2910 = vunpack.c.h.b16 %v2104
        %v2911 = vunpack.c.l.b16 %v2105
        %v2912 = vunpack.c.h.b16 %v2105
        %v2913 = vunpack.c.l.b16 %v2106
        %v2914 = vunpack.c.h.b16 %v2106
        %v2915 = vunpack.c.l.b16 %v2107
        %v2916 = vunpack.c.h.b16 %v2107
        %v2917 = vunpack.c.l.b16 %v2108
        %v2918 = vunpack.c.h.b16 %v2108
        %v2919 = vpack.c.b16 %v2415, %v2407
        %v2920 = vpack.c.b16 %v2416, %v2408
        %v2921 = vpack.c.b16 %v2417, %v2409
        %v2922 = vpack.c.b16 %v2418, %v2410
        %v2923 = vpack.c.b16 %v2419, %v2411
        %v2924 = vpack.c.b16 %v2420, %v2412
        %v2925 = vpack.c.b16 %v2421, %v2413
        %v2926 = vpack.c.b16 %v2422, %v2414
        %v2927 = vpack.c.b16 %v2431, %v2423
        %v2928 = vpack.c.b16 %v2432, %v2424
        %v2929 = vpack.c.b16 %v2433, %v2425
        %v2930 = vpack.c.b16 %v2434, %v2426
        %v2931 = vpack.c.b16 %v2435, %v2427
        %v2932 = vpack.c.b16 %v2436, %v2428
        %v2933 = vpack.c.b16 %v2437, %v2429
        %v2934 = vpack.c.b16 %v2438, %v2430
        %v2935 = vpack.c.b16 %v2447, %v2439
        %v2936 = vpack.c.b16 %v2448, %v2440
        %v2937 = vpack.c.b16 %v2449, %v2441
        %v2938 = vpack.c.b16 %v2450, %v2442
        %v2939 = vpack.c.b16 %v2451, %v2443
        %v2940 = vpack.c.b16 %v2452, %v2444
        %v2941 = vpack.c.b16 %v2453, %v2445
        %v2942 = vpack.c.b16 %v2454, %v2446
        %v2943 = vpack.c.b16 %v2463, %v2455
        %v2944 = vpack.c.b16 %v2464, %v2456
        %v2945 = vpack.c.b16 %v2465, %v2457
        %v2946 = vpack.c.b16 %v2466, %v2458
        %v2947 = vpack.c.b16 %v2467, %v2459
        %v2948 = vpack.c.b16 %v2468, %v2460
        %v2949 = vpack.c.b16 %v2469, %v2461
        %v2950 = vpack.c.b16 %v2470, %v2462
        %v2951 = vpack.c.b16 %v2479, %v2471
        %v2952 = vpack.c.b16 %v2480, %v2472
        %v2953 = vpack.c.b16 %v2481, %v2473
        %v2954 = vpack.c.b16 %v2482, %v2474
        %v2955 = vpack.c.b16 %v2483, %v2475
        %v2956 = vpack.c.b16 %v2484, %v2476
        %v2957 = vpack.c.b16 %v2485, %v2477
        %v2958 = vpack.c.b16 %v2486, %v2478
        %v2959 = vpack.c.b16 %v2495, %v2487
        %v2960 = vpack.c.b16 %v2496, %v2488
        %v2961 = vpack.c.b16 %v2497, %v2489
        %v2962 = vpack.c.b16 %v2498, %v2490
        %v2963 = vpack.c.b16 %v2499, %v2491
        %v2964 = vpack.c.b16 %v2500, %v2492
        %v2965 = vpack.c.b16 %v2501, %v2493
        %v2966 = vpack.c.b16 %v2502, %v2494
        %v2967 = vpack.c.b16 %v2511, %v2503
        %v2968 = vpack.c.b16 %v2512, %v2504
        %v2969 = vpack.c.b16 %v2513, %v2505
        %v2970 = vpack.c.b16 %v2514, %v2506
        %v2971 = vpack.c.b16 %v2515, %v2507
        %v2972 = vpack.c.b16 %v2516, %v2508
        %v2973 = vpack.c.b16 %v2517, %v2509
        %v2974 = vpack.c.b16 %v2518, %v2510
        %v2975 = vpack.c.b16 %v2527, %v2519
        %v2976 = vpack.c.b16 %v2528, %v2520
        %v2977 = vpack.c.b16 %v2529, %v2521
        %v2978 = vpack.c.b16 %v2530, %v2522
        %v2979 = vpack.c.b16 %v2531, %v2523
        %v2980 = vpack.c.b16 %v2532, %v2524
        %v2981 = vpack.c.b16 %v2533, %v2525
        %v2982 = vpack.c.b16 %v2534, %v2526
        %v2983 = vpack.c.b16 %v2543, %v2535
        %v2984 = vpack.c.b16 %v2544, %v2536
        %v2985 = vpack.c.b16 %v2545, %v2537
        %v2986 = vpack.c.b16 %v2546, %v2538
        %v2987 = vpack.c.b16 %v2547, %v2539
        %v2988 = vpack.c.b16 %v2548, %v2540
        %v2989 = vpack.c.b16 %v2549, %v2541
        %v2990 = vpack.c.b16 %v2550, %v2542
        %v2991 = vpack.c.b16 %v2559, %v2551
        %v2992 = vpack.c.b16 %v2560, %v2552
        %v2993 = vpack.c.b16 %v2561, %v2553
        %v2994 = vpack.c.b16 %v2562, %v2554
        %v2995 = vpack.c.b16 %v2563, %v2555
        %v2996 = vpack.c.b16 %v2564, %v2556
        %v2997 = vpack.c.b16 %v2565, %v2557
        %v2998 = vpack.c.b16 %v2566, %v2558
        %v2999 = vpack.c.b16 %v2575, %v2567
        %v3000 = vpack.c.b16 %v2576, %v2568
        %v3001 = vpack.c.b16 %v2577, %v2569
        %v3002 = vpack.c.b16 %v2578, %v2570
        %v3003 = vpack.c.b16 %v2579, %v2571
        %v3004 = vpack.c.b16 %v2580, %v2572
        %v3005 = vpack.c.b16 %v2581, %v2573
        %v3006 = vpack.c.b16 %v2582, %v2574
        %v3007 = vpack.c.b16 %v2591, %v2583
        %v3008 = vpack.c.b16 %v2592, %v2584
        %v3009 = vpack.c.b16 %v2593, %v2585
        %v3010 = vpack.c.b16 %v2594, %v2586
        %v3011 = vpack.c.b16 %v2595, %v2587
        %v3012 = vpack.c.b16 %v2596, %v2588
        %v3013 = vpack.c.b16 %v2597, %v2589
        %v3014 = vpack.c.b16 %v2598, %v2590
        %v3015 = vpack.c.b16 %v2607, %v2599
        %v3016 = vpack.c.b16 %v2608, %v2600
        %v3017 = vpack.c.b16 %v2609, %v2601
        %v3018 = vpack.c.b16 %v2610, %v2602
        %v3019 = vpack.c.b16 %v2611, %v2603
        %v3020 = vpack.c.b16 %v2612, %v2604
        %v3021 = vpack.c.b16 %v2613, %v2605
        %v3022 = vpack.c.b16 %v2614, %v2606
        %v3023 = vpack.c.b16 %v2623, %v2615
        %v3024 = vpack.c.b16 %v2624, %v2616
        %v3025 = vpack.c.b16 %v2625, %v2617
        %v3026 = vpack.c.b16 %v2626, %v2618
        %v3027 = vpack.c.b16 %v2627, %v2619
        %v3028 = vpack.c.b16 %v2628, %v2620
        %v3029 = vpack.c.b16 %v2629, %v2621
        %v3030 = vpack.c.b16 %v2630, %v2622
        %v3031 = vpack.c.b16 %v2639, %v2631
        %v3032 = vpack.c.b16 %v2640, %v2632
        %v3033 = vpack.c.b16 %v2641, %v2633
        %v3034 = vpack.c.b16 %v2642, %v2634
        %v3035 = vpack.c.b16 %v2643, %v2635
        %v3036 = vpack.c.b16 %v2644, %v2636
        %v3037 = vpack.c.b16 %v2645, %v2637
        %v3038 = vpack.c.b16 %v2646, %v2638
        %v3039 = vpack.c.b16 %v2655, %v2647
        %v3040 = vpack.c.b16 %v2656, %v2648
        %v3041 = vpack.c.b16 %v2657, %v2649
        %v3042 = vpack.c.b16 %v2658, %v2650
        %v3043 = vpack.c.b16 %v2659, %v2651
        %v3044 = vpack.c.b16 %v2660, %v2652
        %v3045 = vpack.c.b16 %v2661, %v2653
        %v3046 = vpack.c.b16 %v2662, %v2654
        %v3047 = vpack.c.b16 %v2671, %v2663
        %v3048 = vpack.c.b16 %v2672, %v2664
        %v3049 = vpack.c.b16 %v2673, %v2665
        %v3050 = vpack.c.b16 %v2674, %v2666
        %v3051 = vpack.c.b16 %v2675, %v2667
        %v3052 = vpack.c.b16 %v2676, %v2668
        %v3053 = vpack.c.b16 %v2677, %v2669
        %v3054 = vpack.c.b16 %v2678, %v2670
        %v3055 = vpack.c.b16 %v2687, %v2679
        %v3056 = vpack.c.b16 %v2688, %v2680
        %v3057 = vpack.c.b16 %v2689, %v2681
        %v3058 = vpack.c.b16 %v2690, %v2682
        %v3059 = vpack.c.b16 %v2691, %v2683
        %v3060 = vpack.c.b16 %v2692, %v2684
        %v3061 = vpack.c.b16 %v2693, %v2685
        %v3062 = vpack.c.b16 %v2694, %v2686
        %v3063 = vpack.c.b16 %v2703, %v2695
        %v3064 = vpack.c.b16 %v2704, %v2696
        %v3065 = vpack.c.b16 %v2705, %v2697
        %v3066 = vpack.c.b16 %v2706, %v2698
        %v3067 = vpack.c.b16 %v2707, %v2699
        %v3068 = vpack.c.b16 %v2708, %v2700
        %v3069 = vpack.c.b16 %v2709, %v2701
        %v3070 = vpack.c.b16 %v2710, %v2702
        %v3071 = vpack.c.b16 %v2719, %v2711
        %v3072 = vpack.c.b16 %v2720, %v2712
        %v3073 = vpack.c.b16 %v2721, %v2713
        %v3074 = vpack.c.b16 %v2722, %v2714
        %v3075 = vpack.c.b16 %v2723, %v2715
        %v3076 = vpack.c.b16 %v2724, %v2716
        %v3077 = vpack.c.b16 %v2725, %v2717
        %v3078 = vpack.c.b16 %v2726, %v2718
        %v3079 = vpack.c.b16 %v2735, %v2727
        %v3080 = vpack.c.b16 %v2736, %v2728
        %v3081 = vpack.c.b16 %v2737, %v2729
        %v3082 = vpack.c.b16 %v2738, %v2730
        %v3083 = vpack.c.b16 %v2739, %v2731
        %v3084 = vpack.c.b16 %v2740, %v2732
        %v3085 = vpack.c.b16 %v2741, %v2733
        %v3086 = vpack.c.b16 %v2742, %v2734
        %v3087 = vpack.c.b16 %v2751, %v2743
        %v3088 = vpack.c.b16 %v2752, %v2744
        %v3089 = vpack.c.b16 %v2753, %v2745
        %v3090 = vpack.c.b16 %v2754, %v2746
        %v3091 = vpack.c.b16 %v2755, %v2747
        %v3092 = vpack.c.b16 %v2756, %v2748
        %v3093 = vpack.c.b16 %v2757, %v2749
        %v3094 = vpack.c.b16 %v2758, %v2750
        %v3095 = vpack.c.b16 %v2767, %v2759
        %v3096 = vpack.c.b16 %v2768, %v2760
        %v3097 = vpack.c.b16 %v2769, %v2761
        %v3098 = vpack.c.b16 %v2770, %v2762
        %v3099 = vpack.c.b16 %v2771, %v2763
        %v3100 = vpack.c.b16 %v2772, %v2764
        %v3101 = vpack.c.b16 %v2773, %v2765
        %v3102 = vpack.c.b16 %v2774, %v2766
        %v3103 = vpack.c.b16 %v2783, %v2775
        %v3104 = vpack.c.b16 %v2784, %v2776
        %v3105 = vpack.c.b16 %v2785, %v2777
        %v3106 = vpack.c.b16 %v2786, %v2778
        %v3107 = vpack.c.b16 %v2787, %v2779
        %v3108 = vpack.c.b16 %v2788, %v2780
        %v3109 = vpack.c.b16 %v2789, %v2781
        %v3110 = vpack.c.b16 %v2790, %v2782
        %v3111 = vpack.c.b16 %v2799, %v2791
        %v3112 = vpack.c.b16 %v2800, %v2792
        %v3113 = vpack.c.b16 %v2801, %v2793
        %v3114 = vpack.c.b16 %v2802, %v2794
        %v3115 = vpack.c.b16 %v2803, %v2795
        %v3116 = vpack.c.b16 %v2804, %v2796
        %v3117 = vpack.c.b16 %v2805, %v2797
        %v3118 = vpack.c.b16 %v2806, %v2798
        %v3119 = vpack.c.b16 %v2815, %v2807
        %v3120 = vpack.c.b16 %v2816, %v2808
        %v3121 = vpack.c.b16 %v2817, %v2809
        %v3122 = vpack.c.b16 %v2818, %v2810
        %v3123 = vpack.c.b16 %v2819, %v2811
        %v3124 = vpack.c.b16 %v2820, %v2812
        %v3125 = vpack.c.b16 %v2821, %v2813
        %v3126 = vpack.c.b16 %v2822, %v2814
        %v3127 = vpack.c.b16 %v2831, %v2823
        %v3128 = vpack.c.b16 %v2832, %v2824
        %v3129 = vpack.c.b16 %v2833, %v2825
        %v3130 = vpack.c.b16 %v2834, %v2826
        %v3131 = vpack.c.b16 %v2835, %v2827
        %v3132 = vpack.c.b16 %v2836, %v2828
        %v3133 = vpack.c.b16 %v2837, %v2829
        %v3134 = vpack.c.b16 %v2838, %v2830
        %v3135 = vpack.c.b16 %v2847, %v2839
        %v3136 = vpack.c.b16 %v2848, %v2840
        %v3137 = vpack.c.b16 %v2849, %v2841
        %v3138 = vpack.c.b16 %v2850, %v2842
        %v3139 = vpack.c.b16 %v2851, %v2843
        %v3140 = vpack.c.b16 %v2852, %v2844
        %v3141 = vpack.c.b16 %v2853, %v2845
        %v3142 = vpack.c.b16 %v2854, %v2846
        %v3143 = vpack.c.b16 %v2863, %v2855
        %v3144 = vpack.c.b16 %v2864, %v2856
        %v3145 = vpack.c.b16 %v2865, %v2857
        %v3146 = vpack.c.b16 %v2866, %v2858
        %v3147 = vpack.c.b16 %v2867, %v2859
        %v3148 = vpack.c.b16 %v2868, %v2860
        %v3149 = vpack.c.b16 %v2869, %v2861
        %v3150 = vpack.c.b16 %v2870, %v2862
        %v3151 = vpack.c.b16 %v2879, %v2871
        %v3152 = vpack.c.b16 %v2880, %v2872
        %v3153 = vpack.c.b16 %v2881, %v2873
        %v3154 = vpack.c.b16 %v2882, %v2874
        %v3155 = vpack.c.b16 %v2883, %v2875
        %v3156 = vpack.c.b16 %v2884, %v2876
        %v3157 = vpack.c.b16 %v2885, %v2877
        %v3158 = vpack.c.b16 %v2886, %v2878
        %v3159 = vpack.c.b16 %v2895, %v2887
        %v3160 = vpack.c.b16 %v2896, %v2888
        %v3161 = vpack.c.b16 %v2897, %v2889
        %v3162 = vpack.c.b16 %v2898, %v2890
        %v3163 = vpack.c.b16 %v2899, %v2891
        %v3164 = vpack.c.b16 %v2900, %v2892
        %v3165 = vpack.c.b16 %v2901, %v2893
        %v3166 = vpack.c.b16 %v2902, %v2894
        %v3167 = vpack.c.b16 %v2911, %v2903
        %v3168 = vpack.c.b16 %v2912, %v2904
        %v3169 = vpack.c.b16 %v2913, %v2905
        %v3170 = vpack.c.b16 %v2914, %v2906
        %v3171 = vpack.c.b16 %v2915, %v2907
        %v3172 = vpack.c.b16 %v2916, %v2908
        %v3173 = vpack.c.b16 %v2917, %v2909
        %v3174 = vpack.c.b16 %v2918, %v2910
        %3431 = vmatprep.subr.bf16.mxu0 %v2920
        %3432 = vmatpush1.bf16.msra.mxu0 %v2919
        %3433 = vmatprep.subr.bf16.mxu0 %v2928
        %3434 = vmatpush1.bf16.msra.mxu0 %v2927
        %3435 = vmatprep.subr.bf16.mxu0 %v2936
        %3436 = vmatpush1.bf16.msra.mxu0 %v2935
        %3437 = vmatprep.subr.bf16.mxu0 %v2944
        %3438 = vmatpush1.bf16.msra.mxu0 %v2943
        %3439 = vmatprep.subr.bf16.mxu0 %v2952
        %3440 = vmatpush1.bf16.msra.mxu0 %v2951
        %3441 = vmatprep.subr.bf16.mxu0 %v2960
        %3442 = vmatpush1.bf16.msra.mxu0 %v2959
        %3443 = vmatprep.subr.bf16.mxu0 %v2968
        %3444 = vmatpush1.bf16.msra.mxu0 %v2967
        %3445 = vmatprep.subr.bf16.mxu0 %v2976
        %3446 = vmatpush1.bf16.msra.mxu0 %v2975
        %3447 = vmatprep.subr.bf16.mxu0 %v2984
        %3448 = vmatpush1.bf16.msra.mxu0 %v2983
        %3449 = vmatprep.subr.bf16.mxu0 %v2992
        %3450 = vmatpush1.bf16.msra.mxu0 %v2991
        %3451 = vmatprep.subr.bf16.mxu0 %v3000
        %3452 = vmatpush1.bf16.msra.mxu0 %v2999
        %3453 = vmatprep.subr.bf16.mxu0 %v3008
        %3454 = vmatpush1.bf16.msra.mxu0 %v3007
        %3455 = vmatprep.subr.bf16.mxu0 %v3016
        %3456 = vmatpush1.bf16.msra.mxu0 %v3015
        %3457 = vmatprep.subr.bf16.mxu0 %v3024
        %3458 = vmatpush1.bf16.msra.mxu0 %v3023
        %3459 = vmatprep.subr.bf16.mxu0 %v3032
        %3460 = vmatpush1.bf16.msra.mxu0 %v3031
        %3461 = vmatprep.subr.bf16.mxu0 %v3040
        %3462 = vmatpush1.bf16.msra.mxu0 %v3039
        %3463 = vmatprep.mubr.bf16.mxu0 %v1850
        %3464 = vmatmul.mubr.bf16.gmra.mrb[0].mxu0 %v1849
        %v3465 = vpop.f32.mrb[0].mxu0
        %v3466 = vadd.f32 %v2114, %v3465
        %v3467 = vpop.f32.mrb[0].mxu0
        %v3468 = vadd.f32 %v2118, %v3467
        %v3469 = vpop.f32.mrb[0].mxu0
        %v3470 = vpop.f32.mrb[0].mxu0
        %3471 = vdwg.mxu0
        %3472 = vmatprep.subr.bf16.mxu0 %v3048
        %3473 = vmatpush1.bf16.msra.mxu0 %v3047
        %3474 = vmatprep.subr.bf16.mxu0 %v3056
        %3475 = vmatpush1.bf16.msra.mxu0 %v3055
        %3476 = vmatprep.subr.bf16.mxu0 %v3064
        %3477 = vmatpush1.bf16.msra.mxu0 %v3063
        %3478 = vmatprep.subr.bf16.mxu0 %v3072
        %3479 = vmatpush1.bf16.msra.mxu0 %v3071
        %3480 = vmatprep.subr.bf16.mxu0 %v3080
        %3481 = vmatpush1.bf16.msra.mxu0 %v3079
        %3482 = vmatprep.subr.bf16.mxu0 %v3088
        %3483 = vmatpush1.bf16.msra.mxu0 %v3087
        %3484 = vmatprep.subr.bf16.mxu0 %v3096
        %3485 = vmatpush1.bf16.msra.mxu0 %v3095
        %3486 = vmatprep.subr.bf16.mxu0 %v3104
        %3487 = vmatpush1.bf16.msra.mxu0 %v3103
        %3488 = vmatprep.subr.bf16.mxu0 %v3112
        %3489 = vmatpush1.bf16.msra.mxu0 %v3111
        %3490 = vmatprep.subr.bf16.mxu0 %v3120
        %3491 = vmatpush1.bf16.msra.mxu0 %v3119
        %3492 = vmatprep.subr.bf16.mxu0 %v3128
        %3493 = vmatpush1.bf16.msra.mxu0 %v3127
        %3494 = vmatprep.subr.bf16.mxu0 %v3136
        %3495 = vmatpush1.bf16.msra.mxu0 %v3135
        %3496 = vmatprep.subr.bf16.mxu0 %v3144
        %3497 = vmatpush1.bf16.msra.mxu0 %v3143
        %3498 = vmatprep.subr.bf16.mxu0 %v3152
        %3499 = vmatpush1.bf16.msra.mxu0 %v3151
        %3500 = vmatprep.subr.bf16.mxu0 %v3160
        %3501 = vmatpush1.bf16.msra.mxu0 %v3159
        %3502 = vmatprep.subr.bf16.mxu0 %v3168
        %3503 = vmatpush1.bf16.msra.mxu0 %v3167
        %3504 = vmatprep.mubr.bf16.mxu0 %v1852
        %3505 = vmatmul.mubr.bf16.gmra.mrb[0].mxu0 %v1851
        %v3506 = vpop.f32.mrb[0].mxu0
        %v3507 = vadd.f32 %v3466, %v3506
        %v3508 = vpop.f32.mrb[0].mxu0
        %v3509 = vadd.f32 %v3468, %v3508
        %v3510 = vpop.f32.mrb[0].mxu0
        %v3511 = vpop.f32.mrb[0].mxu0
        %3512 = vdwg.mxu0
        %3513 = vmatprep.subr.bf16.mxu0 %v2922
        %3514 = vmatpush1.bf16.msra.mxu0 %v2921
        %3515 = vmatprep.subr.bf16.mxu0 %v2930
        %3516 = vmatpush1.bf16.msra.mxu0 %v2929
        %3517 = vmatprep.subr.bf16.mxu0 %v2938
        %3518 = vmatpush1.bf16.msra.mxu0 %v2937
        %3519 = vmatprep.subr.bf16.mxu0 %v2946
        %3520 = vmatpush1.bf16.msra.mxu0 %v2945
        %3521 = vmatprep.subr.bf16.mxu0 %v2954
        %3522 = vmatpush1.bf16.msra.mxu0 %v2953
        %3523 = vmatprep.subr.bf16.mxu0 %v2962
        %3524 = vmatpush1.bf16.msra.mxu0 %v2961
        %3525 = vmatprep.subr.bf16.mxu0 %v2970
        %3526 = vmatpush1.bf16.msra.mxu0 %v2969
        %3527 = vmatprep.subr.bf16.mxu0 %v2978
        %3528 = vmatpush1.bf16.msra.mxu0 %v2977
        %3529 = vmatprep.subr.bf16.mxu0 %v2986
        %3530 = vmatpush1.bf16.msra.mxu0 %v2985
        %3531 = vmatprep.subr.bf16.mxu0 %v2994
        %3532 = vmatpush1.bf16.msra.mxu0 %v2993
        %3533 = vmatprep.subr.bf16.mxu0 %v3002
        %3534 = vmatpush1.bf16.msra.mxu0 %v3001
        %3535 = vmatprep.subr.bf16.mxu0 %v3010
        %3536 = vmatpush1.bf16.msra.mxu0 %v3009
        %3537 = vmatprep.subr.bf16.mxu0 %v3018
        %3538 = vmatpush1.bf16.msra.mxu0 %v3017
        %3539 = vmatprep.subr.bf16.mxu0 %v3026
        %3540 = vmatpush1.bf16.msra.mxu0 %v3025
        %3541 = vmatprep.subr.bf16.mxu0 %v3034
        %3542 = vmatpush1.bf16.msra.mxu0 %v3033
        %3543 = vmatprep.subr.bf16.mxu0 %v3042
        %3544 = vmatpush1.bf16.msra.mxu0 %v3041
        %3545 = vmatprep.mubr.bf16.mxu0 %v1850
        %3546 = vmatmul.mubr.bf16.gmra.mrb[0].mxu0 %v1849
        %v3547 = vpop.f32.mrb[0].mxu0
        %v3548 = vadd.f32 %v2122, %v3547
        %v3549 = vpop.f32.mrb[0].mxu0
        %v3550 = vadd.f32 %v2126, %v3549
        %v3551 = vpop.f32.mrb[0].mxu0
        %v3552 = vpop.f32.mrb[0].mxu0
        %3553 = vdwg.mxu0
        %3554 = vmatprep.subr.bf16.mxu0 %v3050
        %3555 = vmatpush1.bf16.msra.mxu0 %v3049
        %3556 = vmatprep.subr.bf16.mxu0 %v3058
        %3557 = vmatpush1.bf16.msra.mxu0 %v3057
        %3558 = vmatprep.subr.bf16.mxu0 %v3066
        %3559 = vmatpush1.bf16.msra.mxu0 %v3065
        %3560 = vmatprep.subr.bf16.mxu0 %v3074
        %3561 = vmatpush1.bf16.msra.mxu0 %v3073
        %3562 = vmatprep.subr.bf16.mxu0 %v3082
        %3563 = vmatpush1.bf16.msra.mxu0 %v3081
        %3564 = vmatprep.subr.bf16.mxu0 %v3090
        %3565 = vmatpush1.bf16.msra.mxu0 %v3089
        %3566 = vmatprep.subr.bf16.mxu0 %v3098
        %3567 = vmatpush1.bf16.msra.mxu0 %v3097
        %3568 = vmatprep.subr.bf16.mxu0 %v3106
        %3569 = vmatpush1.bf16.msra.mxu0 %v3105
        %3570 = vmatprep.subr.bf16.mxu0 %v3114
        %3571 = vmatpush1.bf16.msra.mxu0 %v3113
        %3572 = vmatprep.subr.bf16.mxu0 %v3122
        %3573 = vmatpush1.bf16.msra.mxu0 %v3121
        %3574 = vmatprep.subr.bf16.mxu0 %v3130
        %3575 = vmatpush1.bf16.msra.mxu0 %v3129
        %3576 = vmatprep.subr.bf16.mxu0 %v3138
        %3577 = vmatpush1.bf16.msra.mxu0 %v3137
        %3578 = vmatprep.subr.bf16.mxu0 %v3146
        %3579 = vmatpush1.bf16.msra.mxu0 %v3145
        %3580 = vmatprep.subr.bf16.mxu0 %v3154
        %3581 = vmatpush1.bf16.msra.mxu0 %v3153
        %3582 = vmatprep.subr.bf16.mxu0 %v3162
        %3583 = vmatpush1.bf16.msra.mxu0 %v3161
        %3584 = vmatprep.subr.bf16.mxu0 %v3170
        %3585 = vmatpush1.bf16.msra.mxu0 %v3169
        %3586 = vmatprep.mubr.bf16.mxu0 %v1852
        %3587 = vmatmul.mubr.bf16.gmra.mrb[0].mxu0 %v1851
        %v3588 = vpop.f32.mrb[0].mxu0
        %v3589 = vadd.f32 %v3548, %v3588
        %v3590 = vpop.f32.mrb[0].mxu0
        %v3591 = vadd.f32 %v3550, %v3590
        %v3592 = vpop.f32.mrb[0].mxu0
        %v3593 = vpop.f32.mrb[0].mxu0
        %3594 = vdwg.mxu0
        %3595 = vmatprep.subr.bf16.mxu0 %v2924
        %3596 = vmatpush1.bf16.msra.mxu0 %v2923
        %3597 = vmatprep.subr.bf16.mxu0 %v2932
        %3598 = vmatpush1.bf16.msra.mxu0 %v2931
        %3599 = vmatprep.subr.bf16.mxu0 %v2940
        %3600 = vmatpush1.bf16.msra.mxu0 %v2939
        %3601 = vmatprep.subr.bf16.mxu0 %v2948
        %3602 = vmatpush1.bf16.msra.mxu0 %v2947
        %3603 = vmatprep.subr.bf16.mxu0 %v2956
        %3604 = vmatpush1.bf16.msra.mxu0 %v2955
        %3605 = vmatprep.subr.bf16.mxu0 %v2964
        %3606 = vmatpush1.bf16.msra.mxu0 %v2963
        %3607 = vmatprep.subr.bf16.mxu0 %v2972
        %3608 = vmatpush1.bf16.msra.mxu0 %v2971
        %3609 = vmatprep.subr.bf16.mxu0 %v2980
        %3610 = vmatpush1.bf16.msra.mxu0 %v2979
        %3611 = vmatprep.subr.bf16.mxu0 %v2988
        %3612 = vmatpush1.bf16.msra.mxu0 %v2987
        %3613 = vmatprep.subr.bf16.mxu0 %v2996
        %3614 = vmatpush1.bf16.msra.mxu0 %v2995
        %3615 = vmatprep.subr.bf16.mxu0 %v3004
        %3616 = vmatpush1.bf16.msra.mxu0 %v3003
        %3617 = vmatprep.subr.bf16.mxu0 %v3012
        %3618 = vmatpush1.bf16.msra.mxu0 %v3011
        %3619 = vmatprep.subr.bf16.mxu0 %v3020
        %3620 = vmatpush1.bf16.msra.mxu0 %v3019
        %3621 = vmatprep.subr.bf16.mxu0 %v3028
        %3622 = vmatpush1.bf16.msra.mxu0 %v3027
        %3623 = vmatprep.subr.bf16.mxu0 %v3036
        %3624 = vmatpush1.bf16.msra.mxu0 %v3035
        %3625 = vmatprep.subr.bf16.mxu0 %v3044
        %3626 = vmatpush1.bf16.msra.mxu0 %v3043
        %3627 = vmatprep.mubr.bf16.mxu0 %v1850
        %3628 = vmatmul.mubr.bf16.gmra.mrb[0].mxu0 %v1849
        %v3629 = vpop.f32.mrb[0].mxu0
        %v3630 = vadd.f32 %v2130, %v3629
        %v3631 = vpop.f32.mrb[0].mxu0
        %v3632 = vadd.f32 %v2134, %v3631
        %v3633 = vpop.f32.mrb[0].mxu0
        %v3634 = vpop.f32.mrb[0].mxu0
        %3635 = vdwg.mxu0
        %3636 = vmatprep.subr.bf16.mxu0 %v3052
        %3637 = vmatpush1.bf16.msra.mxu0 %v3051
        %3638 = vmatprep.subr.bf16.mxu0 %v3060
        %3639 = vmatpush1.bf16.msra.mxu0 %v3059
        %3640 = vmatprep.subr.bf16.mxu0 %v3068
        %3641 = vmatpush1.bf16.msra.mxu0 %v3067
        %3642 = vmatprep.subr.bf16.mxu0 %v3076
        %3643 = vmatpush1.bf16.msra.mxu0 %v3075
        %3644 = vmatprep.subr.bf16.mxu0 %v3084
        %3645 = vmatpush1.bf16.msra.mxu0 %v3083
        %3646 = vmatprep.subr.bf16.mxu0 %v3092
        %3647 = vmatpush1.bf16.msra.mxu0 %v3091
        %3648 = vmatprep.subr.bf16.mxu0 %v3100
        %3649 = vmatpush1.bf16.msra.mxu0 %v3099
        %3650 = vmatprep.subr.bf16.mxu0 %v3108
        %3651 = vmatpush1.bf16.msra.mxu0 %v3107
        %3652 = vmatprep.subr.bf16.mxu0 %v3116
        %3653 = vmatpush1.bf16.msra.mxu0 %v3115
        %3654 = vmatprep.subr.bf16.mxu0 %v3124
        %3655 = vmatpush1.bf16.msra.mxu0 %v3123
        %3656 = vmatprep.subr.bf16.mxu0 %v3132
        %3657 = vmatpush1.bf16.msra.mxu0 %v3131
        %3658 = vmatprep.subr.bf16.mxu0 %v3140
        %3659 = vmatpush1.bf16.msra.mxu0 %v3139
        %3660 = vmatprep.subr.bf16.mxu0 %v3148
        %3661 = vmatpush1.bf16.msra.mxu0 %v3147
        %3662 = vmatprep.subr.bf16.mxu0 %v3156
        %3663 = vmatpush1.bf16.msra.mxu0 %v3155
        %3664 = vmatprep.subr.bf16.mxu0 %v3164
        %3665 = vmatpush1.bf16.msra.mxu0 %v3163
        %3666 = vmatprep.subr.bf16.mxu0 %v3172
        %3667 = vmatpush1.bf16.msra.mxu0 %v3171
        %3668 = vmatprep.mubr.bf16.mxu0 %v1852
        %3669 = vmatmul.mubr.bf16.gmra.mrb[0].mxu0 %v1851
        %v3670 = vpop.f32.mrb[0].mxu0
        %v3671 = vadd.f32 %v3630, %v3670
        %v3672 = vpop.f32.mrb[0].mxu0
        %v3673 = vadd.f32 %v3632, %v3672
        %v3674 = vpop.f32.mrb[0].mxu0
        %v3675 = vpop.f32.mrb[0].mxu0
        %3676 = vdwg.mxu0
        %3677 = vmatprep.subr.bf16.mxu0 %v2926
        %3678 = vmatpush1.bf16.msra.mxu0 %v2925
        %3679 = vmatprep.subr.bf16.mxu0 %v2934
        %3680 = vmatpush1.bf16.msra.mxu0 %v2933
        %3681 = vmatprep.subr.bf16.mxu0 %v2942
        %3682 = vmatpush1.bf16.msra.mxu0 %v2941
        %3683 = vmatprep.subr.bf16.mxu0 %v2950
        %3684 = vmatpush1.bf16.msra.mxu0 %v2949
        %3685 = vmatprep.subr.bf16.mxu0 %v2958
        %3686 = vmatpush1.bf16.msra.mxu0 %v2957
        %3687 = vmatprep.subr.bf16.mxu0 %v2966
        %3688 = vmatpush1.bf16.msra.mxu0 %v2965
        %3689 = vmatprep.subr.bf16.mxu0 %v2974
        %3690 = vmatpush1.bf16.msra.mxu0 %v2973
        %3691 = vmatprep.subr.bf16.mxu0 %v2982
        %3692 = vmatpush1.bf16.msra.mxu0 %v2981
        %3693 = vmatprep.subr.bf16.mxu0 %v2990
        %3694 = vmatpush1.bf16.msra.mxu0 %v2989
        %3695 = vmatprep.subr.bf16.mxu0 %v2998
        %3696 = vmatpush1.bf16.msra.mxu0 %v2997
        %3697 = vmatprep.subr.bf16.mxu0 %v3006
        %3698 = vmatpush1.bf16.msra.mxu0 %v3005
        %3699 = vmatprep.subr.bf16.mxu0 %v3014
        %3700 = vmatpush1.bf16.msra.mxu0 %v3013
        %3701 = vmatprep.subr.bf16.mxu0 %v3022
        %3702 = vmatpush1.bf16.msra.mxu0 %v3021
        %3703 = vmatprep.subr.bf16.mxu0 %v3030
        %3704 = vmatpush1.bf16.msra.mxu0 %v3029
        %3705 = vmatprep.subr.bf16.mxu0 %v3038
        %3706 = vmatpush1.bf16.msra.mxu0 %v3037
        %3707 = vmatprep.subr.bf16.mxu0 %v3046
        %3708 = vmatpush1.bf16.msra.mxu0 %v3045
        %3709 = vmatprep.mubr.bf16.mxu0 %v1850
        %3710 = vmatmul.mubr.bf16.gmra.mrb[0].mxu0 %v1849
        %v3711 = vpop.f32.mrb[0].mxu0
        %v3712 = vadd.f32 %v2138, %v3711
        %v3713 = vpop.f32.mrb[0].mxu0
        %v3714 = vadd.f32 %v2142, %v3713
        %v3715 = vpop.f32.mrb[0].mxu0
        %v3716 = vpop.f32.mrb[0].mxu0
        %3717 = vdwg.mxu0
        %3718 = vmatprep.subr.bf16.mxu0 %v3054
        %3719 = vmatpush1.bf16.msra.mxu0 %v3053
        %3720 = vmatprep.subr.bf16.mxu0 %v3062
        %3721 = vmatpush1.bf16.msra.mxu0 %v3061
        %3722 = vmatprep.subr.bf16.mxu0 %v3070
        %3723 = vmatpush1.bf16.msra.mxu0 %v3069
        %3724 = vmatprep.subr.bf16.mxu0 %v3078
        %3725 = vmatpush1.bf16.msra.mxu0 %v3077
        %3726 = vmatprep.subr.bf16.mxu0 %v3086
        %3727 = vmatpush1.bf16.msra.mxu0 %v3085
        %3728 = vmatprep.subr.bf16.mxu0 %v3094
        %3729 = vmatpush1.bf16.msra.mxu0 %v3093
        %3730 = vmatprep.subr.bf16.mxu0 %v3102
        %3731 = vmatpush1.bf16.msra.mxu0 %v3101
        %3732 = vmatprep.subr.bf16.mxu0 %v3110
        %3733 = vmatpush1.bf16.msra.mxu0 %v3109
        %3734 = vmatprep.subr.bf16.mxu0 %v3118
        %3735 = vmatpush1.bf16.msra.mxu0 %v3117
        %3736 = vmatprep.subr.bf16.mxu0 %v3126
        %3737 = vmatpush1.bf16.msra.mxu0 %v3125
        %3738 = vmatprep.subr.bf16.mxu0 %v3134
        %3739 = vmatpush1.bf16.msra.mxu0 %v3133
        %3740 = vmatprep.subr.bf16.mxu0 %v3142
        %3741 = vmatpush1.bf16.msra.mxu0 %v3141
        %3742 = vmatprep.subr.bf16.mxu0 %v3150
        %3743 = vmatpush1.bf16.msra.mxu0 %v3149
        %3744 = vmatprep.subr.bf16.mxu0 %v3158
        %3745 = vmatpush1.bf16.msra.mxu0 %v3157
        %3746 = vmatprep.subr.bf16.mxu0 %v3166
        %3747 = vmatpush1.bf16.msra.mxu0 %v3165
        %3748 = vmatprep.subr.bf16.mxu0 %v3174
        %3749 = vmatpush1.bf16.msra.mxu0 %v3173
        %3750 = vmatprep.mubr.bf16.mxu0 %v1852
        %3751 = vmatmul.mubr.bf16.gmra.mrb[0].mxu0 %v1851
        %v3752 = vpop.f32.mrb[0].mxu0
        %v3753 = vadd.f32 %v3712, %v3752
        %v3754 = vpop.f32.mrb[0].mxu0
        %v3755 = vadd.f32 %v3714, %v3754
        %v3756 = vpop.f32.mrb[0].mxu0
        %v3757 = vpop.f32.mrb[0].mxu0
        %3758 = vdwg.mxu0
        %v3759 = vmax.f32 %v3507, 0.0
        %v3760 = vmax.f32 %v3509, 0.0
        %v3761 = vmax.f32 %v3589, 0.0
        %v3762 = vmax.f32 %v3591, 0.0
        %v3763 = vmax.f32 %v3671, 0.0
        %v3764 = vmax.f32 %v3673, 0.0
        %v3765 = vmax.f32 %v3753, 0.0
        %v3766 = vmax.f32 %v3755, 0.0
        %v3767 = vpack.c.bf16 %v3759, %v3759
        %v3768 = vpack.c.bf16 %v3760, %v3760
        %v3769 = vpack.c.bf16 %v3761, %v3761
        %v3770 = vpack.c.bf16 %v3762, %v3762
        %v3771 = vpack.c.bf16 %v3763, %v3763
        %v3772 = vpack.c.bf16 %v3764, %v3764
        %v3773 = vpack.c.bf16 %v3765, %v3765
        %v3774 = vpack.c.bf16 %v3766, %v3766
        %v3775 = vld [vmem:[%s662] sm:$0xff]
        %v3776 = vld [vmem:[%s662 + $0x8] sm:$0xff]
        %v3777 = vld [vmem:[%s662 + $0x10] sm:$0xff]
        %v3778 = vld [vmem:[%s662 + $0x18] sm:$0xff]
        %v3779 = vld [vmem:[%s662 + $0x20] sm:$0xff]
        %v3780 = vld [vmem:[%s662 + $0x28] sm:$0xff]
        %v3781 = vld [vmem:[%s662 + $0x30] sm:$0xff]
        %v3782 = vld [vmem:[%s662 + $0x38] sm:$0xff]
        %v3783 = vld [vmem:[%s662 + $0x40] sm:$0xff]
        %v3784 = vld [vmem:[%s662 + $0x48] sm:$0xff]
        %v3785 = vld [vmem:[%s662 + $0x50] sm:$0xff]
        %v3786 = vld [vmem:[%s662 + $0x58] sm:$0xff]
        %v3787 = vld [vmem:[%s662 + $0x60] sm:$0xff]
        %v3788 = vld [vmem:[%s662 + $0x68] sm:$0xff]
        %v3789 = vld [vmem:[%s662 + $0x70] sm:$0xff]
        %v3790 = vld [vmem:[%s662 + $0x78] sm:$0xff]
        %v3791 = vld [vmem:[%s662 + $0x80] sm:$0xff]
        %v3792 = vld [vmem:[%s662 + $0x88] sm:$0xff]
        %v3793 = vld [vmem:[%s662 + $0x90] sm:$0xff]
        %v3794 = vld [vmem:[%s662 + $0x98] sm:$0xff]
        %v3795 = vld [vmem:[%s662 + $0xa0] sm:$0xff]
        %v3796 = vld [vmem:[%s662 + $0xa8] sm:$0xff]
        %v3797 = vld [vmem:[%s662 + $0xb0] sm:$0xff]
        %v3798 = vld [vmem:[%s662 + $0xb8] sm:$0xff]
        %v3799 = vld [vmem:[%s662 + $0xc0] sm:$0xff]
        %v3800 = vld [vmem:[%s662 + $0xc8] sm:$0xff]
        %v3801 = vld [vmem:[%s662 + $0xd0] sm:$0xff]
        %v3802 = vld [vmem:[%s662 + $0xd8] sm:$0xff]
        %v3803 = vld [vmem:[%s662 + $0xe0] sm:$0xff]
        %v3804 = vld [vmem:[%s662 + $0xe8] sm:$0xff]
        %v3805 = vld [vmem:[%s662 + $0xf0] sm:$0xff]
        %v3806 = vld [vmem:[%s662 + $0xf8] sm:$0xff]
        %v3807 = vld [vmem:[%s662 + $0x100] sm:$0xff]
        %v3808 = vld [vmem:[%s662 + $0x108] sm:$0xff]
        %v3809 = vld [vmem:[%s662 + $0x110] sm:$0xff]
        %v3810 = vld [vmem:[%s662 + $0x118] sm:$0xff]
        %v3811 = vld [vmem:[%s662 + $0x120] sm:$0xff]
        %v3812 = vld [vmem:[%s662 + $0x128] sm:$0xff]
        %v3813 = vld [vmem:[%s662 + $0x130] sm:$0xff]
        %v3814 = vld [vmem:[%s662 + $0x138] sm:$0xff]
        %v3815 = vld [vmem:[%s662 + $0x140] sm:$0xff]
        %v3816 = vld [vmem:[%s662 + $0x148] sm:$0xff]
        %v3817 = vld [vmem:[%s662 + $0x150] sm:$0xff]
        %v3818 = vld [vmem:[%s662 + $0x158] sm:$0xff]
        %v3819 = vld [vmem:[%s662 + $0x160] sm:$0xff]
        %v3820 = vld [vmem:[%s662 + $0x168] sm:$0xff]
        %v3821 = vld [vmem:[%s662 + $0x170] sm:$0xff]
        %v3822 = vld [vmem:[%s662 + $0x178] sm:$0xff]
        %v3823 = vld [vmem:[%s662 + $0x180] sm:$0xff]
        %v3824 = vld [vmem:[%s662 + $0x188] sm:$0xff]
        %v3825 = vld [vmem:[%s662 + $0x190] sm:$0xff]
        %v3826 = vld [vmem:[%s662 + $0x198] sm:$0xff]
        %v3827 = vld [vmem:[%s662 + $0x1a0] sm:$0xff]
        %v3828 = vld [vmem:[%s662 + $0x1a8] sm:$0xff]
        %v3829 = vld [vmem:[%s662 + $0x1b0] sm:$0xff]
        %v3830 = vld [vmem:[%s662 + $0x1b8] sm:$0xff]
        %v3831 = vld [vmem:[%s662 + $0x1c0] sm:$0xff]
        %v3832 = vld [vmem:[%s662 + $0x1c8] sm:$0xff]
        %v3833 = vld [vmem:[%s662 + $0x1d0] sm:$0xff]
        %v3834 = vld [vmem:[%s662 + $0x1d8] sm:$0xff]
        %v3835 = vld [vmem:[%s662 + $0x1e0] sm:$0xff]
        %v3836 = vld [vmem:[%s662 + $0x1e8] sm:$0xff]
        %v3837 = vld [vmem:[%s662 + $0x1f0] sm:$0xff]
        %v3838 = vld [vmem:[%s662 + $0x1f8] sm:$0xff]
        %v3839 = vld [vmem:[%s662 + $0x200] sm:$0xff]
        %v3840 = vld [vmem:[%s662 + $0x208] sm:$0xff]
        %v3841 = vld [vmem:[%s662 + $0x210] sm:$0xff]
        %v3842 = vld [vmem:[%s662 + $0x218] sm:$0xff]
        %v3843 = vld [vmem:[%s662 + $0x220] sm:$0xff]
        %v3844 = vld [vmem:[%s662 + $0x228] sm:$0xff]
        %v3845 = vld [vmem:[%s662 + $0x230] sm:$0xff]
        %v3846 = vld [vmem:[%s662 + $0x238] sm:$0xff]
        %v3847 = vld [vmem:[%s662 + $0x240] sm:$0xff]
        %v3848 = vld [vmem:[%s662 + $0x248] sm:$0xff]
        %v3849 = vld [vmem:[%s662 + $0x250] sm:$0xff]
        %v3850 = vld [vmem:[%s662 + $0x258] sm:$0xff]
        %v3851 = vld [vmem:[%s662 + $0x260] sm:$0xff]
        %v3852 = vld [vmem:[%s662 + $0x268] sm:$0xff]
        %v3853 = vld [vmem:[%s662 + $0x270] sm:$0xff]
        %v3854 = vld [vmem:[%s662 + $0x278] sm:$0xff]
        %v3855 = vld [vmem:[%s662 + $0x280] sm:$0xff]
        %v3856 = vld [vmem:[%s662 + $0x288] sm:$0xff]
        %v3857 = vld [vmem:[%s662 + $0x290] sm:$0xff]
        %v3858 = vld [vmem:[%s662 + $0x298] sm:$0xff]
        %v3859 = vld [vmem:[%s662 + $0x2a0] sm:$0xff]
        %v3860 = vld [vmem:[%s662 + $0x2a8] sm:$0xff]
        %v3861 = vld [vmem:[%s662 + $0x2b0] sm:$0xff]
        %v3862 = vld [vmem:[%s662 + $0x2b8] sm:$0xff]
        %v3863 = vld [vmem:[%s662 + $0x2c0] sm:$0xff]
        %v3864 = vld [vmem:[%s662 + $0x2c8] sm:$0xff]
        %v3865 = vld [vmem:[%s662 + $0x2d0] sm:$0xff]
        %v3866 = vld [vmem:[%s662 + $0x2d8] sm:$0xff]
        %v3867 = vld [vmem:[%s662 + $0x2e0] sm:$0xff]
        %v3868 = vld [vmem:[%s662 + $0x2e8] sm:$0xff]
        %v3869 = vld [vmem:[%s662 + $0x2f0] sm:$0xff]
        %v3870 = vld [vmem:[%s662 + $0x2f8] sm:$0xff]
        %v3871 = vld [vmem:[%s662 + $0x300] sm:$0xff]
        %v3872 = vld [vmem:[%s662 + $0x308] sm:$0xff]
        %v3873 = vld [vmem:[%s662 + $0x310] sm:$0xff]
        %v3874 = vld [vmem:[%s662 + $0x318] sm:$0xff]
        %v3875 = vld [vmem:[%s662 + $0x320] sm:$0xff]
        %v3876 = vld [vmem:[%s662 + $0x328] sm:$0xff]
        %v3877 = vld [vmem:[%s662 + $0x330] sm:$0xff]
        %v3878 = vld [vmem:[%s662 + $0x338] sm:$0xff]
        %v3879 = vld [vmem:[%s662 + $0x340] sm:$0xff]
        %v3880 = vld [vmem:[%s662 + $0x348] sm:$0xff]
        %v3881 = vld [vmem:[%s662 + $0x350] sm:$0xff]
        %v3882 = vld [vmem:[%s662 + $0x358] sm:$0xff]
        %v3883 = vld [vmem:[%s662 + $0x360] sm:$0xff]
        %v3884 = vld [vmem:[%s662 + $0x368] sm:$0xff]
        %v3885 = vld [vmem:[%s662 + $0x370] sm:$0xff]
        %v3886 = vld [vmem:[%s662 + $0x378] sm:$0xff]
        %v3887 = vld [vmem:[%s662 + $0x380] sm:$0xff]
        %v3888 = vld [vmem:[%s662 + $0x388] sm:$0xff]
        %v3889 = vld [vmem:[%s662 + $0x390] sm:$0xff]
        %v3890 = vld [vmem:[%s662 + $0x398] sm:$0xff]
        %v3891 = vld [vmem:[%s662 + $0x3a0] sm:$0xff]
        %v3892 = vld [vmem:[%s662 + $0x3a8] sm:$0xff]
        %v3893 = vld [vmem:[%s662 + $0x3b0] sm:$0xff]
        %v3894 = vld [vmem:[%s662 + $0x3b8] sm:$0xff]
        %v3895 = vld [vmem:[%s662 + $0x3c0] sm:$0xff]
        %v3896 = vld [vmem:[%s662 + $0x3c8] sm:$0xff]
        %v3897 = vld [vmem:[%s662 + $0x3d0] sm:$0xff]
        %v3898 = vld [vmem:[%s662 + $0x3d8] sm:$0xff]
        %v3899 = vld [vmem:[%s662 + $0x3e0] sm:$0xff]
        %v3900 = vld [vmem:[%s662 + $0x3e8] sm:$0xff]
        %v3901 = vld [vmem:[%s662 + $0x3f0] sm:$0xff]
        %v3902 = vld [vmem:[%s662 + $0x3f8] sm:$0xff]
        %v3903 = vld [vmem:[%s662 + $0x400] sm:$0xff]
        %v3904 = vld [vmem:[%s662 + $0x408] sm:$0xff]
        %v3905 = vld [vmem:[%s662 + $0x410] sm:$0xff]
        %v3906 = vld [vmem:[%s662 + $0x418] sm:$0xff]
        %v3907 = vld [vmem:[%s662 + $0x420] sm:$0xff]
        %v3908 = vld [vmem:[%s662 + $0x428] sm:$0xff]
        %v3909 = vld [vmem:[%s662 + $0x430] sm:$0xff]
        %v3910 = vld [vmem:[%s662 + $0x438] sm:$0xff]
        %v3911 = vld [vmem:[%s662 + $0x440] sm:$0xff]
        %v3912 = vld [vmem:[%s662 + $0x448] sm:$0xff]
        %v3913 = vld [vmem:[%s662 + $0x450] sm:$0xff]
        %v3914 = vld [vmem:[%s662 + $0x458] sm:$0xff]
        %v3915 = vld [vmem:[%s662 + $0x460] sm:$0xff]
        %v3916 = vld [vmem:[%s662 + $0x468] sm:$0xff]
        %v3917 = vld [vmem:[%s662 + $0x470] sm:$0xff]
        %v3918 = vld [vmem:[%s662 + $0x478] sm:$0xff]
        %v3919 = vld [vmem:[%s662 + $0x480] sm:$0xff]
        %v3920 = vld [vmem:[%s662 + $0x488] sm:$0xff]
        %v3921 = vld [vmem:[%s662 + $0x490] sm:$0xff]
        %v3922 = vld [vmem:[%s662 + $0x498] sm:$0xff]
        %v3923 = vld [vmem:[%s662 + $0x4a0] sm:$0xff]
        %v3924 = vld [vmem:[%s662 + $0x4a8] sm:$0xff]
        %v3925 = vld [vmem:[%s662 + $0x4b0] sm:$0xff]
        %v3926 = vld [vmem:[%s662 + $0x4b8] sm:$0xff]
        %v3927 = vld [vmem:[%s662 + $0x4c0] sm:$0xff]
        %v3928 = vld [vmem:[%s662 + $0x4c8] sm:$0xff]
        %v3929 = vld [vmem:[%s662 + $0x4d0] sm:$0xff]
        %v3930 = vld [vmem:[%s662 + $0x4d8] sm:$0xff]
        %v3931 = vld [vmem:[%s662 + $0x4e0] sm:$0xff]
        %v3932 = vld [vmem:[%s662 + $0x4e8] sm:$0xff]
        %v3933 = vld [vmem:[%s662 + $0x4f0] sm:$0xff]
        %v3934 = vld [vmem:[%s662 + $0x4f8] sm:$0xff]
        %v3935 = vld [vmem:[%s662 + $0x500] sm:$0xff]
        %v3936 = vld [vmem:[%s662 + $0x508] sm:$0xff]
        %v3937 = vld [vmem:[%s662 + $0x510] sm:$0xff]
        %v3938 = vld [vmem:[%s662 + $0x518] sm:$0xff]
        %v3939 = vld [vmem:[%s662 + $0x520] sm:$0xff]
        %v3940 = vld [vmem:[%s662 + $0x528] sm:$0xff]
        %v3941 = vld [vmem:[%s662 + $0x530] sm:$0xff]
        %v3942 = vld [vmem:[%s662 + $0x538] sm:$0xff]
        %v3943 = vld [vmem:[%s662 + $0x540] sm:$0xff]
        %v3944 = vld [vmem:[%s662 + $0x548] sm:$0xff]
        %v3945 = vld [vmem:[%s662 + $0x550] sm:$0xff]
        %v3946 = vld [vmem:[%s662 + $0x558] sm:$0xff]
        %v3947 = vld [vmem:[%s662 + $0x560] sm:$0xff]
        %v3948 = vld [vmem:[%s662 + $0x568] sm:$0xff]
        %v3949 = vld [vmem:[%s662 + $0x570] sm:$0xff]
        %v3950 = vld [vmem:[%s662 + $0x578] sm:$0xff]
        %v3951 = vld [vmem:[%s662 + $0x580] sm:$0xff]
        %v3952 = vld [vmem:[%s662 + $0x588] sm:$0xff]
        %v3953 = vld [vmem:[%s662 + $0x590] sm:$0xff]
        %v3954 = vld [vmem:[%s662 + $0x598] sm:$0xff]
        %v3955 = vld [vmem:[%s662 + $0x5a0] sm:$0xff]
        %v3956 = vld [vmem:[%s662 + $0x5a8] sm:$0xff]
        %v3957 = vld [vmem:[%s662 + $0x5b0] sm:$0xff]
        %v3958 = vld [vmem:[%s662 + $0x5b8] sm:$0xff]
        %v3959 = vld [vmem:[%s662 + $0x5c0] sm:$0xff]
        %v3960 = vld [vmem:[%s662 + $0x5c8] sm:$0xff]
        %v3961 = vld [vmem:[%s662 + $0x5d0] sm:$0xff]
        %v3962 = vld [vmem:[%s662 + $0x5d8] sm:$0xff]
        %v3963 = vld [vmem:[%s662 + $0x5e0] sm:$0xff]
        %v3964 = vld [vmem:[%s662 + $0x5e8] sm:$0xff]
        %v3965 = vld [vmem:[%s662 + $0x5f0] sm:$0xff]
        %v3966 = vld [vmem:[%s662 + $0x5f8] sm:$0xff]
        %v3967 = vld [vmem:[%s662 + $0x600] sm:$0xff]
        %v3968 = vld [vmem:[%s662 + $0x608] sm:$0xff]
        %v3969 = vld [vmem:[%s662 + $0x610] sm:$0xff]
        %v3970 = vld [vmem:[%s662 + $0x618] sm:$0xff]
        %v3971 = vld [vmem:[%s662 + $0x620] sm:$0xff]
        %v3972 = vld [vmem:[%s662 + $0x628] sm:$0xff]
        %v3973 = vld [vmem:[%s662 + $0x630] sm:$0xff]
        %v3974 = vld [vmem:[%s662 + $0x638] sm:$0xff]
        %v3975 = vld [vmem:[%s662 + $0x640] sm:$0xff]
        %v3976 = vld [vmem:[%s662 + $0x648] sm:$0xff]
        %v3977 = vld [vmem:[%s662 + $0x650] sm:$0xff]
        %v3978 = vld [vmem:[%s662 + $0x658] sm:$0xff]
        %v3979 = vld [vmem:[%s662 + $0x660] sm:$0xff]
        %v3980 = vld [vmem:[%s662 + $0x668] sm:$0xff]
        %v3981 = vld [vmem:[%s662 + $0x670] sm:$0xff]
        %v3982 = vld [vmem:[%s662 + $0x678] sm:$0xff]
        %v3983 = vld [vmem:[%s662 + $0x680] sm:$0xff]
        %v3984 = vld [vmem:[%s662 + $0x688] sm:$0xff]
        %v3985 = vld [vmem:[%s662 + $0x690] sm:$0xff]
        %v3986 = vld [vmem:[%s662 + $0x698] sm:$0xff]
        %v3987 = vld [vmem:[%s662 + $0x6a0] sm:$0xff]
        %v3988 = vld [vmem:[%s662 + $0x6a8] sm:$0xff]
        %v3989 = vld [vmem:[%s662 + $0x6b0] sm:$0xff]
        %v3990 = vld [vmem:[%s662 + $0x6b8] sm:$0xff]
        %v3991 = vld [vmem:[%s662 + $0x6c0] sm:$0xff]
        %v3992 = vld [vmem:[%s662 + $0x6c8] sm:$0xff]
        %v3993 = vld [vmem:[%s662 + $0x6d0] sm:$0xff]
        %v3994 = vld [vmem:[%s662 + $0x6d8] sm:$0xff]
        %v3995 = vld [vmem:[%s662 + $0x6e0] sm:$0xff]
        %v3996 = vld [vmem:[%s662 + $0x6e8] sm:$0xff]
        %v3997 = vld [vmem:[%s662 + $0x6f0] sm:$0xff]
        %v3998 = vld [vmem:[%s662 + $0x6f8] sm:$0xff]
        %v3999 = vld [vmem:[%s662 + $0x700] sm:$0xff]
        %v4000 = vld [vmem:[%s662 + $0x708] sm:$0xff]
        %v4001 = vld [vmem:[%s662 + $0x710] sm:$0xff]
        %v4002 = vld [vmem:[%s662 + $0x718] sm:$0xff]
        %v4003 = vld [vmem:[%s662 + $0x720] sm:$0xff]
        %v4004 = vld [vmem:[%s662 + $0x728] sm:$0xff]
        %v4005 = vld [vmem:[%s662 + $0x730] sm:$0xff]
        %v4006 = vld [vmem:[%s662 + $0x738] sm:$0xff]
        %v4007 = vld [vmem:[%s662 + $0x740] sm:$0xff]
        %v4008 = vld [vmem:[%s662 + $0x748] sm:$0xff]
        %v4009 = vld [vmem:[%s662 + $0x750] sm:$0xff]
        %v4010 = vld [vmem:[%s662 + $0x758] sm:$0xff]
        %v4011 = vld [vmem:[%s662 + $0x760] sm:$0xff]
        %v4012 = vld [vmem:[%s662 + $0x768] sm:$0xff]
        %v4013 = vld [vmem:[%s662 + $0x770] sm:$0xff]
        %v4014 = vld [vmem:[%s662 + $0x778] sm:$0xff]
        %v4015 = vld [vmem:[%s662 + $0x780] sm:$0xff]
        %v4016 = vld [vmem:[%s662 + $0x788] sm:$0xff]
        %v4017 = vld [vmem:[%s662 + $0x790] sm:$0xff]
        %v4018 = vld [vmem:[%s662 + $0x798] sm:$0xff]
        %v4019 = vld [vmem:[%s662 + $0x7a0] sm:$0xff]
        %v4020 = vld [vmem:[%s662 + $0x7a8] sm:$0xff]
        %v4021 = vld [vmem:[%s662 + $0x7b0] sm:$0xff]
        %v4022 = vld [vmem:[%s662 + $0x7b8] sm:$0xff]
        %v4023 = vld [vmem:[%s662 + $0x7c0] sm:$0xff]
        %v4024 = vld [vmem:[%s662 + $0x7c8] sm:$0xff]
        %v4025 = vld [vmem:[%s662 + $0x7d0] sm:$0xff]
        %v4026 = vld [vmem:[%s662 + $0x7d8] sm:$0xff]
        %v4027 = vld [vmem:[%s662 + $0x7e0] sm:$0xff]
        %v4028 = vld [vmem:[%s662 + $0x7e8] sm:$0xff]
        %v4029 = vld [vmem:[%s662 + $0x7f0] sm:$0xff]
        %v4030 = vld [vmem:[%s662 + $0x7f8] sm:$0xff]
        %v4031 = vld [vmem:[%s662 + $0x800] sm:$0xff]
        %v4032 = vld [vmem:[%s662 + $0x808] sm:$0xff]
        %v4033 = vld [vmem:[%s662 + $0x810] sm:$0xff]
        %v4034 = vld [vmem:[%s662 + $0x818] sm:$0xff]
        %v4035 = vld [vmem:[%s662 + $0x820] sm:$0xff]
        %v4036 = vld [vmem:[%s662 + $0x828] sm:$0xff]
        %v4037 = vld [vmem:[%s662 + $0x830] sm:$0xff]
        %v4038 = vld [vmem:[%s662 + $0x838] sm:$0xff]
        %v4039 = vld [vmem:[%s662 + $0x840] sm:$0xff]
        %v4040 = vld [vmem:[%s662 + $0x848] sm:$0xff]
        %v4041 = vld [vmem:[%s662 + $0x850] sm:$0xff]
        %v4042 = vld [vmem:[%s662 + $0x858] sm:$0xff]
        %v4043 = vld [vmem:[%s662 + $0x860] sm:$0xff]
        %v4044 = vld [vmem:[%s662 + $0x868] sm:$0xff]
        %v4045 = vld [vmem:[%s662 + $0x870] sm:$0xff]
        %v4046 = vld [vmem:[%s662 + $0x878] sm:$0xff]
        %v4047 = vld [vmem:[%s662 + $0x880] sm:$0xff]
        %v4048 = vld [vmem:[%s662 + $0x888] sm:$0xff]
        %v4049 = vld [vmem:[%s662 + $0x890] sm:$0xff]
        %v4050 = vld [vmem:[%s662 + $0x898] sm:$0xff]
        %v4051 = vld [vmem:[%s662 + $0x8a0] sm:$0xff]
        %v4052 = vld [vmem:[%s662 + $0x8a8] sm:$0xff]
        %v4053 = vld [vmem:[%s662 + $0x8b0] sm:$0xff]
        %v4054 = vld [vmem:[%s662 + $0x8b8] sm:$0xff]
        %v4055 = vld [vmem:[%s662 + $0x8c0] sm:$0xff]
        %v4056 = vld [vmem:[%s662 + $0x8c8] sm:$0xff]
        %v4057 = vld [vmem:[%s662 + $0x8d0] sm:$0xff]
        %v4058 = vld [vmem:[%s662 + $0x8d8] sm:$0xff]
        %v4059 = vld [vmem:[%s662 + $0x8e0] sm:$0xff]
        %v4060 = vld [vmem:[%s662 + $0x8e8] sm:$0xff]
        %v4061 = vld [vmem:[%s662 + $0x8f0] sm:$0xff]
        %v4062 = vld [vmem:[%s662 + $0x8f8] sm:$0xff]
        %v4063 = vld [vmem:[%s662 + $0x900] sm:$0xff]
        %v4064 = vld [vmem:[%s662 + $0x908] sm:$0xff]
        %v4065 = vld [vmem:[%s662 + $0x910] sm:$0xff]
        %v4066 = vld [vmem:[%s662 + $0x918] sm:$0xff]
        %v4067 = vld [vmem:[%s662 + $0x920] sm:$0xff]
        %v4068 = vld [vmem:[%s662 + $0x928] sm:$0xff]
        %v4069 = vld [vmem:[%s662 + $0x930] sm:$0xff]
        %v4070 = vld [vmem:[%s662 + $0x938] sm:$0xff]
        %v4071 = vld [vmem:[%s662 + $0x940] sm:$0xff]
        %v4072 = vld [vmem:[%s662 + $0x948] sm:$0xff]
        %v4073 = vld [vmem:[%s662 + $0x950] sm:$0xff]
        %v4074 = vld [vmem:[%s662 + $0x958] sm:$0xff]
        %v4075 = vld [vmem:[%s662 + $0x960] sm:$0xff]
        %v4076 = vld [vmem:[%s662 + $0x968] sm:$0xff]
        %v4077 = vld [vmem:[%s662 + $0x970] sm:$0xff]
        %v4078 = vld [vmem:[%s662 + $0x978] sm:$0xff]
        %v4079 = vld [vmem:[%s662 + $0x980] sm:$0xff]
        %v4080 = vld [vmem:[%s662 + $0x988] sm:$0xff]
        %v4081 = vld [vmem:[%s662 + $0x990] sm:$0xff]
        %v4082 = vld [vmem:[%s662 + $0x998] sm:$0xff]
        %v4083 = vld [vmem:[%s662 + $0x9a0] sm:$0xff]
        %v4084 = vld [vmem:[%s662 + $0x9a8] sm:$0xff]
        %v4085 = vld [vmem:[%s662 + $0x9b0] sm:$0xff]
        %v4086 = vld [vmem:[%s662 + $0x9b8] sm:$0xff]
        %v4087 = vld [vmem:[%s662 + $0x9c0] sm:$0xff]
        %v4088 = vld [vmem:[%s662 + $0x9c8] sm:$0xff]
        %v4089 = vld [vmem:[%s662 + $0x9d0] sm:$0xff]
        %v4090 = vld [vmem:[%s662 + $0x9d8] sm:$0xff]
        %v4091 = vld [vmem:[%s662 + $0x9e0] sm:$0xff]
        %v4092 = vld [vmem:[%s662 + $0x9e8] sm:$0xff]
        %v4093 = vld [vmem:[%s662 + $0x9f0] sm:$0xff]
        %v4094 = vld [vmem:[%s662 + $0x9f8] sm:$0xff]
        %v4095 = vld [vmem:[%s662 + $0xa00] sm:$0xff]
        %v4096 = vld [vmem:[%s662 + $0xa08] sm:$0xff]
        %v4097 = vld [vmem:[%s662 + $0xa10] sm:$0xff]
        %v4098 = vld [vmem:[%s662 + $0xa18] sm:$0xff]
        %v4099 = vld [vmem:[%s662 + $0xa20] sm:$0xff]
        %v4100 = vld [vmem:[%s662 + $0xa28] sm:$0xff]
        %v4101 = vld [vmem:[%s662 + $0xa30] sm:$0xff]
        %v4102 = vld [vmem:[%s662 + $0xa38] sm:$0xff]
        %v4103 = vld [vmem:[%s662 + $0xa40] sm:$0xff]
        %v4104 = vld [vmem:[%s662 + $0xa48] sm:$0xff]
        %v4105 = vld [vmem:[%s662 + $0xa50] sm:$0xff]
        %v4106 = vld [vmem:[%s662 + $0xa58] sm:$0xff]
        %v4107 = vld [vmem:[%s662 + $0xa60] sm:$0xff]
        %v4108 = vld [vmem:[%s662 + $0xa68] sm:$0xff]
        %v4109 = vld [vmem:[%s662 + $0xa70] sm:$0xff]
        %v4110 = vld [vmem:[%s662 + $0xa78] sm:$0xff]
        %v4111 = vld [vmem:[%s662 + $0xa80] sm:$0xff]
        %v4112 = vld [vmem:[%s662 + $0xa88] sm:$0xff]
        %v4113 = vld [vmem:[%s662 + $0xa90] sm:$0xff]
        %v4114 = vld [vmem:[%s662 + $0xa98] sm:$0xff]
        %v4115 = vld [vmem:[%s662 + $0xaa0] sm:$0xff]
        %v4116 = vld [vmem:[%s662 + $0xaa8] sm:$0xff]
        %v4117 = vld [vmem:[%s662 + $0xab0] sm:$0xff]
        %v4118 = vld [vmem:[%s662 + $0xab8] sm:$0xff]
        %v4119 = vld [vmem:[%s662 + $0xac0] sm:$0xff]
        %v4120 = vld [vmem:[%s662 + $0xac8] sm:$0xff]
        %v4121 = vld [vmem:[%s662 + $0xad0] sm:$0xff]
        %v4122 = vld [vmem:[%s662 + $0xad8] sm:$0xff]
        %v4123 = vld [vmem:[%s662 + $0xae0] sm:$0xff]
        %v4124 = vld [vmem:[%s662 + $0xae8] sm:$0xff]
        %v4125 = vld [vmem:[%s662 + $0xaf0] sm:$0xff]
        %v4126 = vld [vmem:[%s662 + $0xaf8] sm:$0xff]
        %v4127 = vld [vmem:[%s662 + $0xb00] sm:$0xff]
        %v4128 = vld [vmem:[%s662 + $0xb08] sm:$0xff]
        %v4129 = vld [vmem:[%s662 + $0xb10] sm:$0xff]
        %v4130 = vld [vmem:[%s662 + $0xb18] sm:$0xff]
        %v4131 = vld [vmem:[%s662 + $0xb20] sm:$0xff]
        %v4132 = vld [vmem:[%s662 + $0xb28] sm:$0xff]
        %v4133 = vld [vmem:[%s662 + $0xb30] sm:$0xff]
        %v4134 = vld [vmem:[%s662 + $0xb38] sm:$0xff]
        %v4135 = vld [vmem:[%s662 + $0xb40] sm:$0xff]
        %v4136 = vld [vmem:[%s662 + $0xb48] sm:$0xff]
        %v4137 = vld [vmem:[%s662 + $0xb50] sm:$0xff]
        %v4138 = vld [vmem:[%s662 + $0xb58] sm:$0xff]
        %v4139 = vld [vmem:[%s662 + $0xb60] sm:$0xff]
        %v4140 = vld [vmem:[%s662 + $0xb68] sm:$0xff]
        %v4141 = vld [vmem:[%s662 + $0xb70] sm:$0xff]
        %v4142 = vld [vmem:[%s662 + $0xb78] sm:$0xff]
        %v4143 = vld [vmem:[%s662 + $0xb80] sm:$0xff]
        %v4144 = vld [vmem:[%s662 + $0xb88] sm:$0xff]
        %v4145 = vld [vmem:[%s662 + $0xb90] sm:$0xff]
        %v4146 = vld [vmem:[%s662 + $0xb98] sm:$0xff]
        %v4147 = vld [vmem:[%s662 + $0xba0] sm:$0xff]
        %v4148 = vld [vmem:[%s662 + $0xba8] sm:$0xff]
        %v4149 = vld [vmem:[%s662 + $0xbb0] sm:$0xff]
        %v4150 = vld [vmem:[%s662 + $0xbb8] sm:$0xff]
        %v4151 = vld [vmem:[%s662 + $0xbc0] sm:$0xff]
        %v4152 = vld [vmem:[%s662 + $0xbc8] sm:$0xff]
        %v4153 = vld [vmem:[%s662 + $0xbd0] sm:$0xff]
        %v4154 = vld [vmem:[%s662 + $0xbd8] sm:$0xff]
        %v4155 = vld [vmem:[%s662 + $0xbe0] sm:$0xff]
        %v4156 = vld [vmem:[%s662 + $0xbe8] sm:$0xff]
        %v4157 = vld [vmem:[%s662 + $0xbf0] sm:$0xff]
        %v4158 = vld [vmem:[%s662 + $0xbf8] sm:$0xff]
        %v4159 = vld [vmem:[%s671] sm:$0x3f]
        %v4161 = vlaneseq
        %v4162 = vshrl.u32 %v4161, 7
        %v4163 = vsub.s32 0, %v4162
        %v4164 = vrot.slane %v4159, %v4163
        %v4165 = vlaneseq
        %v4166 = vshrl.u32 %v4165, 7
        %v4167 = vsub.s32 1, %v4166
        %v4168 = vrot.slane %v4159, %v4167
        %v4169 = vlaneseq
        %v4170 = vshrl.u32 %v4169, 7
        %v4171 = vsub.s32 2, %v4170
        %v4172 = vrot.slane %v4159, %v4171
        %v4173 = vlaneseq
        %v4174 = vshrl.u32 %v4173, 7
        %v4175 = vsub.s32 3, %v4174
        %v4176 = vrot.slane %v4159, %v4175
        %v4177 = vlaneseq
        %v4178 = vshrl.u32 %v4177, 7
        %v4179 = vsub.s32 4, %v4178
        %v4180 = vrot.slane %v4159, %v4179
        %v4181 = vlaneseq
        %v4182 = vshrl.u32 %v4181, 7
        %v4183 = vsub.s32 5, %v4182
        %v4184 = vrot.slane %v4159, %v4183
        %v4575 = vunpack.c.l.b16 %v3775
        %v4576 = vunpack.c.h.b16 %v3775
        %v4577 = vunpack.c.l.b16 %v3776
        %v4578 = vunpack.c.h.b16 %v3776
        %v4579 = vunpack.c.l.b16 %v3777
        %v4580 = vunpack.c.h.b16 %v3777
        %v4581 = vunpack.c.l.b16 %v3778
        %v4582 = vunpack.c.h.b16 %v3778
        %v4583 = vunpack.c.l.b16 %v3779
        %v4584 = vunpack.c.h.b16 %v3779
        %v4585 = vunpack.c.l.b16 %v3780
        %v4586 = vunpack.c.h.b16 %v3780
        %v4587 = vunpack.c.l.b16 %v3781
        %v4588 = vunpack.c.h.b16 %v3781
        %v4589 = vunpack.c.l.b16 %v3782
        %v4590 = vunpack.c.h.b16 %v3782
        %v4591 = vunpack.c.l.b16 %v3783
        %v4592 = vunpack.c.h.b16 %v3783
        %v4593 = vunpack.c.l.b16 %v3784
        %v4594 = vunpack.c.h.b16 %v3784
        %v4595 = vunpack.c.l.b16 %v3785
        %v4596 = vunpack.c.h.b16 %v3785
        %v4597 = vunpack.c.l.b16 %v3786
        %v4598 = vunpack.c.h.b16 %v3786
        %v4599 = vunpack.c.l.b16 %v3787
        %v4600 = vunpack.c.h.b16 %v3787
        %v4601 = vunpack.c.l.b16 %v3788
        %v4602 = vunpack.c.h.b16 %v3788
        %v4603 = vunpack.c.l.b16 %v3789
        %v4604 = vunpack.c.h.b16 %v3789
        %v4605 = vunpack.c.l.b16 %v3790
        %v4606 = vunpack.c.h.b16 %v3790
        %v4607 = vunpack.c.l.b16 %v3791
        %v4608 = vunpack.c.h.b16 %v3791
        %v4609 = vunpack.c.l.b16 %v3792
        %v4610 = vunpack.c.h.b16 %v3792
        %v4611 = vunpack.c.l.b16 %v3793
        %v4612 = vunpack.c.h.b16 %v3793
        %v4613 = vunpack.c.l.b16 %v3794
        %v4614 = vunpack.c.h.b16 %v3794
        %v4615 = vunpack.c.l.b16 %v3795
        %v4616 = vunpack.c.h.b16 %v3795
        %v4617 = vunpack.c.l.b16 %v3796
        %v4618 = vunpack.c.h.b16 %v3796
        %v4619 = vunpack.c.l.b16 %v3797
        %v4620 = vunpack.c.h.b16 %v3797
        %v4621 = vunpack.c.l.b16 %v3798
        %v4622 = vunpack.c.h.b16 %v3798
        %v4623 = vunpack.c.l.b16 %v3799
        %v4624 = vunpack.c.h.b16 %v3799
        %v4625 = vunpack.c.l.b16 %v3800
        %v4626 = vunpack.c.h.b16 %v3800
        %v4627 = vunpack.c.l.b16 %v3801
        %v4628 = vunpack.c.h.b16 %v3801
        %v4629 = vunpack.c.l.b16 %v3802
        %v4630 = vunpack.c.h.b16 %v3802
        %v4631 = vunpack.c.l.b16 %v3803
        %v4632 = vunpack.c.h.b16 %v3803
        %v4633 = vunpack.c.l.b16 %v3804
        %v4634 = vunpack.c.h.b16 %v3804
        %v4635 = vunpack.c.l.b16 %v3805
        %v4636 = vunpack.c.h.b16 %v3805
        %v4637 = vunpack.c.l.b16 %v3806
        %v4638 = vunpack.c.h.b16 %v3806
        %v4639 = vunpack.c.l.b16 %v3807
        %v4640 = vunpack.c.h.b16 %v3807
        %v4641 = vunpack.c.l.b16 %v3808
        %v4642 = vunpack.c.h.b16 %v3808
        %v4643 = vunpack.c.l.b16 %v3809
        %v4644 = vunpack.c.h.b16 %v3809
        %v4645 = vunpack.c.l.b16 %v3810
        %v4646 = vunpack.c.h.b16 %v3810
        %v4647 = vunpack.c.l.b16 %v3811
        %v4648 = vunpack.c.h.b16 %v3811
        %v4649 = vunpack.c.l.b16 %v3812
        %v4650 = vunpack.c.h.b16 %v3812
        %v4651 = vunpack.c.l.b16 %v3813
        %v4652 = vunpack.c.h.b16 %v3813
        %v4653 = vunpack.c.l.b16 %v3814
        %v4654 = vunpack.c.h.b16 %v3814
        %v4655 = vunpack.c.l.b16 %v3815
        %v4656 = vunpack.c.h.b16 %v3815
        %v4657 = vunpack.c.l.b16 %v3816
        %v4658 = vunpack.c.h.b16 %v3816
        %v4659 = vunpack.c.l.b16 %v3817
        %v4660 = vunpack.c.h.b16 %v3817
        %v4661 = vunpack.c.l.b16 %v3818
        %v4662 = vunpack.c.h.b16 %v3818
        %v4663 = vunpack.c.l.b16 %v3819
        %v4664 = vunpack.c.h.b16 %v3819
        %v4665 = vunpack.c.l.b16 %v3820
        %v4666 = vunpack.c.h.b16 %v3820
        %v4667 = vunpack.c.l.b16 %v3821
        %v4668 = vunpack.c.h.b16 %v3821
        %v4669 = vunpack.c.l.b16 %v3822
        %v4670 = vunpack.c.h.b16 %v3822
        %v4671 = vunpack.c.l.b16 %v3823
        %v4672 = vunpack.c.h.b16 %v3823
        %v4673 = vunpack.c.l.b16 %v3824
        %v4674 = vunpack.c.h.b16 %v3824
        %v4675 = vunpack.c.l.b16 %v3825
        %v4676 = vunpack.c.h.b16 %v3825
        %v4677 = vunpack.c.l.b16 %v3826
        %v4678 = vunpack.c.h.b16 %v3826
        %v4679 = vunpack.c.l.b16 %v3827
        %v4680 = vunpack.c.h.b16 %v3827
        %v4681 = vunpack.c.l.b16 %v3828
        %v4682 = vunpack.c.h.b16 %v3828
        %v4683 = vunpack.c.l.b16 %v3829
        %v4684 = vunpack.c.h.b16 %v3829
        %v4685 = vunpack.c.l.b16 %v3830
        %v4686 = vunpack.c.h.b16 %v3830
        %v4687 = vunpack.c.l.b16 %v3831
        %v4688 = vunpack.c.h.b16 %v3831
        %v4689 = vunpack.c.l.b16 %v3832
        %v4690 = vunpack.c.h.b16 %v3832
        %v4691 = vunpack.c.l.b16 %v3833
        %v4692 = vunpack.c.h.b16 %v3833
        %v4693 = vunpack.c.l.b16 %v3834
        %v4694 = vunpack.c.h.b16 %v3834
        %v4695 = vunpack.c.l.b16 %v3835
        %v4696 = vunpack.c.h.b16 %v3835
        %v4697 = vunpack.c.l.b16 %v3836
        %v4698 = vunpack.c.h.b16 %v3836
        %v4699 = vunpack.c.l.b16 %v3837
        %v4700 = vunpack.c.h.b16 %v3837
        %v4701 = vunpack.c.l.b16 %v3838
        %v4702 = vunpack.c.h.b16 %v3838
        %v4703 = vunpack.c.l.b16 %v3839
        %v4704 = vunpack.c.h.b16 %v3839
        %v4705 = vunpack.c.l.b16 %v3840
        %v4706 = vunpack.c.h.b16 %v3840
        %v4707 = vunpack.c.l.b16 %v3841
        %v4708 = vunpack.c.h.b16 %v3841
        %v4709 = vunpack.c.l.b16 %v3842
        %v4710 = vunpack.c.h.b16 %v3842
        %v4711 = vunpack.c.l.b16 %v3843
        %v4712 = vunpack.c.h.b16 %v3843
        %v4713 = vunpack.c.l.b16 %v3844
        %v4714 = vunpack.c.h.b16 %v3844
        %v4715 = vunpack.c.l.b16 %v3845
        %v4716 = vunpack.c.h.b16 %v3845
        %v4717 = vunpack.c.l.b16 %v3846
        %v4718 = vunpack.c.h.b16 %v3846
        %v4719 = vunpack.c.l.b16 %v3847
        %v4720 = vunpack.c.h.b16 %v3847
        %v4721 = vunpack.c.l.b16 %v3848
        %v4722 = vunpack.c.h.b16 %v3848
        %v4723 = vunpack.c.l.b16 %v3849
        %v4724 = vunpack.c.h.b16 %v3849
        %v4725 = vunpack.c.l.b16 %v3850
        %v4726 = vunpack.c.h.b16 %v3850
        %v4727 = vunpack.c.l.b16 %v3851
        %v4728 = vunpack.c.h.b16 %v3851
        %v4729 = vunpack.c.l.b16 %v3852
        %v4730 = vunpack.c.h.b16 %v3852
        %v4731 = vunpack.c.l.b16 %v3853
        %v4732 = vunpack.c.h.b16 %v3853
        %v4733 = vunpack.c.l.b16 %v3854
        %v4734 = vunpack.c.h.b16 %v3854
        %v4735 = vunpack.c.l.b16 %v3855
        %v4736 = vunpack.c.h.b16 %v3855
        %v4737 = vunpack.c.l.b16 %v3856
        %v4738 = vunpack.c.h.b16 %v3856
        %v4739 = vunpack.c.l.b16 %v3857
        %v4740 = vunpack.c.h.b16 %v3857
        %v4741 = vunpack.c.l.b16 %v3858
        %v4742 = vunpack.c.h.b16 %v3858
        %v4743 = vunpack.c.l.b16 %v3859
        %v4744 = vunpack.c.h.b16 %v3859
        %v4745 = vunpack.c.l.b16 %v3860
        %v4746 = vunpack.c.h.b16 %v3860
        %v4747 = vunpack.c.l.b16 %v3861
        %v4748 = vunpack.c.h.b16 %v3861
        %v4749 = vunpack.c.l.b16 %v3862
        %v4750 = vunpack.c.h.b16 %v3862
        %v4751 = vunpack.c.l.b16 %v3863
        %v4752 = vunpack.c.h.b16 %v3863
        %v4753 = vunpack.c.l.b16 %v3864
        %v4754 = vunpack.c.h.b16 %v3864
        %v4755 = vunpack.c.l.b16 %v3865
        %v4756 = vunpack.c.h.b16 %v3865
        %v4757 = vunpack.c.l.b16 %v3866
        %v4758 = vunpack.c.h.b16 %v3866
        %v4759 = vunpack.c.l.b16 %v3867
        %v4760 = vunpack.c.h.b16 %v3867
        %v4761 = vunpack.c.l.b16 %v3868
        %v4762 = vunpack.c.h.b16 %v3868
        %v4763 = vunpack.c.l.b16 %v3869
        %v4764 = vunpack.c.h.b16 %v3869
        %v4765 = vunpack.c.l.b16 %v3870
        %v4766 = vunpack.c.h.b16 %v3870
        %v4767 = vunpack.c.l.b16 %v3871
        %v4768 = vunpack.c.h.b16 %v3871
        %v4769 = vunpack.c.l.b16 %v3872
        %v4770 = vunpack.c.h.b16 %v3872
        %v4771 = vunpack.c.l.b16 %v3873
        %v4772 = vunpack.c.h.b16 %v3873
        %v4773 = vunpack.c.l.b16 %v3874
        %v4774 = vunpack.c.h.b16 %v3874
        %v4775 = vunpack.c.l.b16 %v3875
        %v4776 = vunpack.c.h.b16 %v3875
        %v4777 = vunpack.c.l.b16 %v3876
        %v4778 = vunpack.c.h.b16 %v3876
        %v4779 = vunpack.c.l.b16 %v3877
        %v4780 = vunpack.c.h.b16 %v3877
        %v4781 = vunpack.c.l.b16 %v3878
        %v4782 = vunpack.c.h.b16 %v3878
        %v4783 = vunpack.c.l.b16 %v3879
        %v4784 = vunpack.c.h.b16 %v3879
        %v4785 = vunpack.c.l.b16 %v3880
        %v4786 = vunpack.c.h.b16 %v3880
        %v4787 = vunpack.c.l.b16 %v3881
        %v4788 = vunpack.c.h.b16 %v3881
        %v4789 = vunpack.c.l.b16 %v3882
        %v4790 = vunpack.c.h.b16 %v3882
        %v4791 = vunpack.c.l.b16 %v3883
        %v4792 = vunpack.c.h.b16 %v3883
        %v4793 = vunpack.c.l.b16 %v3884
        %v4794 = vunpack.c.h.b16 %v3884
        %v4795 = vunpack.c.l.b16 %v3885
        %v4796 = vunpack.c.h.b16 %v3885
        %v4797 = vunpack.c.l.b16 %v3886
        %v4798 = vunpack.c.h.b16 %v3886
        %v4799 = vunpack.c.l.b16 %v3887
        %v4800 = vunpack.c.h.b16 %v3887
        %v4801 = vunpack.c.l.b16 %v3888
        %v4802 = vunpack.c.h.b16 %v3888
        %v4803 = vunpack.c.l.b16 %v3889
        %v4804 = vunpack.c.h.b16 %v3889
        %v4805 = vunpack.c.l.b16 %v3890
        %v4806 = vunpack.c.h.b16 %v3890
        %v4807 = vunpack.c.l.b16 %v3891
        %v4808 = vunpack.c.h.b16 %v3891
        %v4809 = vunpack.c.l.b16 %v3892
        %v4810 = vunpack.c.h.b16 %v3892
        %v4811 = vunpack.c.l.b16 %v3893
        %v4812 = vunpack.c.h.b16 %v3893
        %v4813 = vunpack.c.l.b16 %v3894
        %v4814 = vunpack.c.h.b16 %v3894
        %v4815 = vunpack.c.l.b16 %v3895
        %v4816 = vunpack.c.h.b16 %v3895
        %v4817 = vunpack.c.l.b16 %v3896
        %v4818 = vunpack.c.h.b16 %v3896
        %v4819 = vunpack.c.l.b16 %v3897
        %v4820 = vunpack.c.h.b16 %v3897
        %v4821 = vunpack.c.l.b16 %v3898
        %v4822 = vunpack.c.h.b16 %v3898
        %v4823 = vunpack.c.l.b16 %v3899
        %v4824 = vunpack.c.h.b16 %v3899
        %v4825 = vunpack.c.l.b16 %v3900
        %v4826 = vunpack.c.h.b16 %v3900
        %v4827 = vunpack.c.l.b16 %v3901
        %v4828 = vunpack.c.h.b16 %v3901
        %v4829 = vunpack.c.l.b16 %v3902
        %v4830 = vunpack.c.h.b16 %v3902
        %v4831 = vunpack.c.l.b16 %v3903
        %v4832 = vunpack.c.h.b16 %v3903
        %v4833 = vunpack.c.l.b16 %v3904
        %v4834 = vunpack.c.h.b16 %v3904
        %v4835 = vunpack.c.l.b16 %v3905
        %v4836 = vunpack.c.h.b16 %v3905
        %v4837 = vunpack.c.l.b16 %v3906
        %v4838 = vunpack.c.h.b16 %v3906
        %v4839 = vunpack.c.l.b16 %v3907
        %v4840 = vunpack.c.h.b16 %v3907
        %v4841 = vunpack.c.l.b16 %v3908
        %v4842 = vunpack.c.h.b16 %v3908
        %v4843 = vunpack.c.l.b16 %v3909
        %v4844 = vunpack.c.h.b16 %v3909
        %v4845 = vunpack.c.l.b16 %v3910
        %v4846 = vunpack.c.h.b16 %v3910
        %v4847 = vunpack.c.l.b16 %v3911
        %v4848 = vunpack.c.h.b16 %v3911
        %v4849 = vunpack.c.l.b16 %v3912
        %v4850 = vunpack.c.h.b16 %v3912
        %v4851 = vunpack.c.l.b16 %v3913
        %v4852 = vunpack.c.h.b16 %v3913
        %v4853 = vunpack.c.l.b16 %v3914
        %v4854 = vunpack.c.h.b16 %v3914
        %v4855 = vunpack.c.l.b16 %v3915
        %v4856 = vunpack.c.h.b16 %v3915
        %v4857 = vunpack.c.l.b16 %v3916
        %v4858 = vunpack.c.h.b16 %v3916
        %v4859 = vunpack.c.l.b16 %v3917
        %v4860 = vunpack.c.h.b16 %v3917
        %v4861 = vunpack.c.l.b16 %v3918
        %v4862 = vunpack.c.h.b16 %v3918
        %v4863 = vunpack.c.l.b16 %v3919
        %v4864 = vunpack.c.h.b16 %v3919
        %v4865 = vunpack.c.l.b16 %v3920
        %v4866 = vunpack.c.h.b16 %v3920
        %v4867 = vunpack.c.l.b16 %v3921
        %v4868 = vunpack.c.h.b16 %v3921
        %v4869 = vunpack.c.l.b16 %v3922
        %v4870 = vunpack.c.h.b16 %v3922
        %v4871 = vunpack.c.l.b16 %v3923
        %v4872 = vunpack.c.h.b16 %v3923
        %v4873 = vunpack.c.l.b16 %v3924
        %v4874 = vunpack.c.h.b16 %v3924
        %v4875 = vunpack.c.l.b16 %v3925
        %v4876 = vunpack.c.h.b16 %v3925
        %v4877 = vunpack.c.l.b16 %v3926
        %v4878 = vunpack.c.h.b16 %v3926
        %v4879 = vunpack.c.l.b16 %v3927
        %v4880 = vunpack.c.h.b16 %v3927
        %v4881 = vunpack.c.l.b16 %v3928
        %v4882 = vunpack.c.h.b16 %v3928
        %v4883 = vunpack.c.l.b16 %v3929
        %v4884 = vunpack.c.h.b16 %v3929
        %v4885 = vunpack.c.l.b16 %v3930
        %v4886 = vunpack.c.h.b16 %v3930
        %v4887 = vunpack.c.l.b16 %v3931
        %v4888 = vunpack.c.h.b16 %v3931
        %v4889 = vunpack.c.l.b16 %v3932
        %v4890 = vunpack.c.h.b16 %v3932
        %v4891 = vunpack.c.l.b16 %v3933
        %v4892 = vunpack.c.h.b16 %v3933
        %v4893 = vunpack.c.l.b16 %v3934
        %v4894 = vunpack.c.h.b16 %v3934
        %v4895 = vunpack.c.l.b16 %v3935
        %v4896 = vunpack.c.h.b16 %v3935
        %v4897 = vunpack.c.l.b16 %v3936
        %v4898 = vunpack.c.h.b16 %v3936
        %v4899 = vunpack.c.l.b16 %v3937
        %v4900 = vunpack.c.h.b16 %v3937
        %v4901 = vunpack.c.l.b16 %v3938
        %v4902 = vunpack.c.h.b16 %v3938
        %v4903 = vunpack.c.l.b16 %v3939
        %v4904 = vunpack.c.h.b16 %v3939
        %v4905 = vunpack.c.l.b16 %v3940
        %v4906 = vunpack.c.h.b16 %v3940
        %v4907 = vunpack.c.l.b16 %v3941
        %v4908 = vunpack.c.h.b16 %v3941
        %v4909 = vunpack.c.l.b16 %v3942
        %v4910 = vunpack.c.h.b16 %v3942
        %v4911 = vunpack.c.l.b16 %v3943
        %v4912 = vunpack.c.h.b16 %v3943
        %v4913 = vunpack.c.l.b16 %v3944
        %v4914 = vunpack.c.h.b16 %v3944
        %v4915 = vunpack.c.l.b16 %v3945
        %v4916 = vunpack.c.h.b16 %v3945
        %v4917 = vunpack.c.l.b16 %v3946
        %v4918 = vunpack.c.h.b16 %v3946
        %v4919 = vunpack.c.l.b16 %v3947
        %v4920 = vunpack.c.h.b16 %v3947
        %v4921 = vunpack.c.l.b16 %v3948
        %v4922 = vunpack.c.h.b16 %v3948
        %v4923 = vunpack.c.l.b16 %v3949
        %v4924 = vunpack.c.h.b16 %v3949
        %v4925 = vunpack.c.l.b16 %v3950
        %v4926 = vunpack.c.h.b16 %v3950
        %v4927 = vunpack.c.l.b16 %v3951
        %v4928 = vunpack.c.h.b16 %v3951
        %v4929 = vunpack.c.l.b16 %v3952
        %v4930 = vunpack.c.h.b16 %v3952
        %v4931 = vunpack.c.l.b16 %v3953
        %v4932 = vunpack.c.h.b16 %v3953
        %v4933 = vunpack.c.l.b16 %v3954
        %v4934 = vunpack.c.h.b16 %v3954
        %v4935 = vunpack.c.l.b16 %v3955
        %v4936 = vunpack.c.h.b16 %v3955
        %v4937 = vunpack.c.l.b16 %v3956
        %v4938 = vunpack.c.h.b16 %v3956
        %v4939 = vunpack.c.l.b16 %v3957
        %v4940 = vunpack.c.h.b16 %v3957
        %v4941 = vunpack.c.l.b16 %v3958
        %v4942 = vunpack.c.h.b16 %v3958
        %v4943 = vunpack.c.l.b16 %v3959
        %v4944 = vunpack.c.h.b16 %v3959
        %v4945 = vunpack.c.l.b16 %v3960
        %v4946 = vunpack.c.h.b16 %v3960
        %v4947 = vunpack.c.l.b16 %v3961
        %v4948 = vunpack.c.h.b16 %v3961
        %v4949 = vunpack.c.l.b16 %v3962
        %v4950 = vunpack.c.h.b16 %v3962
        %v4951 = vunpack.c.l.b16 %v3963
        %v4952 = vunpack.c.h.b16 %v3963
        %v4953 = vunpack.c.l.b16 %v3964
        %v4954 = vunpack.c.h.b16 %v3964
        %v4955 = vunpack.c.l.b16 %v3965
        %v4956 = vunpack.c.h.b16 %v3965
        %v4957 = vunpack.c.l.b16 %v3966
        %v4958 = vunpack.c.h.b16 %v3966
        %v4959 = vunpack.c.l.b16 %v3967
        %v4960 = vunpack.c.h.b16 %v3967
        %v4961 = vunpack.c.l.b16 %v3968
        %v4962 = vunpack.c.h.b16 %v3968
        %v4963 = vunpack.c.l.b16 %v3969
        %v4964 = vunpack.c.h.b16 %v3969
        %v4965 = vunpack.c.l.b16 %v3970
        %v4966 = vunpack.c.h.b16 %v3970
        %v4967 = vunpack.c.l.b16 %v3971
        %v4968 = vunpack.c.h.b16 %v3971
        %v4969 = vunpack.c.l.b16 %v3972
        %v4970 = vunpack.c.h.b16 %v3972
        %v4971 = vunpack.c.l.b16 %v3973
        %v4972 = vunpack.c.h.b16 %v3973
        %v4973 = vunpack.c.l.b16 %v3974
        %v4974 = vunpack.c.h.b16 %v3974
        %v4975 = vunpack.c.l.b16 %v3975
        %v4976 = vunpack.c.h.b16 %v3975
        %v4977 = vunpack.c.l.b16 %v3976
        %v4978 = vunpack.c.h.b16 %v3976
        %v4979 = vunpack.c.l.b16 %v3977
        %v4980 = vunpack.c.h.b16 %v3977
        %v4981 = vunpack.c.l.b16 %v3978
        %v4982 = vunpack.c.h.b16 %v3978
        %v4983 = vunpack.c.l.b16 %v3979
        %v4984 = vunpack.c.h.b16 %v3979
        %v4985 = vunpack.c.l.b16 %v3980
        %v4986 = vunpack.c.h.b16 %v3980
        %v4987 = vunpack.c.l.b16 %v3981
        %v4988 = vunpack.c.h.b16 %v3981
        %v4989 = vunpack.c.l.b16 %v3982
        %v4990 = vunpack.c.h.b16 %v3982
        %v4991 = vunpack.c.l.b16 %v3983
        %v4992 = vunpack.c.h.b16 %v3983
        %v4993 = vunpack.c.l.b16 %v3984
        %v4994 = vunpack.c.h.b16 %v3984
        %v4995 = vunpack.c.l.b16 %v3985
        %v4996 = vunpack.c.h.b16 %v3985
        %v4997 = vunpack.c.l.b16 %v3986
        %v4998 = vunpack.c.h.b16 %v3986
        %v4999 = vunpack.c.l.b16 %v3987
        %v5000 = vunpack.c.h.b16 %v3987
        %v5001 = vunpack.c.l.b16 %v3988
        %v5002 = vunpack.c.h.b16 %v3988
        %v5003 = vunpack.c.l.b16 %v3989
        %v5004 = vunpack.c.h.b16 %v3989
        %v5005 = vunpack.c.l.b16 %v3990
        %v5006 = vunpack.c.h.b16 %v3990
        %v5007 = vunpack.c.l.b16 %v3991
        %v5008 = vunpack.c.h.b16 %v3991
        %v5009 = vunpack.c.l.b16 %v3992
        %v5010 = vunpack.c.h.b16 %v3992
        %v5011 = vunpack.c.l.b16 %v3993
        %v5012 = vunpack.c.h.b16 %v3993
        %v5013 = vunpack.c.l.b16 %v3994
        %v5014 = vunpack.c.h.b16 %v3994
        %v5015 = vunpack.c.l.b16 %v3995
        %v5016 = vunpack.c.h.b16 %v3995
        %v5017 = vunpack.c.l.b16 %v3996
        %v5018 = vunpack.c.h.b16 %v3996
        %v5019 = vunpack.c.l.b16 %v3997
        %v5020 = vunpack.c.h.b16 %v3997
        %v5021 = vunpack.c.l.b16 %v3998
        %v5022 = vunpack.c.h.b16 %v3998
        %v5023 = vunpack.c.l.b16 %v3999
        %v5024 = vunpack.c.h.b16 %v3999
        %v5025 = vunpack.c.l.b16 %v4000
        %v5026 = vunpack.c.h.b16 %v4000
        %v5027 = vunpack.c.l.b16 %v4001
        %v5028 = vunpack.c.h.b16 %v4001
        %v5029 = vunpack.c.l.b16 %v4002
        %v5030 = vunpack.c.h.b16 %v4002
        %v5031 = vunpack.c.l.b16 %v4003
        %v5032 = vunpack.c.h.b16 %v4003
        %v5033 = vunpack.c.l.b16 %v4004
        %v5034 = vunpack.c.h.b16 %v4004
        %v5035 = vunpack.c.l.b16 %v4005
        %v5036 = vunpack.c.h.b16 %v4005
        %v5037 = vunpack.c.l.b16 %v4006
        %v5038 = vunpack.c.h.b16 %v4006
        %v5039 = vunpack.c.l.b16 %v4007
        %v5040 = vunpack.c.h.b16 %v4007
        %v5041 = vunpack.c.l.b16 %v4008
        %v5042 = vunpack.c.h.b16 %v4008
        %v5043 = vunpack.c.l.b16 %v4009
        %v5044 = vunpack.c.h.b16 %v4009
        %v5045 = vunpack.c.l.b16 %v4010
        %v5046 = vunpack.c.h.b16 %v4010
        %v5047 = vunpack.c.l.b16 %v4011
        %v5048 = vunpack.c.h.b16 %v4011
        %v5049 = vunpack.c.l.b16 %v4012
        %v5050 = vunpack.c.h.b16 %v4012
        %v5051 = vunpack.c.l.b16 %v4013
        %v5052 = vunpack.c.h.b16 %v4013
        %v5053 = vunpack.c.l.b16 %v4014
        %v5054 = vunpack.c.h.b16 %v4014
        %v5055 = vunpack.c.l.b16 %v4015
        %v5056 = vunpack.c.h.b16 %v4015
        %v5057 = vunpack.c.l.b16 %v4016
        %v5058 = vunpack.c.h.b16 %v4016
        %v5059 = vunpack.c.l.b16 %v4017
        %v5060 = vunpack.c.h.b16 %v4017
        %v5061 = vunpack.c.l.b16 %v4018
        %v5062 = vunpack.c.h.b16 %v4018
        %v5063 = vunpack.c.l.b16 %v4019
        %v5064 = vunpack.c.h.b16 %v4019
        %v5065 = vunpack.c.l.b16 %v4020
        %v5066 = vunpack.c.h.b16 %v4020
        %v5067 = vunpack.c.l.b16 %v4021
        %v5068 = vunpack.c.h.b16 %v4021
        %v5069 = vunpack.c.l.b16 %v4022
        %v5070 = vunpack.c.h.b16 %v4022
        %v5071 = vunpack.c.l.b16 %v4023
        %v5072 = vunpack.c.h.b16 %v4023
        %v5073 = vunpack.c.l.b16 %v4024
        %v5074 = vunpack.c.h.b16 %v4024
        %v5075 = vunpack.c.l.b16 %v4025
        %v5076 = vunpack.c.h.b16 %v4025
        %v5077 = vunpack.c.l.b16 %v4026
        %v5078 = vunpack.c.h.b16 %v4026
        %v5079 = vunpack.c.l.b16 %v4027
        %v5080 = vunpack.c.h.b16 %v4027
        %v5081 = vunpack.c.l.b16 %v4028
        %v5082 = vunpack.c.h.b16 %v4028
        %v5083 = vunpack.c.l.b16 %v4029
        %v5084 = vunpack.c.h.b16 %v4029
        %v5085 = vunpack.c.l.b16 %v4030
        %v5086 = vunpack.c.h.b16 %v4030
        %v5087 = vunpack.c.l.b16 %v4031
        %v5088 = vunpack.c.h.b16 %v4031
        %v5089 = vunpack.c.l.b16 %v4032
        %v5090 = vunpack.c.h.b16 %v4032
        %v5091 = vunpack.c.l.b16 %v4033
        %v5092 = vunpack.c.h.b16 %v4033
        %v5093 = vunpack.c.l.b16 %v4034
        %v5094 = vunpack.c.h.b16 %v4034
        %v5095 = vunpack.c.l.b16 %v4035
        %v5096 = vunpack.c.h.b16 %v4035
        %v5097 = vunpack.c.l.b16 %v4036
        %v5098 = vunpack.c.h.b16 %v4036
        %v5099 = vunpack.c.l.b16 %v4037
        %v5100 = vunpack.c.h.b16 %v4037
        %v5101 = vunpack.c.l.b16 %v4038
        %v5102 = vunpack.c.h.b16 %v4038
        %v5103 = vunpack.c.l.b16 %v4039
        %v5104 = vunpack.c.h.b16 %v4039
        %v5105 = vunpack.c.l.b16 %v4040
        %v5106 = vunpack.c.h.b16 %v4040
        %v5107 = vunpack.c.l.b16 %v4041
        %v5108 = vunpack.c.h.b16 %v4041
        %v5109 = vunpack.c.l.b16 %v4042
        %v5110 = vunpack.c.h.b16 %v4042
        %v5111 = vunpack.c.l.b16 %v4043
        %v5112 = vunpack.c.h.b16 %v4043
        %v5113 = vunpack.c.l.b16 %v4044
        %v5114 = vunpack.c.h.b16 %v4044
        %v5115 = vunpack.c.l.b16 %v4045
        %v5116 = vunpack.c.h.b16 %v4045
        %v5117 = vunpack.c.l.b16 %v4046
        %v5118 = vunpack.c.h.b16 %v4046
        %v5119 = vunpack.c.l.b16 %v4047
        %v5120 = vunpack.c.h.b16 %v4047
        %v5121 = vunpack.c.l.b16 %v4048
        %v5122 = vunpack.c.h.b16 %v4048
        %v5123 = vunpack.c.l.b16 %v4049
        %v5124 = vunpack.c.h.b16 %v4049
        %v5125 = vunpack.c.l.b16 %v4050
        %v5126 = vunpack.c.h.b16 %v4050
        %v5127 = vunpack.c.l.b16 %v4051
        %v5128 = vunpack.c.h.b16 %v4051
        %v5129 = vunpack.c.l.b16 %v4052
        %v5130 = vunpack.c.h.b16 %v4052
        %v5131 = vunpack.c.l.b16 %v4053
        %v5132 = vunpack.c.h.b16 %v4053
        %v5133 = vunpack.c.l.b16 %v4054
        %v5134 = vunpack.c.h.b16 %v4054
        %v5135 = vunpack.c.l.b16 %v4055
        %v5136 = vunpack.c.h.b16 %v4055
        %v5137 = vunpack.c.l.b16 %v4056
        %v5138 = vunpack.c.h.b16 %v4056
        %v5139 = vunpack.c.l.b16 %v4057
        %v5140 = vunpack.c.h.b16 %v4057
        %v5141 = vunpack.c.l.b16 %v4058
        %v5142 = vunpack.c.h.b16 %v4058
        %v5143 = vunpack.c.l.b16 %v4059
        %v5144 = vunpack.c.h.b16 %v4059
        %v5145 = vunpack.c.l.b16 %v4060
        %v5146 = vunpack.c.h.b16 %v4060
        %v5147 = vunpack.c.l.b16 %v4061
        %v5148 = vunpack.c.h.b16 %v4061
        %v5149 = vunpack.c.l.b16 %v4062
        %v5150 = vunpack.c.h.b16 %v4062
        %v5151 = vunpack.c.l.b16 %v4063
        %v5152 = vunpack.c.h.b16 %v4063
        %v5153 = vunpack.c.l.b16 %v4064
        %v5154 = vunpack.c.h.b16 %v4064
        %v5155 = vunpack.c.l.b16 %v4065
        %v5156 = vunpack.c.h.b16 %v4065
        %v5157 = vunpack.c.l.b16 %v4066
        %v5158 = vunpack.c.h.b16 %v4066
        %v5159 = vunpack.c.l.b16 %v4067
        %v5160 = vunpack.c.h.b16 %v4067
        %v5161 = vunpack.c.l.b16 %v4068
        %v5162 = vunpack.c.h.b16 %v4068
        %v5163 = vunpack.c.l.b16 %v4069
        %v5164 = vunpack.c.h.b16 %v4069
        %v5165 = vunpack.c.l.b16 %v4070
        %v5166 = vunpack.c.h.b16 %v4070
        %v5167 = vunpack.c.l.b16 %v4071
        %v5168 = vunpack.c.h.b16 %v4071
        %v5169 = vunpack.c.l.b16 %v4072
        %v5170 = vunpack.c.h.b16 %v4072
        %v5171 = vunpack.c.l.b16 %v4073
        %v5172 = vunpack.c.h.b16 %v4073
        %v5173 = vunpack.c.l.b16 %v4074
        %v5174 = vunpack.c.h.b16 %v4074
        %v5175 = vunpack.c.l.b16 %v4075
        %v5176 = vunpack.c.h.b16 %v4075
        %v5177 = vunpack.c.l.b16 %v4076
        %v5178 = vunpack.c.h.b16 %v4076
        %v5179 = vunpack.c.l.b16 %v4077
        %v5180 = vunpack.c.h.b16 %v4077
        %v5181 = vunpack.c.l.b16 %v4078
        %v5182 = vunpack.c.h.b16 %v4078
        %v5183 = vunpack.c.l.b16 %v4079
        %v5184 = vunpack.c.h.b16 %v4079
        %v5185 = vunpack.c.l.b16 %v4080
        %v5186 = vunpack.c.h.b16 %v4080
        %v5187 = vunpack.c.l.b16 %v4081
        %v5188 = vunpack.c.h.b16 %v4081
        %v5189 = vunpack.c.l.b16 %v4082
        %v5190 = vunpack.c.h.b16 %v4082
        %v5191 = vunpack.c.l.b16 %v4083
        %v5192 = vunpack.c.h.b16 %v4083
        %v5193 = vunpack.c.l.b16 %v4084
        %v5194 = vunpack.c.h.b16 %v4084
        %v5195 = vunpack.c.l.b16 %v4085
        %v5196 = vunpack.c.h.b16 %v4085
        %v5197 = vunpack.c.l.b16 %v4086
        %v5198 = vunpack.c.h.b16 %v4086
        %v5199 = vunpack.c.l.b16 %v4087
        %v5200 = vunpack.c.h.b16 %v4087
        %v5201 = vunpack.c.l.b16 %v4088
        %v5202 = vunpack.c.h.b16 %v4088
        %v5203 = vunpack.c.l.b16 %v4089
        %v5204 = vunpack.c.h.b16 %v4089
        %v5205 = vunpack.c.l.b16 %v4090
        %v5206 = vunpack.c.h.b16 %v4090
        %v5207 = vunpack.c.l.b16 %v4091
        %v5208 = vunpack.c.h.b16 %v4091
        %v5209 = vunpack.c.l.b16 %v4092
        %v5210 = vunpack.c.h.b16 %v4092
        %v5211 = vunpack.c.l.b16 %v4093
        %v5212 = vunpack.c.h.b16 %v4093
        %v5213 = vunpack.c.l.b16 %v4094
        %v5214 = vunpack.c.h.b16 %v4094
        %v5215 = vunpack.c.l.b16 %v4095
        %v5216 = vunpack.c.h.b16 %v4095
        %v5217 = vunpack.c.l.b16 %v4096
        %v5218 = vunpack.c.h.b16 %v4096
        %v5219 = vunpack.c.l.b16 %v4097
        %v5220 = vunpack.c.h.b16 %v4097
        %v5221 = vunpack.c.l.b16 %v4098
        %v5222 = vunpack.c.h.b16 %v4098
        %v5223 = vunpack.c.l.b16 %v4099
        %v5224 = vunpack.c.h.b16 %v4099
        %v5225 = vunpack.c.l.b16 %v4100
        %v5226 = vunpack.c.h.b16 %v4100
        %v5227 = vunpack.c.l.b16 %v4101
        %v5228 = vunpack.c.h.b16 %v4101
        %v5229 = vunpack.c.l.b16 %v4102
        %v5230 = vunpack.c.h.b16 %v4102
        %v5231 = vunpack.c.l.b16 %v4103
        %v5232 = vunpack.c.h.b16 %v4103
        %v5233 = vunpack.c.l.b16 %v4104
        %v5234 = vunpack.c.h.b16 %v4104
        %v5235 = vunpack.c.l.b16 %v4105
        %v5236 = vunpack.c.h.b16 %v4105
        %v5237 = vunpack.c.l.b16 %v4106
        %v5238 = vunpack.c.h.b16 %v4106
        %v5239 = vunpack.c.l.b16 %v4107
        %v5240 = vunpack.c.h.b16 %v4107
        %v5241 = vunpack.c.l.b16 %v4108
        %v5242 = vunpack.c.h.b16 %v4108
        %v5243 = vunpack.c.l.b16 %v4109
        %v5244 = vunpack.c.h.b16 %v4109
        %v5245 = vunpack.c.l.b16 %v4110
        %v5246 = vunpack.c.h.b16 %v4110
        %v5247 = vunpack.c.l.b16 %v4111
        %v5248 = vunpack.c.h.b16 %v4111
        %v5249 = vunpack.c.l.b16 %v4112
        %v5250 = vunpack.c.h.b16 %v4112
        %v5251 = vunpack.c.l.b16 %v4113
        %v5252 = vunpack.c.h.b16 %v4113
        %v5253 = vunpack.c.l.b16 %v4114
        %v5254 = vunpack.c.h.b16 %v4114
        %v5255 = vunpack.c.l.b16 %v4115
        %v5256 = vunpack.c.h.b16 %v4115
        %v5257 = vunpack.c.l.b16 %v4116
        %v5258 = vunpack.c.h.b16 %v4116
        %v5259 = vunpack.c.l.b16 %v4117
        %v5260 = vunpack.c.h.b16 %v4117
        %v5261 = vunpack.c.l.b16 %v4118
        %v5262 = vunpack.c.h.b16 %v4118
        %v5263 = vunpack.c.l.b16 %v4119
        %v5264 = vunpack.c.h.b16 %v4119
        %v5265 = vunpack.c.l.b16 %v4120
        %v5266 = vunpack.c.h.b16 %v4120
        %v5267 = vunpack.c.l.b16 %v4121
        %v5268 = vunpack.c.h.b16 %v4121
        %v5269 = vunpack.c.l.b16 %v4122
        %v5270 = vunpack.c.h.b16 %v4122
        %v5271 = vunpack.c.l.b16 %v4123
        %v5272 = vunpack.c.h.b16 %v4123
        %v5273 = vunpack.c.l.b16 %v4124
        %v5274 = vunpack.c.h.b16 %v4124
        %v5275 = vunpack.c.l.b16 %v4125
        %v5276 = vunpack.c.h.b16 %v4125
        %v5277 = vunpack.c.l.b16 %v4126
        %v5278 = vunpack.c.h.b16 %v4126
        %v5279 = vunpack.c.l.b16 %v4127
        %v5280 = vunpack.c.h.b16 %v4127
        %v5281 = vunpack.c.l.b16 %v4128
        %v5282 = vunpack.c.h.b16 %v4128
        %v5283 = vunpack.c.l.b16 %v4129
        %v5284 = vunpack.c.h.b16 %v4129
        %v5285 = vunpack.c.l.b16 %v4130
        %v5286 = vunpack.c.h.b16 %v4130
        %v5287 = vunpack.c.l.b16 %v4131
        %v5288 = vunpack.c.h.b16 %v4131
        %v5289 = vunpack.c.l.b16 %v4132
        %v5290 = vunpack.c.h.b16 %v4132
        %v5291 = vunpack.c.l.b16 %v4133
        %v5292 = vunpack.c.h.b16 %v4133
        %v5293 = vunpack.c.l.b16 %v4134
        %v5294 = vunpack.c.h.b16 %v4134
        %v5295 = vunpack.c.l.b16 %v4135
        %v5296 = vunpack.c.h.b16 %v4135
        %v5297 = vunpack.c.l.b16 %v4136
        %v5298 = vunpack.c.h.b16 %v4136
        %v5299 = vunpack.c.l.b16 %v4137
        %v5300 = vunpack.c.h.b16 %v4137
        %v5301 = vunpack.c.l.b16 %v4138
        %v5302 = vunpack.c.h.b16 %v4138
        %v5303 = vunpack.c.l.b16 %v4139
        %v5304 = vunpack.c.h.b16 %v4139
        %v5305 = vunpack.c.l.b16 %v4140
        %v5306 = vunpack.c.h.b16 %v4140
        %v5307 = vunpack.c.l.b16 %v4141
        %v5308 = vunpack.c.h.b16 %v4141
        %v5309 = vunpack.c.l.b16 %v4142
        %v5310 = vunpack.c.h.b16 %v4142
        %v5311 = vunpack.c.l.b16 %v4143
        %v5312 = vunpack.c.h.b16 %v4143
        %v5313 = vunpack.c.l.b16 %v4144
        %v5314 = vunpack.c.h.b16 %v4144
        %v5315 = vunpack.c.l.b16 %v4145
        %v5316 = vunpack.c.h.b16 %v4145
        %v5317 = vunpack.c.l.b16 %v4146
        %v5318 = vunpack.c.h.b16 %v4146
        %v5319 = vunpack.c.l.b16 %v4147
        %v5320 = vunpack.c.h.b16 %v4147
        %v5321 = vunpack.c.l.b16 %v4148
        %v5322 = vunpack.c.h.b16 %v4148
        %v5323 = vunpack.c.l.b16 %v4149
        %v5324 = vunpack.c.h.b16 %v4149
        %v5325 = vunpack.c.l.b16 %v4150
        %v5326 = vunpack.c.h.b16 %v4150
        %v5327 = vunpack.c.l.b16 %v4151
        %v5328 = vunpack.c.h.b16 %v4151
        %v5329 = vunpack.c.l.b16 %v4152
        %v5330 = vunpack.c.h.b16 %v4152
        %v5331 = vunpack.c.l.b16 %v4153
        %v5332 = vunpack.c.h.b16 %v4153
        %v5333 = vunpack.c.l.b16 %v4154
        %v5334 = vunpack.c.h.b16 %v4154
        %v5335 = vunpack.c.l.b16 %v4155
        %v5336 = vunpack.c.h.b16 %v4155
        %v5337 = vunpack.c.l.b16 %v4156
        %v5338 = vunpack.c.h.b16 %v4156
        %v5339 = vunpack.c.l.b16 %v4157
        %v5340 = vunpack.c.h.b16 %v4157
        %v5341 = vunpack.c.l.b16 %v4158
        %v5342 = vunpack.c.h.b16 %v4158
        %v5343 = vpack.c.b16 %v4581, %v4575
        %v5344 = vpack.c.b16 %v4582, %v4576
        %v5345 = vpack.c.b16 %v4583, %v4577
        %v5346 = vpack.c.b16 %v4584, %v4578
        %v5347 = vpack.c.b16 %v4585, %v4579
        %v5348 = vpack.c.b16 %v4586, %v4580
        %v5349 = vpack.c.b16 %v4593, %v4587
        %v5350 = vpack.c.b16 %v4594, %v4588
        %v5351 = vpack.c.b16 %v4595, %v4589
        %v5352 = vpack.c.b16 %v4596, %v4590
        %v5353 = vpack.c.b16 %v4597, %v4591
        %v5354 = vpack.c.b16 %v4598, %v4592
        %v5355 = vpack.c.b16 %v4605, %v4599
        %v5356 = vpack.c.b16 %v4606, %v4600
        %v5357 = vpack.c.b16 %v4607, %v4601
        %v5358 = vpack.c.b16 %v4608, %v4602
        %v5359 = vpack.c.b16 %v4609, %v4603
        %v5360 = vpack.c.b16 %v4610, %v4604
        %v5361 = vpack.c.b16 %v4617, %v4611
        %v5362 = vpack.c.b16 %v4618, %v4612
        %v5363 = vpack.c.b16 %v4619, %v4613
        %v5364 = vpack.c.b16 %v4620, %v4614
        %v5365 = vpack.c.b16 %v4621, %v4615
        %v5366 = vpack.c.b16 %v4622, %v4616
        %v5367 = vpack.c.b16 %v4629, %v4623
        %v5368 = vpack.c.b16 %v4630, %v4624
        %v5369 = vpack.c.b16 %v4631, %v4625
        %v5370 = vpack.c.b16 %v4632, %v4626
        %v5371 = vpack.c.b16 %v4633, %v4627
        %v5372 = vpack.c.b16 %v4634, %v4628
        %v5373 = vpack.c.b16 %v4641, %v4635
        %v5374 = vpack.c.b16 %v4642, %v4636
        %v5375 = vpack.c.b16 %v4643, %v4637
        %v5376 = vpack.c.b16 %v4644, %v4638
        %v5377 = vpack.c.b16 %v4645, %v4639
        %v5378 = vpack.c.b16 %v4646, %v4640
        %v5379 = vpack.c.b16 %v4653, %v4647
        %v5380 = vpack.c.b16 %v4654, %v4648
        %v5381 = vpack.c.b16 %v4655, %v4649
        %v5382 = vpack.c.b16 %v4656, %v4650
        %v5383 = vpack.c.b16 %v4657, %v4651
        %v5384 = vpack.c.b16 %v4658, %v4652
        %v5385 = vpack.c.b16 %v4665, %v4659
        %v5386 = vpack.c.b16 %v4666, %v4660
        %v5387 = vpack.c.b16 %v4667, %v4661
        %v5388 = vpack.c.b16 %v4668, %v4662
        %v5389 = vpack.c.b16 %v4669, %v4663
        %v5390 = vpack.c.b16 %v4670, %v4664
        %v5391 = vpack.c.b16 %v4677, %v4671
        %v5392 = vpack.c.b16 %v4678, %v4672
        %v5393 = vpack.c.b16 %v4679, %v4673
        %v5394 = vpack.c.b16 %v4680, %v4674
        %v5395 = vpack.c.b16 %v4681, %v4675
        %v5396 = vpack.c.b16 %v4682, %v4676
        %v5397 = vpack.c.b16 %v4689, %v4683
        %v5398 = vpack.c.b16 %v4690, %v4684
        %v5399 = vpack.c.b16 %v4691, %v4685
        %v5400 = vpack.c.b16 %v4692, %v4686
        %v5401 = vpack.c.b16 %v4693, %v4687
        %v5402 = vpack.c.b16 %v4694, %v4688
        %v5403 = vpack.c.b16 %v4701, %v4695
        %v5404 = vpack.c.b16 %v4702, %v4696
        %v5405 = vpack.c.b16 %v4703, %v4697
        %v5406 = vpack.c.b16 %v4704, %v4698
        %v5407 = vpack.c.b16 %v4705, %v4699
        %v5408 = vpack.c.b16 %v4706, %v4700
        %v5409 = vpack.c.b16 %v4713, %v4707
        %v5410 = vpack.c.b16 %v4714, %v4708
        %v5411 = vpack.c.b16 %v4715, %v4709
        %v5412 = vpack.c.b16 %v4716, %v4710
        %v5413 = vpack.c.b16 %v4717, %v4711
        %v5414 = vpack.c.b16 %v4718, %v4712
        %v5415 = vpack.c.b16 %v4725, %v4719
        %v5416 = vpack.c.b16 %v4726, %v4720
        %v5417 = vpack.c.b16 %v4727, %v4721
        %v5418 = vpack.c.b16 %v4728, %v4722
        %v5419 = vpack.c.b16 %v4729, %v4723
        %v5420 = vpack.c.b16 %v4730, %v4724
        %v5421 = vpack.c.b16 %v4737, %v4731
        %v5422 = vpack.c.b16 %v4738, %v4732
        %v5423 = vpack.c.b16 %v4739, %v4733
        %v5424 = vpack.c.b16 %v4740, %v4734
        %v5425 = vpack.c.b16 %v4741, %v4735
        %v5426 = vpack.c.b16 %v4742, %v4736
        %v5427 = vpack.c.b16 %v4749, %v4743
        %v5428 = vpack.c.b16 %v4750, %v4744
        %v5429 = vpack.c.b16 %v4751, %v4745
        %v5430 = vpack.c.b16 %v4752, %v4746
        %v5431 = vpack.c.b16 %v4753, %v4747
        %v5432 = vpack.c.b16 %v4754, %v4748
        %v5433 = vpack.c.b16 %v4761, %v4755
        %v5434 = vpack.c.b16 %v4762, %v4756
        %v5435 = vpack.c.b16 %v4763, %v4757
        %v5436 = vpack.c.b16 %v4764, %v4758
        %v5437 = vpack.c.b16 %v4765, %v4759
        %v5438 = vpack.c.b16 %v4766, %v4760
        %v5439 = vpack.c.b16 %v4773, %v4767
        %v5440 = vpack.c.b16 %v4774, %v4768
        %v5441 = vpack.c.b16 %v4775, %v4769
        %v5442 = vpack.c.b16 %v4776, %v4770
        %v5443 = vpack.c.b16 %v4777, %v4771
        %v5444 = vpack.c.b16 %v4778, %v4772
        %v5445 = vpack.c.b16 %v4785, %v4779
        %v5446 = vpack.c.b16 %v4786, %v4780
        %v5447 = vpack.c.b16 %v4787, %v4781
        %v5448 = vpack.c.b16 %v4788, %v4782
        %v5449 = vpack.c.b16 %v4789, %v4783
        %v5450 = vpack.c.b16 %v4790, %v4784
        %v5451 = vpack.c.b16 %v4797, %v4791
        %v5452 = vpack.c.b16 %v4798, %v4792
        %v5453 = vpack.c.b16 %v4799, %v4793
        %v5454 = vpack.c.b16 %v4800, %v4794
        %v5455 = vpack.c.b16 %v4801, %v4795
        %v5456 = vpack.c.b16 %v4802, %v4796
        %v5457 = vpack.c.b16 %v4809, %v4803
        %v5458 = vpack.c.b16 %v4810, %v4804
        %v5459 = vpack.c.b16 %v4811, %v4805
        %v5460 = vpack.c.b16 %v4812, %v4806
        %v5461 = vpack.c.b16 %v4813, %v4807
        %v5462 = vpack.c.b16 %v4814, %v4808
        %v5463 = vpack.c.b16 %v4821, %v4815
        %v5464 = vpack.c.b16 %v4822, %v4816
        %v5465 = vpack.c.b16 %v4823, %v4817
        %v5466 = vpack.c.b16 %v4824, %v4818
        %v5467 = vpack.c.b16 %v4825, %v4819
        %v5468 = vpack.c.b16 %v4826, %v4820
        %v5469 = vpack.c.b16 %v4833, %v4827
        %v5470 = vpack.c.b16 %v4834, %v4828
        %v5471 = vpack.c.b16 %v4835, %v4829
        %v5472 = vpack.c.b16 %v4836, %v4830
        %v5473 = vpack.c.b16 %v4837, %v4831
        %v5474 = vpack.c.b16 %v4838, %v4832
        %v5475 = vpack.c.b16 %v4845, %v4839
        %v5476 = vpack.c.b16 %v4846, %v4840
        %v5477 = vpack.c.b16 %v4847, %v4841
        %v5478 = vpack.c.b16 %v4848, %v4842
        %v5479 = vpack.c.b16 %v4849, %v4843
        %v5480 = vpack.c.b16 %v4850, %v4844
        %v5481 = vpack.c.b16 %v4857, %v4851
        %v5482 = vpack.c.b16 %v4858, %v4852
        %v5483 = vpack.c.b16 %v4859, %v4853
        %v5484 = vpack.c.b16 %v4860, %v4854
        %v5485 = vpack.c.b16 %v4861, %v4855
        %v5486 = vpack.c.b16 %v4862, %v4856
        %v5487 = vpack.c.b16 %v4869, %v4863
        %v5488 = vpack.c.b16 %v4870, %v4864
        %v5489 = vpack.c.b16 %v4871, %v4865
        %v5490 = vpack.c.b16 %v4872, %v4866
        %v5491 = vpack.c.b16 %v4873, %v4867
        %v5492 = vpack.c.b16 %v4874, %v4868
        %v5493 = vpack.c.b16 %v4881, %v4875
        %v5494 = vpack.c.b16 %v4882, %v4876
        %v5495 = vpack.c.b16 %v4883, %v4877
        %v5496 = vpack.c.b16 %v4884, %v4878
        %v5497 = vpack.c.b16 %v4885, %v4879
        %v5498 = vpack.c.b16 %v4886, %v4880
        %v5499 = vpack.c.b16 %v4893, %v4887
        %v5500 = vpack.c.b16 %v4894, %v4888
        %v5501 = vpack.c.b16 %v4895, %v4889
        %v5502 = vpack.c.b16 %v4896, %v4890
        %v5503 = vpack.c.b16 %v4897, %v4891
        %v5504 = vpack.c.b16 %v4898, %v4892
        %v5505 = vpack.c.b16 %v4905, %v4899
        %v5506 = vpack.c.b16 %v4906, %v4900
        %v5507 = vpack.c.b16 %v4907, %v4901
        %v5508 = vpack.c.b16 %v4908, %v4902
        %v5509 = vpack.c.b16 %v4909, %v4903
        %v5510 = vpack.c.b16 %v4910, %v4904
        %v5511 = vpack.c.b16 %v4917, %v4911
        %v5512 = vpack.c.b16 %v4918, %v4912
        %v5513 = vpack.c.b16 %v4919, %v4913
        %v5514 = vpack.c.b16 %v4920, %v4914
        %v5515 = vpack.c.b16 %v4921, %v4915
        %v5516 = vpack.c.b16 %v4922, %v4916
        %v5517 = vpack.c.b16 %v4929, %v4923
        %v5518 = vpack.c.b16 %v4930, %v4924
        %v5519 = vpack.c.b16 %v4931, %v4925
        %v5520 = vpack.c.b16 %v4932, %v4926
        %v5521 = vpack.c.b16 %v4933, %v4927
        %v5522 = vpack.c.b16 %v4934, %v4928
        %v5523 = vpack.c.b16 %v4941, %v4935
        %v5524 = vpack.c.b16 %v4942, %v4936
        %v5525 = vpack.c.b16 %v4943, %v4937
        %v5526 = vpack.c.b16 %v4944, %v4938
        %v5527 = vpack.c.b16 %v4945, %v4939
        %v5528 = vpack.c.b16 %v4946, %v4940
        %v5529 = vpack.c.b16 %v4953, %v4947
        %v5530 = vpack.c.b16 %v4954, %v4948
        %v5531 = vpack.c.b16 %v4955, %v4949
        %v5532 = vpack.c.b16 %v4956, %v4950
        %v5533 = vpack.c.b16 %v4957, %v4951
        %v5534 = vpack.c.b16 %v4958, %v4952
        %v5535 = vpack.c.b16 %v4965, %v4959
        %v5536 = vpack.c.b16 %v4966, %v4960
        %v5537 = vpack.c.b16 %v4967, %v4961
        %v5538 = vpack.c.b16 %v4968, %v4962
        %v5539 = vpack.c.b16 %v4969, %v4963
        %v5540 = vpack.c.b16 %v4970, %v4964
        %v5541 = vpack.c.b16 %v4977, %v4971
        %v5542 = vpack.c.b16 %v4978, %v4972
        %v5543 = vpack.c.b16 %v4979, %v4973
        %v5544 = vpack.c.b16 %v4980, %v4974
        %v5545 = vpack.c.b16 %v4981, %v4975
        %v5546 = vpack.c.b16 %v4982, %v4976
        %v5547 = vpack.c.b16 %v4989, %v4983
        %v5548 = vpack.c.b16 %v4990, %v4984
        %v5549 = vpack.c.b16 %v4991, %v4985
        %v5550 = vpack.c.b16 %v4992, %v4986
        %v5551 = vpack.c.b16 %v4993, %v4987
        %v5552 = vpack.c.b16 %v4994, %v4988
        %v5553 = vpack.c.b16 %v5001, %v4995
        %v5554 = vpack.c.b16 %v5002, %v4996
        %v5555 = vpack.c.b16 %v5003, %v4997
        %v5556 = vpack.c.b16 %v5004, %v4998
        %v5557 = vpack.c.b16 %v5005, %v4999
        %v5558 = vpack.c.b16 %v5006, %v5000
        %v5559 = vpack.c.b16 %v5013, %v5007
        %v5560 = vpack.c.b16 %v5014, %v5008
        %v5561 = vpack.c.b16 %v5015, %v5009
        %v5562 = vpack.c.b16 %v5016, %v5010
        %v5563 = vpack.c.b16 %v5017, %v5011
        %v5564 = vpack.c.b16 %v5018, %v5012
        %v5565 = vpack.c.b16 %v5025, %v5019
        %v5566 = vpack.c.b16 %v5026, %v5020
        %v5567 = vpack.c.b16 %v5027, %v5021
        %v5568 = vpack.c.b16 %v5028, %v5022
        %v5569 = vpack.c.b16 %v5029, %v5023
        %v5570 = vpack.c.b16 %v5030, %v5024
        %v5571 = vpack.c.b16 %v5037, %v5031
        %v5572 = vpack.c.b16 %v5038, %v5032
        %v5573 = vpack.c.b16 %v5039, %v5033
        %v5574 = vpack.c.b16 %v5040, %v5034
        %v5575 = vpack.c.b16 %v5041, %v5035
        %v5576 = vpack.c.b16 %v5042, %v5036
        %v5577 = vpack.c.b16 %v5049, %v5043
        %v5578 = vpack.c.b16 %v5050, %v5044
        %v5579 = vpack.c.b16 %v5051, %v5045
        %v5580 = vpack.c.b16 %v5052, %v5046
        %v5581 = vpack.c.b16 %v5053, %v5047
        %v5582 = vpack.c.b16 %v5054, %v5048
        %v5583 = vpack.c.b16 %v5061, %v5055
        %v5584 = vpack.c.b16 %v5062, %v5056
        %v5585 = vpack.c.b16 %v5063, %v5057
        %v5586 = vpack.c.b16 %v5064, %v5058
        %v5587 = vpack.c.b16 %v5065, %v5059
        %v5588 = vpack.c.b16 %v5066, %v5060
        %v5589 = vpack.c.b16 %v5073, %v5067
        %v5590 = vpack.c.b16 %v5074, %v5068
        %v5591 = vpack.c.b16 %v5075, %v5069
        %v5592 = vpack.c.b16 %v5076, %v5070
        %v5593 = vpack.c.b16 %v5077, %v5071
        %v5594 = vpack.c.b16 %v5078, %v5072
        %v5595 = vpack.c.b16 %v5085, %v5079
        %v5596 = vpack.c.b16 %v5086, %v5080
        %v5597 = vpack.c.b16 %v5087, %v5081
        %v5598 = vpack.c.b16 %v5088, %v5082
        %v5599 = vpack.c.b16 %v5089, %v5083
        %v5600 = vpack.c.b16 %v5090, %v5084
        %v5601 = vpack.c.b16 %v5097, %v5091
        %v5602 = vpack.c.b16 %v5098, %v5092
        %v5603 = vpack.c.b16 %v5099, %v5093
        %v5604 = vpack.c.b16 %v5100, %v5094
        %v5605 = vpack.c.b16 %v5101, %v5095
        %v5606 = vpack.c.b16 %v5102, %v5096
        %v5607 = vpack.c.b16 %v5109, %v5103
        %v5608 = vpack.c.b16 %v5110, %v5104
        %v5609 = vpack.c.b16 %v5111, %v5105
        %v5610 = vpack.c.b16 %v5112, %v5106
        %v5611 = vpack.c.b16 %v5113, %v5107
        %v5612 = vpack.c.b16 %v5114, %v5108
        %v5613 = vpack.c.b16 %v5121, %v5115
        %v5614 = vpack.c.b16 %v5122, %v5116
        %v5615 = vpack.c.b16 %v5123, %v5117
        %v5616 = vpack.c.b16 %v5124, %v5118
        %v5617 = vpack.c.b16 %v5125, %v5119
        %v5618 = vpack.c.b16 %v5126, %v5120
        %v5619 = vpack.c.b16 %v5133, %v5127
        %v5620 = vpack.c.b16 %v5134, %v5128
        %v5621 = vpack.c.b16 %v5135, %v5129
        %v5622 = vpack.c.b16 %v5136, %v5130
        %v5623 = vpack.c.b16 %v5137, %v5131
        %v5624 = vpack.c.b16 %v5138, %v5132
        %v5625 = vpack.c.b16 %v5145, %v5139
        %v5626 = vpack.c.b16 %v5146, %v5140
        %v5627 = vpack.c.b16 %v5147, %v5141
        %v5628 = vpack.c.b16 %v5148, %v5142
        %v5629 = vpack.c.b16 %v5149, %v5143
        %v5630 = vpack.c.b16 %v5150, %v5144
        %v5631 = vpack.c.b16 %v5157, %v5151
        %v5632 = vpack.c.b16 %v5158, %v5152
        %v5633 = vpack.c.b16 %v5159, %v5153
        %v5634 = vpack.c.b16 %v5160, %v5154
        %v5635 = vpack.c.b16 %v5161, %v5155
        %v5636 = vpack.c.b16 %v5162, %v5156
        %v5637 = vpack.c.b16 %v5169, %v5163
        %v5638 = vpack.c.b16 %v5170, %v5164
        %v5639 = vpack.c.b16 %v5171, %v5165
        %v5640 = vpack.c.b16 %v5172, %v5166
        %v5641 = vpack.c.b16 %v5173, %v5167
        %v5642 = vpack.c.b16 %v5174, %v5168
        %v5643 = vpack.c.b16 %v5181, %v5175
        %v5644 = vpack.c.b16 %v5182, %v5176
        %v5645 = vpack.c.b16 %v5183, %v5177
        %v5646 = vpack.c.b16 %v5184, %v5178
        %v5647 = vpack.c.b16 %v5185, %v5179
        %v5648 = vpack.c.b16 %v5186, %v5180
        %v5649 = vpack.c.b16 %v5193, %v5187
        %v5650 = vpack.c.b16 %v5194, %v5188
        %v5651 = vpack.c.b16 %v5195, %v5189
        %v5652 = vpack.c.b16 %v5196, %v5190
        %v5653 = vpack.c.b16 %v5197, %v5191
        %v5654 = vpack.c.b16 %v5198, %v5192
        %v5655 = vpack.c.b16 %v5205, %v5199
        %v5656 = vpack.c.b16 %v5206, %v5200
        %v5657 = vpack.c.b16 %v5207, %v5201
        %v5658 = vpack.c.b16 %v5208, %v5202
        %v5659 = vpack.c.b16 %v5209, %v5203
        %v5660 = vpack.c.b16 %v5210, %v5204
        %v5661 = vpack.c.b16 %v5217, %v5211
        %v5662 = vpack.c.b16 %v5218, %v5212
        %v5663 = vpack.c.b16 %v5219, %v5213
        %v5664 = vpack.c.b16 %v5220, %v5214
        %v5665 = vpack.c.b16 %v5221, %v5215
        %v5666 = vpack.c.b16 %v5222, %v5216
        %v5667 = vpack.c.b16 %v5229, %v5223
        %v5668 = vpack.c.b16 %v5230, %v5224
        %v5669 = vpack.c.b16 %v5231, %v5225
        %v5670 = vpack.c.b16 %v5232, %v5226
        %v5671 = vpack.c.b16 %v5233, %v5227
        %v5672 = vpack.c.b16 %v5234, %v5228
        %v5673 = vpack.c.b16 %v5241, %v5235
        %v5674 = vpack.c.b16 %v5242, %v5236
        %v5675 = vpack.c.b16 %v5243, %v5237
        %v5676 = vpack.c.b16 %v5244, %v5238
        %v5677 = vpack.c.b16 %v5245, %v5239
        %v5678 = vpack.c.b16 %v5246, %v5240
        %v5679 = vpack.c.b16 %v5253, %v5247
        %v5680 = vpack.c.b16 %v5254, %v5248
        %v5681 = vpack.c.b16 %v5255, %v5249
        %v5682 = vpack.c.b16 %v5256, %v5250
        %v5683 = vpack.c.b16 %v5257, %v5251
        %v5684 = vpack.c.b16 %v5258, %v5252
        %v5685 = vpack.c.b16 %v5265, %v5259
        %v5686 = vpack.c.b16 %v5266, %v5260
        %v5687 = vpack.c.b16 %v5267, %v5261
        %v5688 = vpack.c.b16 %v5268, %v5262
        %v5689 = vpack.c.b16 %v5269, %v5263
        %v5690 = vpack.c.b16 %v5270, %v5264
        %v5691 = vpack.c.b16 %v5277, %v5271
        %v5692 = vpack.c.b16 %v5278, %v5272
        %v5693 = vpack.c.b16 %v5279, %v5273
        %v5694 = vpack.c.b16 %v5280, %v5274
        %v5695 = vpack.c.b16 %v5281, %v5275
        %v5696 = vpack.c.b16 %v5282, %v5276
        %v5697 = vpack.c.b16 %v5289, %v5283
        %v5698 = vpack.c.b16 %v5290, %v5284
        %v5699 = vpack.c.b16 %v5291, %v5285
        %v5700 = vpack.c.b16 %v5292, %v5286
        %v5701 = vpack.c.b16 %v5293, %v5287
        %v5702 = vpack.c.b16 %v5294, %v5288
        %v5703 = vpack.c.b16 %v5301, %v5295
        %v5704 = vpack.c.b16 %v5302, %v5296
        %v5705 = vpack.c.b16 %v5303, %v5297
        %v5706 = vpack.c.b16 %v5304, %v5298
        %v5707 = vpack.c.b16 %v5305, %v5299
        %v5708 = vpack.c.b16 %v5306, %v5300
        %v5709 = vpack.c.b16 %v5313, %v5307
        %v5710 = vpack.c.b16 %v5314, %v5308
        %v5711 = vpack.c.b16 %v5315, %v5309
        %v5712 = vpack.c.b16 %v5316, %v5310
        %v5713 = vpack.c.b16 %v5317, %v5311
        %v5714 = vpack.c.b16 %v5318, %v5312
        %v5715 = vpack.c.b16 %v5325, %v5319
        %v5716 = vpack.c.b16 %v5326, %v5320
        %v5717 = vpack.c.b16 %v5327, %v5321
        %v5718 = vpack.c.b16 %v5328, %v5322
        %v5719 = vpack.c.b16 %v5329, %v5323
        %v5720 = vpack.c.b16 %v5330, %v5324
        %v5721 = vpack.c.b16 %v5337, %v5331
        %v5722 = vpack.c.b16 %v5338, %v5332
        %v5723 = vpack.c.b16 %v5339, %v5333
        %v5724 = vpack.c.b16 %v5340, %v5334
        %v5725 = vpack.c.b16 %v5341, %v5335
        %v5726 = vpack.c.b16 %v5342, %v5336
        %6111 = vmatprep.subr.bf16.mxu0 %v5344
        %6112 = vmatpush1.bf16.msra.mxu0 %v5343
        %6113 = vmatprep.subr.bf16.mxu0 %v5350
        %6114 = vmatpush1.bf16.msra.mxu0 %v5349
        %6115 = vmatprep.subr.bf16.mxu0 %v5356
        %6116 = vmatpush1.bf16.msra.mxu0 %v5355
        %6117 = vmatprep.subr.bf16.mxu0 %v5362
        %6118 = vmatpush1.bf16.msra.mxu0 %v5361
        %6119 = vmatprep.subr.bf16.mxu0 %v5368
        %6120 = vmatpush1.bf16.msra.mxu0 %v5367
        %6121 = vmatprep.subr.bf16.mxu0 %v5374
        %6122 = vmatpush1.bf16.msra.mxu0 %v5373
        %6123 = vmatprep.subr.bf16.mxu0 %v5380
        %6124 = vmatpush1.bf16.msra.mxu0 %v5379
        %6125 = vmatprep.subr.bf16.mxu0 %v5386
        %6126 = vmatpush1.bf16.msra.mxu0 %v5385
        %6127 = vmatprep.subr.bf16.mxu0 %v5392
        %6128 = vmatpush1.bf16.msra.mxu0 %v5391
        %6129 = vmatprep.subr.bf16.mxu0 %v5398
        %6130 = vmatpush1.bf16.msra.mxu0 %v5397
        %6131 = vmatprep.subr.bf16.mxu0 %v5404
        %6132 = vmatpush1.bf16.msra.mxu0 %v5403
        %6133 = vmatprep.subr.bf16.mxu0 %v5410
        %6134 = vmatpush1.bf16.msra.mxu0 %v5409
        %6135 = vmatprep.subr.bf16.mxu0 %v5416
        %6136 = vmatpush1.bf16.msra.mxu0 %v5415
        %6137 = vmatprep.subr.bf16.mxu0 %v5422
        %6138 = vmatpush1.bf16.msra.mxu0 %v5421
        %6139 = vmatprep.subr.bf16.mxu0 %v5428
        %6140 = vmatpush1.bf16.msra.mxu0 %v5427
        %6141 = vmatprep.subr.bf16.mxu0 %v5434
        %6142 = vmatpush1.bf16.msra.mxu0 %v5433
        %6143 = vmatprep.mubr.bf16.mxu0 %v3768
        %6144 = vmatmul.mubr.bf16.gmra.mrb[0].mxu0 %v3767
        %v6145 = vpop.f32.mrb[0].mxu0
        %v6146 = vadd.f32 %v4164, %v6145
        %v6147 = vpop.f32.mrb[0].mxu0
        %v6148 = vadd.f32 %v4168, %v6147
        %v6149 = vpop.f32.mrb[0].mxu0
        %v6150 = vpop.f32.mrb[0].mxu0
        %6151 = vdwg.mxu0
        %6152 = vmatprep.subr.bf16.mxu0 %v5440
        %6153 = vmatpush1.bf16.msra.mxu0 %v5439
        %6154 = vmatprep.subr.bf16.mxu0 %v5446
        %6155 = vmatpush1.bf16.msra.mxu0 %v5445
        %6156 = vmatprep.subr.bf16.mxu0 %v5452
        %6157 = vmatpush1.bf16.msra.mxu0 %v5451
        %6158 = vmatprep.subr.bf16.mxu0 %v5458
        %6159 = vmatpush1.bf16.msra.mxu0 %v5457
        %6160 = vmatprep.subr.bf16.mxu0 %v5464
        %6161 = vmatpush1.bf16.msra.mxu0 %v5463
        %6162 = vmatprep.subr.bf16.mxu0 %v5470
        %6163 = vmatpush1.bf16.msra.mxu0 %v5469
        %6164 = vmatprep.subr.bf16.mxu0 %v5476
        %6165 = vmatpush1.bf16.msra.mxu0 %v5475
        %6166 = vmatprep.subr.bf16.mxu0 %v5482
        %6167 = vmatpush1.bf16.msra.mxu0 %v5481
        %6168 = vmatprep.subr.bf16.mxu0 %v5488
        %6169 = vmatpush1.bf16.msra.mxu0 %v5487
        %6170 = vmatprep.subr.bf16.mxu0 %v5494
        %6171 = vmatpush1.bf16.msra.mxu0 %v5493
        %6172 = vmatprep.subr.bf16.mxu0 %v5500
        %6173 = vmatpush1.bf16.msra.mxu0 %v5499
        %6174 = vmatprep.subr.bf16.mxu0 %v5506
        %6175 = vmatpush1.bf16.msra.mxu0 %v5505
        %6176 = vmatprep.subr.bf16.mxu0 %v5512
        %6177 = vmatpush1.bf16.msra.mxu0 %v5511
        %6178 = vmatprep.subr.bf16.mxu0 %v5518
        %6179 = vmatpush1.bf16.msra.mxu0 %v5517
        %6180 = vmatprep.subr.bf16.mxu0 %v5524
        %6181 = vmatpush1.bf16.msra.mxu0 %v5523
        %6182 = vmatprep.subr.bf16.mxu0 %v5530
        %6183 = vmatpush1.bf16.msra.mxu0 %v5529
        %6184 = vmatprep.mubr.bf16.mxu0 %v3770
        %6185 = vmatmul.mubr.bf16.gmra.mrb[0].mxu0 %v3769
        %v6186 = vpop.f32.mrb[0].mxu0
        %v6187 = vadd.f32 %v6146, %v6186
        %v6188 = vpop.f32.mrb[0].mxu0
        %v6189 = vadd.f32 %v6148, %v6188
        %v6190 = vpop.f32.mrb[0].mxu0
        %v6191 = vpop.f32.mrb[0].mxu0
        %6192 = vdwg.mxu0
        %6193 = vmatprep.subr.bf16.mxu0 %v5536
        %6194 = vmatpush1.bf16.msra.mxu0 %v5535
        %6195 = vmatprep.subr.bf16.mxu0 %v5542
        %6196 = vmatpush1.bf16.msra.mxu0 %v5541
        %6197 = vmatprep.subr.bf16.mxu0 %v5548
        %6198 = vmatpush1.bf16.msra.mxu0 %v5547
        %6199 = vmatprep.subr.bf16.mxu0 %v5554
        %6200 = vmatpush1.bf16.msra.mxu0 %v5553
        %6201 = vmatprep.subr.bf16.mxu0 %v5560
        %6202 = vmatpush1.bf16.msra.mxu0 %v5559
        %6203 = vmatprep.subr.bf16.mxu0 %v5566
        %6204 = vmatpush1.bf16.msra.mxu0 %v5565
        %6205 = vmatprep.subr.bf16.mxu0 %v5572
        %6206 = vmatpush1.bf16.msra.mxu0 %v5571
        %6207 = vmatprep.subr.bf16.mxu0 %v5578
        %6208 = vmatpush1.bf16.msra.mxu0 %v5577
        %6209 = vmatprep.subr.bf16.mxu0 %v5584
        %6210 = vmatpush1.bf16.msra.mxu0 %v5583
        %6211 = vmatprep.subr.bf16.mxu0 %v5590
        %6212 = vmatpush1.bf16.msra.mxu0 %v5589
        %6213 = vmatprep.subr.bf16.mxu0 %v5596
        %6214 = vmatpush1.bf16.msra.mxu0 %v5595
        %6215 = vmatprep.subr.bf16.mxu0 %v5602
        %6216 = vmatpush1.bf16.msra.mxu0 %v5601
        %6217 = vmatprep.subr.bf16.mxu0 %v5608
        %6218 = vmatpush1.bf16.msra.mxu0 %v5607
        %6219 = vmatprep.subr.bf16.mxu0 %v5614
        %6220 = vmatpush1.bf16.msra.mxu0 %v5613
        %6221 = vmatprep.subr.bf16.mxu0 %v5620
        %6222 = vmatpush1.bf16.msra.mxu0 %v5619
        %6223 = vmatprep.subr.bf16.mxu0 %v5626
        %6224 = vmatpush1.bf16.msra.mxu0 %v5625
        %6225 = vmatprep.mubr.bf16.mxu0 %v3772
        %6226 = vmatmul.mubr.bf16.gmra.mrb[0].mxu0 %v3771
        %v6227 = vpop.f32.mrb[0].mxu0
        %v6228 = vadd.f32 %v6187, %v6227
        %v6229 = vpop.f32.mrb[0].mxu0
        %v6230 = vadd.f32 %v6189, %v6229
        %v6231 = vpop.f32.mrb[0].mxu0
        %v6232 = vpop.f32.mrb[0].mxu0
        %6233 = vdwg.mxu0
        %6234 = vmatprep.subr.bf16.mxu0 %v5632
        %6235 = vmatpush1.bf16.msra.mxu0 %v5631
        %6236 = vmatprep.subr.bf16.mxu0 %v5638
        %6237 = vmatpush1.bf16.msra.mxu0 %v5637
        %6238 = vmatprep.subr.bf16.mxu0 %v5644
        %6239 = vmatpush1.bf16.msra.mxu0 %v5643
        %6240 = vmatprep.subr.bf16.mxu0 %v5650
        %6241 = vmatpush1.bf16.msra.mxu0 %v5649
        %6242 = vmatprep.subr.bf16.mxu0 %v5656
        %6243 = vmatpush1.bf16.msra.mxu0 %v5655
        %6244 = vmatprep.subr.bf16.mxu0 %v5662
        %6245 = vmatpush1.bf16.msra.mxu0 %v5661
        %6246 = vmatprep.subr.bf16.mxu0 %v5668
        %6247 = vmatpush1.bf16.msra.mxu0 %v5667
        %6248 = vmatprep.subr.bf16.mxu0 %v5674
        %6249 = vmatpush1.bf16.msra.mxu0 %v5673
        %6250 = vmatprep.subr.bf16.mxu0 %v5680
        %6251 = vmatpush1.bf16.msra.mxu0 %v5679
        %6252 = vmatprep.subr.bf16.mxu0 %v5686
        %6253 = vmatpush1.bf16.msra.mxu0 %v5685
        %6254 = vmatprep.subr.bf16.mxu0 %v5692
        %6255 = vmatpush1.bf16.msra.mxu0 %v5691
        %6256 = vmatprep.subr.bf16.mxu0 %v5698
        %6257 = vmatpush1.bf16.msra.mxu0 %v5697
        %6258 = vmatprep.subr.bf16.mxu0 %v5704
        %6259 = vmatpush1.bf16.msra.mxu0 %v5703
        %6260 = vmatprep.subr.bf16.mxu0 %v5710
        %6261 = vmatpush1.bf16.msra.mxu0 %v5709
        %6262 = vmatprep.subr.bf16.mxu0 %v5716
        %6263 = vmatpush1.bf16.msra.mxu0 %v5715
        %6264 = vmatprep.subr.bf16.mxu0 %v5722
        %6265 = vmatpush1.bf16.msra.mxu0 %v5721
        %6266 = vmatprep.mubr.bf16.mxu0 %v3774
        %6267 = vmatmul.mubr.bf16.gmra.mrb[0].mxu0 %v3773
        %v6268 = vpop.f32.mrb[0].mxu0
        %v6269 = vadd.f32 %v6228, %v6268
        %v6270 = vpop.f32.mrb[0].mxu0
        %v6271 = vadd.f32 %v6230, %v6270
        %v6272 = vpop.f32.mrb[0].mxu0
        %v6273 = vpop.f32.mrb[0].mxu0
        %6274 = vdwg.mxu0
        %6275 = vmatprep.subr.bf16.mxu0 %v5346
        %6276 = vmatpush1.bf16.msra.mxu0 %v5345
        %6277 = vmatprep.subr.bf16.mxu0 %v5352
        %6278 = vmatpush1.bf16.msra.mxu0 %v5351
        %6279 = vmatprep.subr.bf16.mxu0 %v5358
        %6280 = vmatpush1.bf16.msra.mxu0 %v5357
        %6281 = vmatprep.subr.bf16.mxu0 %v5364
        %6282 = vmatpush1.bf16.msra.mxu0 %v5363
        %6283 = vmatprep.subr.bf16.mxu0 %v5370
        %6284 = vmatpush1.bf16.msra.mxu0 %v5369
        %6285 = vmatprep.subr.bf16.mxu0 %v5376
        %6286 = vmatpush1.bf16.msra.mxu0 %v5375
        %6287 = vmatprep.subr.bf16.mxu0 %v5382
        %6288 = vmatpush1.bf16.msra.mxu0 %v5381
        %6289 = vmatprep.subr.bf16.mxu0 %v5388
        %6290 = vmatpush1.bf16.msra.mxu0 %v5387
        %6291 = vmatprep.subr.bf16.mxu0 %v5394
        %6292 = vmatpush1.bf16.msra.mxu0 %v5393
        %6293 = vmatprep.subr.bf16.mxu0 %v5400
        %6294 = vmatpush1.bf16.msra.mxu0 %v5399
        %6295 = vmatprep.subr.bf16.mxu0 %v5406
        %6296 = vmatpush1.bf16.msra.mxu0 %v5405
        %6297 = vmatprep.subr.bf16.mxu0 %v5412
        %6298 = vmatpush1.bf16.msra.mxu0 %v5411
        %6299 = vmatprep.subr.bf16.mxu0 %v5418
        %6300 = vmatpush1.bf16.msra.mxu0 %v5417
        %6301 = vmatprep.subr.bf16.mxu0 %v5424
        %6302 = vmatpush1.bf16.msra.mxu0 %v5423
        %6303 = vmatprep.subr.bf16.mxu0 %v5430
        %6304 = vmatpush1.bf16.msra.mxu0 %v5429
        %6305 = vmatprep.subr.bf16.mxu0 %v5436
        %6306 = vmatpush1.bf16.msra.mxu0 %v5435
        %6307 = vmatprep.mubr.bf16.mxu0 %v3768
        %6308 = vmatmul.mubr.bf16.gmra.mrb[0].mxu0 %v3767
        %v6309 = vpop.f32.mrb[0].mxu0
        %v6310 = vadd.f32 %v4172, %v6309
        %v6311 = vpop.f32.mrb[0].mxu0
        %v6312 = vadd.f32 %v4176, %v6311
        %v6313 = vpop.f32.mrb[0].mxu0
        %v6314 = vpop.f32.mrb[0].mxu0
        %6315 = vdwg.mxu0
        %6316 = vmatprep.subr.bf16.mxu0 %v5442
        %6317 = vmatpush1.bf16.msra.mxu0 %v5441
        %6318 = vmatprep.subr.bf16.mxu0 %v5448
        %6319 = vmatpush1.bf16.msra.mxu0 %v5447
        %6320 = vmatprep.subr.bf16.mxu0 %v5454
        %6321 = vmatpush1.bf16.msra.mxu0 %v5453
        %6322 = vmatprep.subr.bf16.mxu0 %v5460
        %6323 = vmatpush1.bf16.msra.mxu0 %v5459
        %6324 = vmatprep.subr.bf16.mxu0 %v5466
        %6325 = vmatpush1.bf16.msra.mxu0 %v5465
        %6326 = vmatprep.subr.bf16.mxu0 %v5472
        %6327 = vmatpush1.bf16.msra.mxu0 %v5471
        %6328 = vmatprep.subr.bf16.mxu0 %v5478
        %6329 = vmatpush1.bf16.msra.mxu0 %v5477
        %6330 = vmatprep.subr.bf16.mxu0 %v5484
        %6331 = vmatpush1.bf16.msra.mxu0 %v5483
        %6332 = vmatprep.subr.bf16.mxu0 %v5490
        %6333 = vmatpush1.bf16.msra.mxu0 %v5489
        %6334 = vmatprep.subr.bf16.mxu0 %v5496
        %6335 = vmatpush1.bf16.msra.mxu0 %v5495
        %6336 = vmatprep.subr.bf16.mxu0 %v5502
        %6337 = vmatpush1.bf16.msra.mxu0 %v5501
        %6338 = vmatprep.subr.bf16.mxu0 %v5508
        %6339 = vmatpush1.bf16.msra.mxu0 %v5507
        %6340 = vmatprep.subr.bf16.mxu0 %v5514
        %6341 = vmatpush1.bf16.msra.mxu0 %v5513
        %6342 = vmatprep.subr.bf16.mxu0 %v5520
        %6343 = vmatpush1.bf16.msra.mxu0 %v5519
        %6344 = vmatprep.subr.bf16.mxu0 %v5526
        %6345 = vmatpush1.bf16.msra.mxu0 %v5525
        %6346 = vmatprep.subr.bf16.mxu0 %v5532
        %6347 = vmatpush1.bf16.msra.mxu0 %v5531
        %6348 = vmatprep.mubr.bf16.mxu0 %v3770
        %6349 = vmatmul.mubr.bf16.gmra.mrb[0].mxu0 %v3769
        %v6350 = vpop.f32.mrb[0].mxu0
        %v6351 = vadd.f32 %v6310, %v6350
        %v6352 = vpop.f32.mrb[0].mxu0
        %v6353 = vadd.f32 %v6312, %v6352
        %v6354 = vpop.f32.mrb[0].mxu0
        %v6355 = vpop.f32.mrb[0].mxu0
        %6356 = vdwg.mxu0
        %6357 = vmatprep.subr.bf16.mxu0 %v5538
        %6358 = vmatpush1.bf16.msra.mxu0 %v5537
        %6359 = vmatprep.subr.bf16.mxu0 %v5544
        %6360 = vmatpush1.bf16.msra.mxu0 %v5543
        %6361 = vmatprep.subr.bf16.mxu0 %v5550
        %6362 = vmatpush1.bf16.msra.mxu0 %v5549
        %6363 = vmatprep.subr.bf16.mxu0 %v5556
        %6364 = vmatpush1.bf16.msra.mxu0 %v5555
        %6365 = vmatprep.subr.bf16.mxu0 %v5562
        %6366 = vmatpush1.bf16.msra.mxu0 %v5561
        %6367 = vmatprep.subr.bf16.mxu0 %v5568
        %6368 = vmatpush1.bf16.msra.mxu0 %v5567
        %6369 = vmatprep.subr.bf16.mxu0 %v5574
        %6370 = vmatpush1.bf16.msra.mxu0 %v5573
        %6371 = vmatprep.subr.bf16.mxu0 %v5580
        %6372 = vmatpush1.bf16.msra.mxu0 %v5579
        %6373 = vmatprep.subr.bf16.mxu0 %v5586
        %6374 = vmatpush1.bf16.msra.mxu0 %v5585
        %6375 = vmatprep.subr.bf16.mxu0 %v5592
        %6376 = vmatpush1.bf16.msra.mxu0 %v5591
        %6377 = vmatprep.subr.bf16.mxu0 %v5598
        %6378 = vmatpush1.bf16.msra.mxu0 %v5597
        %6379 = vmatprep.subr.bf16.mxu0 %v5604
        %6380 = vmatpush1.bf16.msra.mxu0 %v5603
        %6381 = vmatprep.subr.bf16.mxu0 %v5610
        %6382 = vmatpush1.bf16.msra.mxu0 %v5609
        %6383 = vmatprep.subr.bf16.mxu0 %v5616
        %6384 = vmatpush1.bf16.msra.mxu0 %v5615
        %6385 = vmatprep.subr.bf16.mxu0 %v5622
        %6386 = vmatpush1.bf16.msra.mxu0 %v5621
        %6387 = vmatprep.subr.bf16.mxu0 %v5628
        %6388 = vmatpush1.bf16.msra.mxu0 %v5627
        %6389 = vmatprep.mubr.bf16.mxu0 %v3772
        %6390 = vmatmul.mubr.bf16.gmra.mrb[0].mxu0 %v3771
        %v6391 = vpop.f32.mrb[0].mxu0
        %v6392 = vadd.f32 %v6351, %v6391
        %v6393 = vpop.f32.mrb[0].mxu0
        %v6394 = vadd.f32 %v6353, %v6393
        %v6395 = vpop.f32.mrb[0].mxu0
        %v6396 = vpop.f32.mrb[0].mxu0
        %6397 = vdwg.mxu0
        %6398 = vmatprep.subr.bf16.mxu0 %v5634
        %6399 = vmatpush1.bf16.msra.mxu0 %v5633
        %6400 = vmatprep.subr.bf16.mxu0 %v5640
        %6401 = vmatpush1.bf16.msra.mxu0 %v5639
        %6402 = vmatprep.subr.bf16.mxu0 %v5646
        %6403 = vmatpush1.bf16.msra.mxu0 %v5645
        %6404 = vmatprep.subr.bf16.mxu0 %v5652
        %6405 = vmatpush1.bf16.msra.mxu0 %v5651
        %6406 = vmatprep.subr.bf16.mxu0 %v5658
        %6407 = vmatpush1.bf16.msra.mxu0 %v5657
        %6408 = vmatprep.subr.bf16.mxu0 %v5664
        %6409 = vmatpush1.bf16.msra.mxu0 %v5663
        %6410 = vmatprep.subr.bf16.mxu0 %v5670
        %6411 = vmatpush1.bf16.msra.mxu0 %v5669
        %6412 = vmatprep.subr.bf16.mxu0 %v5676
        %6413 = vmatpush1.bf16.msra.mxu0 %v5675
        %6414 = vmatprep.subr.bf16.mxu0 %v5682
        %6415 = vmatpush1.bf16.msra.mxu0 %v5681
        %6416 = vmatprep.subr.bf16.mxu0 %v5688
        %6417 = vmatpush1.bf16.msra.mxu0 %v5687
        %6418 = vmatprep.subr.bf16.mxu0 %v5694
        %6419 = vmatpush1.bf16.msra.mxu0 %v5693
        %6420 = vmatprep.subr.bf16.mxu0 %v5700
        %6421 = vmatpush1.bf16.msra.mxu0 %v5699
        %6422 = vmatprep.subr.bf16.mxu0 %v5706
        %6423 = vmatpush1.bf16.msra.mxu0 %v5705
        %6424 = vmatprep.subr.bf16.mxu0 %v5712
        %6425 = vmatpush1.bf16.msra.mxu0 %v5711
        %6426 = vmatprep.subr.bf16.mxu0 %v5718
        %6427 = vmatpush1.bf16.msra.mxu0 %v5717
        %6428 = vmatprep.subr.bf16.mxu0 %v5724
        %6429 = vmatpush1.bf16.msra.mxu0 %v5723
        %6430 = vmatprep.mubr.bf16.mxu0 %v3774
        %6431 = vmatmul.mubr.bf16.gmra.mrb[0].mxu0 %v3773
        %v6432 = vpop.f32.mrb[0].mxu0
        %v6433 = vadd.f32 %v6392, %v6432
        %v6434 = vpop.f32.mrb[0].mxu0
        %v6435 = vadd.f32 %v6394, %v6434
        %v6436 = vpop.f32.mrb[0].mxu0
        %v6437 = vpop.f32.mrb[0].mxu0
        %6438 = vdwg.mxu0
        %6439 = vmatprep.subr.bf16.mxu0 %v5348
        %6440 = vmatpush1.bf16.msra.mxu0 %v5347
        %6441 = vmatprep.subr.bf16.mxu0 %v5354
        %6442 = vmatpush1.bf16.msra.mxu0 %v5353
        %6443 = vmatprep.subr.bf16.mxu0 %v5360
        %6444 = vmatpush1.bf16.msra.mxu0 %v5359
        %6445 = vmatprep.subr.bf16.mxu0 %v5366
        %6446 = vmatpush1.bf16.msra.mxu0 %v5365
        %6447 = vmatprep.subr.bf16.mxu0 %v5372
        %6448 = vmatpush1.bf16.msra.mxu0 %v5371
        %6449 = vmatprep.subr.bf16.mxu0 %v5378
        %6450 = vmatpush1.bf16.msra.mxu0 %v5377
        %6451 = vmatprep.subr.bf16.mxu0 %v5384
        %6452 = vmatpush1.bf16.msra.mxu0 %v5383
        %6453 = vmatprep.subr.bf16.mxu0 %v5390
        %6454 = vmatpush1.bf16.msra.mxu0 %v5389
        %6455 = vmatprep.subr.bf16.mxu0 %v5396
        %6456 = vmatpush1.bf16.msra.mxu0 %v5395
        %6457 = vmatprep.subr.bf16.mxu0 %v5402
        %6458 = vmatpush1.bf16.msra.mxu0 %v5401
        %6459 = vmatprep.subr.bf16.mxu0 %v5408
        %6460 = vmatpush1.bf16.msra.mxu0 %v5407
        %6461 = vmatprep.subr.bf16.mxu0 %v5414
        %6462 = vmatpush1.bf16.msra.mxu0 %v5413
        %6463 = vmatprep.subr.bf16.mxu0 %v5420
        %6464 = vmatpush1.bf16.msra.mxu0 %v5419
        %6465 = vmatprep.subr.bf16.mxu0 %v5426
        %6466 = vmatpush1.bf16.msra.mxu0 %v5425
        %6467 = vmatprep.subr.bf16.mxu0 %v5432
        %6468 = vmatpush1.bf16.msra.mxu0 %v5431
        %6469 = vmatprep.subr.bf16.mxu0 %v5438
        %6470 = vmatpush1.bf16.msra.mxu0 %v5437
        %6471 = vmatprep.mubr.bf16.mxu0 %v3768
        %6472 = vmatmul.mubr.bf16.gmra.mrb[0].mxu0 %v3767
        %v6473 = vpop.f32.mrb[0].mxu0
        %v6474 = vadd.f32 %v4180, %v6473
        %v6475 = vpop.f32.mrb[0].mxu0
        %v6476 = vadd.f32 %v4184, %v6475
        %v6477 = vpop.f32.mrb[0].mxu0
        %v6478 = vpop.f32.mrb[0].mxu0
        %6479 = vdwg.mxu0
        %6480 = vmatprep.subr.bf16.mxu0 %v5444
        %6481 = vmatpush1.bf16.msra.mxu0 %v5443
        %6482 = vmatprep.subr.bf16.mxu0 %v5450
        %6483 = vmatpush1.bf16.msra.mxu0 %v5449
        %6484 = vmatprep.subr.bf16.mxu0 %v5456
        %6485 = vmatpush1.bf16.msra.mxu0 %v5455
        %6486 = vmatprep.subr.bf16.mxu0 %v5462
        %6487 = vmatpush1.bf16.msra.mxu0 %v5461
        %6488 = vmatprep.subr.bf16.mxu0 %v5468
        %6489 = vmatpush1.bf16.msra.mxu0 %v5467
        %6490 = vmatprep.subr.bf16.mxu0 %v5474
        %6491 = vmatpush1.bf16.msra.mxu0 %v5473
        %6492 = vmatprep.subr.bf16.mxu0 %v5480
        %6493 = vmatpush1.bf16.msra.mxu0 %v5479
        %6494 = vmatprep.subr.bf16.mxu0 %v5486
        %6495 = vmatpush1.bf16.msra.mxu0 %v5485
        %6496 = vmatprep.subr.bf16.mxu0 %v5492
        %6497 = vmatpush1.bf16.msra.mxu0 %v5491
        %6498 = vmatprep.subr.bf16.mxu0 %v5498
        %6499 = vmatpush1.bf16.msra.mxu0 %v5497
        %6500 = vmatprep.subr.bf16.mxu0 %v5504
        %6501 = vmatpush1.bf16.msra.mxu0 %v5503
        %6502 = vmatprep.subr.bf16.mxu0 %v5510
        %6503 = vmatpush1.bf16.msra.mxu0 %v5509
        %6504 = vmatprep.subr.bf16.mxu0 %v5516
        %6505 = vmatpush1.bf16.msra.mxu0 %v5515
        %6506 = vmatprep.subr.bf16.mxu0 %v5522
        %6507 = vmatpush1.bf16.msra.mxu0 %v5521
        %6508 = vmatprep.subr.bf16.mxu0 %v5528
        %6509 = vmatpush1.bf16.msra.mxu0 %v5527
        %6510 = vmatprep.subr.bf16.mxu0 %v5534
        %6511 = vmatpush1.bf16.msra.mxu0 %v5533
        %6512 = vmatprep.mubr.bf16.mxu0 %v3770
        %6513 = vmatmul.mubr.bf16.gmra.mrb[0].mxu0 %v3769
        %v6514 = vpop.f32.mrb[0].mxu0
        %v6515 = vadd.f32 %v6474, %v6514
        %v6516 = vpop.f32.mrb[0].mxu0
        %v6517 = vadd.f32 %v6476, %v6516
        %v6518 = vpop.f32.mrb[0].mxu0
        %v6519 = vpop.f32.mrb[0].mxu0
        %6520 = vdwg.mxu0
        %6521 = vmatprep.subr.bf16.mxu0 %v5540
        %6522 = vmatpush1.bf16.msra.mxu0 %v5539
        %6523 = vmatprep.subr.bf16.mxu0 %v5546
        %6524 = vmatpush1.bf16.msra.mxu0 %v5545
        %6525 = vmatprep.subr.bf16.mxu0 %v5552
        %6526 = vmatpush1.bf16.msra.mxu0 %v5551
        %6527 = vmatprep.subr.bf16.mxu0 %v5558
        %6528 = vmatpush1.bf16.msra.mxu0 %v5557
        %6529 = vmatprep.subr.bf16.mxu0 %v5564
        %6530 = vmatpush1.bf16.msra.mxu0 %v5563
        %6531 = vmatprep.subr.bf16.mxu0 %v5570
        %6532 = vmatpush1.bf16.msra.mxu0 %v5569
        %6533 = vmatprep.subr.bf16.mxu0 %v5576
        %6534 = vmatpush1.bf16.msra.mxu0 %v5575
        %6535 = vmatprep.subr.bf16.mxu0 %v5582
        %6536 = vmatpush1.bf16.msra.mxu0 %v5581
        %6537 = vmatprep.subr.bf16.mxu0 %v5588
        %6538 = vmatpush1.bf16.msra.mxu0 %v5587
        %6539 = vmatprep.subr.bf16.mxu0 %v5594
        %6540 = vmatpush1.bf16.msra.mxu0 %v5593
        %6541 = vmatprep.subr.bf16.mxu0 %v5600
        %6542 = vmatpush1.bf16.msra.mxu0 %v5599
        %6543 = vmatprep.subr.bf16.mxu0 %v5606
        %6544 = vmatpush1.bf16.msra.mxu0 %v5605
        %6545 = vmatprep.subr.bf16.mxu0 %v5612
        %6546 = vmatpush1.bf16.msra.mxu0 %v5611
        %6547 = vmatprep.subr.bf16.mxu0 %v5618
        %6548 = vmatpush1.bf16.msra.mxu0 %v5617
        %6549 = vmatprep.subr.bf16.mxu0 %v5624
        %6550 = vmatpush1.bf16.msra.mxu0 %v5623
        %6551 = vmatprep.subr.bf16.mxu0 %v5630
        %6552 = vmatpush1.bf16.msra.mxu0 %v5629
        %6553 = vmatprep.mubr.bf16.mxu0 %v3772
        %6554 = vmatmul.mubr.bf16.gmra.mrb[0].mxu0 %v3771
        %v6555 = vpop.f32.mrb[0].mxu0
        %v6556 = vadd.f32 %v6515, %v6555
        %v6557 = vpop.f32.mrb[0].mxu0
        %v6558 = vadd.f32 %v6517, %v6557
        %v6559 = vpop.f32.mrb[0].mxu0
        %v6560 = vpop.f32.mrb[0].mxu0
        %6561 = vdwg.mxu0
        %6562 = vmatprep.subr.bf16.mxu0 %v5636
        %6563 = vmatpush1.bf16.msra.mxu0 %v5635
        %6564 = vmatprep.subr.bf16.mxu0 %v5642
        %6565 = vmatpush1.bf16.msra.mxu0 %v5641
        %6566 = vmatprep.subr.bf16.mxu0 %v5648
        %6567 = vmatpush1.bf16.msra.mxu0 %v5647
        %6568 = vmatprep.subr.bf16.mxu0 %v5654
        %6569 = vmatpush1.bf16.msra.mxu0 %v5653
        %6570 = vmatprep.subr.bf16.mxu0 %v5660
        %6571 = vmatpush1.bf16.msra.mxu0 %v5659
        %6572 = vmatprep.subr.bf16.mxu0 %v5666
        %6573 = vmatpush1.bf16.msra.mxu0 %v5665
        %6574 = vmatprep.subr.bf16.mxu0 %v5672
        %6575 = vmatpush1.bf16.msra.mxu0 %v5671
        %6576 = vmatprep.subr.bf16.mxu0 %v5678
        %6577 = vmatpush1.bf16.msra.mxu0 %v5677
        %6578 = vmatprep.subr.bf16.mxu0 %v5684
        %6579 = vmatpush1.bf16.msra.mxu0 %v5683
        %6580 = vmatprep.subr.bf16.mxu0 %v5690
        %6581 = vmatpush1.bf16.msra.mxu0 %v5689
        %6582 = vmatprep.subr.bf16.mxu0 %v5696
        %6583 = vmatpush1.bf16.msra.mxu0 %v5695
        %6584 = vmatprep.subr.bf16.mxu0 %v5702
        %6585 = vmatpush1.bf16.msra.mxu0 %v5701
        %6586 = vmatprep.subr.bf16.mxu0 %v5708
        %6587 = vmatpush1.bf16.msra.mxu0 %v5707
        %6588 = vmatprep.subr.bf16.mxu0 %v5714
        %6589 = vmatpush1.bf16.msra.mxu0 %v5713
        %6590 = vmatprep.subr.bf16.mxu0 %v5720
        %6591 = vmatpush1.bf16.msra.mxu0 %v5719
        %6592 = vmatprep.subr.bf16.mxu0 %v5726
        %6593 = vmatpush1.bf16.msra.mxu0 %v5725
        %6594 = vmatprep.mubr.bf16.mxu0 %v3774
        %6595 = vmatmul.mubr.bf16.gmra.mrb[0].mxu0 %v3773
        %v6596 = vpop.f32.mrb[0].mxu0
        %v6597 = vadd.f32 %v6556, %v6596
        %v6598 = vpop.f32.mrb[0].mxu0
        %v6599 = vadd.f32 %v6558, %v6598
        %v6600 = vpop.f32.mrb[0].mxu0
        %v6601 = vpop.f32.mrb[0].mxu0
        %6602 = vdwg.mxu0
        %v6603 = vtanh.pop %v6269
        %v6604 = vtanh.pop %v6271
        %v6605 = vtanh.pop %v6433
        %v6606 = vtanh.pop %v6435
        %v6607 = vtanh.pop %v6597
        %v6608 = vtanh.pop %v6599
        %6609 = vst [vmem:[%s722] sm:$0xff] %v6603
        %6610 = vst [vmem:[%s722 + $0x8] sm:$0xff] %v6604
        %6611 = vst [vmem:[%s722 + $0x10] sm:$0xff] %v6605
        %6612 = vst [vmem:[%s722 + $0x18] sm:$0xff] %v6606
        %6613 = vst [vmem:[%s722 + $0x20] sm:$0xff] %v6607
        %6614 = vst [vmem:[%s722 + $0x28] sm:$0xff] %v6608
        %s6615 = sand.u32 %s372, 1
        %s6616 = scalar_lea.sflag [#allocation4], %s6615
        %s6617 = sand.u32 %s372, 1
        %s6618 = smul.addr %s6617, 48
        %s6619 = scalar_lea.vmem [#allocation26], %s6618
        // Predicated region
        $region141: #{tpu_custom_call.1} parent=79 // pred_check
          %p6620 = pneg %p382
        $region142: #{tpu_custom_call.1} parent=79 // pred_check_branch
          %6622 = sbr.rel (%p6620) target = $region144
        $region143: #{tpu_custom_call.1} parent=79 // pred_region
          %s6623 = smul.u32 6, %s39
          %s6625 = ssub.s32 768, 768
          %6626 = vsyncadd %s6616, %s6625
          %s6627 = smul.addr %s6623, 128
          %s6628 = scalar_lea.hbm %s15, %s6627
          %s6630 = sshll.u32 %s6619, 4
          %s6631 = int_to_ptr.vmem [resolvable:$true] %s6630
          %6633 = dma.vmem_to_hbm [thread:$0]  %s6631, 768, %s6628, %s6616
        $region144: #{tpu_custom_call.1} parent=79 // pred_fallthru
          _
      $region80: #{tpu_custom_call.1} parent=5 // pred_fallthru
        _
      %p6634 = scmp.le.s32.totalorder 2, %s34
      // Predicated region
      $region145: #{tpu_custom_call.1} parent=5 // pred_check
        %p6635 = pneg %p6634
      $region146: #{tpu_custom_call.1} parent=5 // pred_check_branch
        %6637 = sbr.rel (%p6635) target = $region148
      $region147: #{tpu_custom_call.1} parent=5 // pred_region
        %s6638 = ssub.s32 %s34, 2
        // Predicated region
        $region149: #{tpu_custom_call.1} parent=147 // pred_check
          %p6639 = pneg %p388
        $region150: #{tpu_custom_call.1} parent=147 // pred_check_branch
          %6641 = sbr.rel (%p6639) target = $region152
        $region151: #{tpu_custom_call.1} parent=147 // pred_region
          %s6642 = sand.u32 %s373, 1
          %s6643 = scalar_lea.sflag [#allocation4], %s6642
          %s6644 = sand.u32 %s373, 1
          %s6645 = smul.addr %s6644, 48
          %s6646 = scalar_lea.vmem [#allocation26], %s6645
          %6647 = dma.done %s6643, 768
        $region152: #{tpu_custom_call.1} parent=147 // pred_fallthru
          _
      $region148: #{tpu_custom_call.1} parent=5 // pred_fallthru
        _
    $region6: #{tpu_custom_call.1} parent=1 // loop_footer
      %s38 = sadd.s32 1, %s34
    $region7: #{tpu_custom_call.1} parent=1 // loop_footer_branch
      %33 = sbr.rel target = $region3
    $region8: #{tpu_custom_call.1} parent=1 // loop_exit
      _
    %6648 = vsyncpa [#allocation3], 1
    %s6649 = scalar_lea.sflag [#allocation3], 1
    %6650 = vsyncpa %s6649, 1
    %6651 = vsyncpa [#allocation6], 1
    %6652 = vsyncpa [#allocation9], 1
    %6653 = vsyncpa [#allocation12], 1
    %6654 = vsyncpa [#allocation15], 1
    %6655 = vsyncpa [#allocation18], 1
    %6656 = vsyncpa [#allocation21], 1
    %6657 = vsyncpa [#allocation24], 1
    %s6658 = scalar_lea.sflag [#allocation24], 1
    %6659 = vsyncpa %s6658, 1
    %6660 = vsyncpa [#allocation4], 1
    %s6661 = scalar_lea.sflag [#allocation4], 1
    %6662 = vsyncpa %s6661, 1

</llo_original>
